<compile_context>
chip_gen: v6e
topology: v6e:2x2x1
jax: 0.10.0
libtpu: 0.0.40
codegen_flags: <defaults>
</compile_context>

<pallas_src>
import functools
import math

import jax
import jax.numpy as jnp
from jax.experimental import pallas as pl
from jax.experimental.pallas import tpu as pltpu


def _cross_att_kernel(rows_ref, cols_ref, wqT_ref, wk_ref, wv_ref,
                      bq_ref, bk_ref, bv_ref, gamma_ref, beta_ref,
                      out_ref, acc_ref, k_scr, v_scr,
                      *, bt, inv_dim, eps):
    # Tile inputs: rows 0..bt-1 are sem, rows bt..2bt-1 are part (cols is the transpose).
    x_rows = rows_ref[0]                # (2bt, D)
    x_cols = cols_ref[0]                # (D, 2bt)

    # Resident parameters (constant index maps -> DMA'd once).
    wqT = wqT_ref[...]                  # (D, D)
    wk = wk_ref[...]                    # (D, D)
    wv = wv_ref[...]                    # (D, D)
    bq = bq_ref[...]                    # (1, D)
    bk = bk_ref[...]                    # (D, 1)
    bv = bv_ref[...]                    # (D, 1)

    # Batched projections for the whole tile and both attends (shared weights):
    # 3 MXU pushes per grid step instead of 6*bt tiny matmuls.
    q_all = jnp.dot(x_rows, wqT, preferred_element_type=jnp.float32) + bq   # (2bt, D)
    k_all = jnp.dot(wk, x_cols, preferred_element_type=jnp.float32) + bk    # (D, 2bt)
    v_all = jnp.dot(wv, x_cols, preferred_element_type=jnp.float32) + bv    # (D, 2bt)

    # Per-kv-column max/min once for the whole tile (rank-1 softmax-max shortcut).
    kmax = jnp.max(k_all, axis=0, keepdims=True)   # (1, 2bt)
    kmin = jnp.min(k_all, axis=0, keepdims=True)   # (1, 2bt)

    # Stage K/V in VMEM so they do not pin vregs across the per-element exp loop.
    k_scr[...] = k_all
    v_scr[...] = v_all

    def attend(qi, ci):
        # One Self_Attn(q, k, v) call with k == v (as in Cross_Att.forward),
        # without the 1/sqrt(D) scale (folded into the epilogue).
        pq = q_all[qi:qi + 1, :]              # (1, D)
        pk = k_scr[:, ci:ci + 1]              # (D, 1)
        pv = v_scr[:, ci:ci + 1]              # (D, 1)
        km = kmax[:, ci:ci + 1]               # (1, 1)
        kn = kmin[:, ci:ci + 1]               # (1, 1)
        # Exact row-max of the (transposed) energy: max_j pk[j]*pq[i].
        m = jnp.where(pq >= 0.0, pq * km, pq * kn)            # (1, D)
        # energy^T[j, i] = pk[j] * pq[i]; softmax over j == sublanes.
        p = jnp.exp(pk * pq - m)                               # (D, D)
        z = jnp.sum(p, axis=0, keepdims=True)                  # (1, D)
        num = jnp.sum(p * pv, axis=0, keepdims=True)           # (1, D)
        return num * pl.reciprocal(z, approx=True)             # (1, D)

    # Static unroll over the batch tile; all matmuls are hoisted so the per-element
    # body is just the EUP/VPU softmax work.
    for i in range(bt):
        o1 = attend(i, bt + i)        # cross_attn_1(sem, part, part)
        o2 = attend(bt + i, i)        # cross_attn_1(part, sem, sem)  (same weights)
        acc_ref[i:i + 1, :] = o1 * o2

    # Batched epilogue: fold the two 1/sqrt(D) factors, LayerNorm([1, D]) over D for all
    # bt rows at once, and one unmasked lane-dense (bt, D) store.
    y = acc_ref[...] * inv_dim                                  # (bt, D)
    mu = jnp.mean(y, axis=-1, keepdims=True)
    yc = y - mu
    var = jnp.mean(yc * yc, axis=-1, keepdims=True)
    yn = yc * jax.lax.rsqrt(var + eps)
    out_ref[...] = (yn * gamma_ref[...] + beta_ref[...]).astype(out_ref.dtype)


def cross_att(sem_seg, part_seg, params, *, bt=8):
    """sem_seg, part_seg: [B, 1, D] float32. Returns LayerNorm(cross1 * cross2): [B, 1, D]."""
    B, C, D = sem_seg.shape
    assert C == 1, "Cross_Att's LayerNorm([1, in_dim]) requires the middle dim to be 1"
    assert part_seg.shape == (B, C, D)

    bt = min(bt, B)
    n_tiles = -(-B // bt)
    B_pad = n_tiles * bt

    sem2d = sem_seg.reshape(B, D).astype(jnp.float32)
    part2d = part_seg.reshape(B, D).astype(jnp.float32)
    if B_pad != B:
        pad = ((0, B_pad - B), (0, 0))
        sem2d = jnp.pad(sem2d, pad)
        part2d = jnp.pad(part2d, pad)

    # Tile-interleaved stacking: tile b is [sem rows | part rows] (2bt, D), plus its
    # transpose (D, 2bt), so the kernel can project q/k/v for the whole tile with
    # three batched matmuls and needs no in-kernel transposes.
    sem_t = sem2d.reshape(n_tiles, bt, D)
    part_t = part2d.reshape(n_tiles, bt, D)
    rows_all = jnp.concatenate([sem_t, part_t], axis=1)       # (n_tiles, 2bt, D)
    cols_all = jnp.transpose(rows_all, (0, 2, 1))             # (n_tiles, D, 2bt)

    # Conv1d(k=1) weights in the orientation each batched matmul wants.
    wqT = params["wq"].T                                      # (D, D): rows @ wqT
    wk = params["wk"]                                         # (D, D): wk @ cols
    wv = params["wv"]                                         # (D, D): wv @ cols
    bq_row = params["bq"].reshape(1, D)
    bk_col = params["bk"].reshape(D, 1)
    bv_col = params["bv"].reshape(D, 1)
    gamma = params["ln_gamma"].reshape(1, D)
    beta = params["ln_beta"].reshape(1, D)

    kernel = functools.partial(
        _cross_att_kernel, bt=bt, inv_dim=float(1.0 / D), eps=1e-5)

    def const(shape):
        return pl.BlockSpec(shape, lambda b: (0, 0))

    out = pl.pallas_call(
        kernel,
        out_shape=jax.ShapeDtypeStruct((B_pad, D), jnp.float32),
        grid_spec=pltpu.PrefetchScalarGridSpec(
            num_scalar_prefetch=0,
            grid=(n_tiles,),
            in_specs=[
                pl.BlockSpec((1, 2 * bt, D), lambda b: (b, 0, 0)),   # [sem|part] rows
                pl.BlockSpec((1, D, 2 * bt), lambda b: (b, 0, 0)),   # [sem|part] cols
                const((D, D)), const((D, D)), const((D, D)),         # wqT, wk, wv
                const((1, D)), const((D, 1)), const((D, 1)),         # bq, bk, bv
                const((1, D)), const((1, D)),                        # LayerNorm gamma, beta
            ],
            out_specs=pl.BlockSpec((bt, D), lambda b: (b, 0)),       # lane-dense (bt, D)
            scratch_shapes=[
                pltpu.VMEM((bt, D), jnp.float32),        # cross1*cross2 slab
                pltpu.VMEM((D, 2 * bt), jnp.float32),    # staged K
                pltpu.VMEM((D, 2 * bt), jnp.float32),    # staged V
            ],
        ),
        compiler_params=pltpu.CompilerParams(
            dimension_semantics=("parallel",)),
    )(rows_all, cols_all, wqT, wk, wv, bq_row, bk_col, bv_col, gamma, beta)

    return out[:B].reshape(B, 1, D)


def _reference(sem_seg, part_seg, params):
    """Pure-JAX transcription of the PyTorch module (f32, highest matmul precision)."""
    D = sem_seg.shape[-1]
    hp = jax.lax.Precision.HIGHEST

    def conv1d(x, w, b):
        xp = jnp.transpose(x, (0, 2, 1))                                  # (B, D, 1)
        return jnp.einsum("oi,bil->bol", w, xp, precision=hp) + b[None, :, None]

    def self_attn(q, k, v):
        B, C, H = q.shape
        pq = conv1d(q, params["wq"], params["bq"])                        # (B, D, 1)
        pk = conv1d(k, params["wk"], params["bk"])
        pv = conv1d(v, params["wv"], params["bv"])
        energy = jnp.einsum("bdl,bel->bde", pq, pk, precision=hp)         # (B, D, D)
        attn = jax.nn.softmax(energy, axis=-1)
        out = jnp.einsum("bde,bel->bdl", attn, pv, precision=hp)          # (B, D, 1)
        out = out.reshape(B, C, H)                                        # torch .view
        return out / jnp.sqrt(jnp.float32(D))

    cross1 = self_attn(sem_seg, part_seg, part_seg)
    cross2 = self_attn(part_seg, sem_seg, sem_seg)     # forward reuses cross_attn_1
    y = cross1 * cross2
    mu = jnp.mean(y, axis=(-2, -1), keepdims=True)
    var = jnp.mean((y - mu) ** 2, axis=(-2, -1), keepdims=True)
    yn = (y - mu) / jnp.sqrt(var + 1e-5)
    return yn * params["ln_gamma"] + params["ln_beta"]


def init_params(key, in_dim):
    # Conv1d(in_dim, in_dim, 1) weights (out, in); the module requires out_dim == in_dim.
    ks = jax.random.split(key, 8)
    s = 1.0 / math.sqrt(in_dim)
    return {
        "wq": jax.random.uniform(ks[0], (in_dim, in_dim), jnp.float32, -s, s),
        "bq": jax.random.uniform(ks[1], (in_dim,), jnp.float32, -s, s),
        "wk": jax.random.uniform(ks[2], (in_dim, in_dim), jnp.float32, -s, s),
        "bk": jax.random.uniform(ks[3], (in_dim,), jnp.float32, -s, s),
        "wv": jax.random.uniform(ks[4], (in_dim, in_dim), jnp.float32, -s, s),
        "bv": jax.random.uniform(ks[5], (in_dim,), jnp.float32, -s, s),
        # LayerNorm([1, in_dim]) affine params (randomized to make the check meaningful).
        "ln_gamma": 1.0 + 0.1 * jax.random.normal(ks[6], (1, in_dim), jnp.float32),
        "ln_beta": 0.1 * jax.random.normal(ks[7], (1, in_dim), jnp.float32),
    }


if __name__ == "__main__":
    # Small shapes consistent with the module: inputs (B, 1, D), out_dim == in_dim == D.
    # B=12 with bt=8 -> 2 grid tiles (megacore-friendly) and exercises the padding path.
    B, D = 12, 128
    key = jax.random.PRNGKey(0)
    kp, ks, kt = jax.random.split(key, 3)
    params = init_params(kp, D)
    sem_seg = jax.random.normal(ks, (B, 1, D), jnp.float32)
    part_seg = jax.random.normal(kt, (B, 1, D), jnp.float32)

    out = cross_att(sem_seg, part_seg, params)
    out = jax.block_until_ready(out)

    ref = _reference(sem_seg, part_seg, params)
    assert out.shape == (B, 1, D), out.shape
    err = float(jnp.max(jnp.abs(out - ref)))
    assert jnp.allclose(out, ref, atol=2e-3, rtol=2e-3), f"mismatch vs reference, max|diff|={err}"

    print("KERNEL_OK")
</pallas_src>

<mosaic_0001>
module attributes {stable_mosaic.version = 11 : i64} {
  func.func @_cross_att_kernel(%arg0: i32, %arg1: memref<1x16x128xf32, #tpu.memory_space<vmem>>, %arg2: memref<1x128x16xf32, #tpu.memory_space<vmem>>, %arg3: memref<128x128xf32, #tpu.memory_space<vmem>>, %arg4: memref<128x128xf32, #tpu.memory_space<vmem>>, %arg5: memref<128x128xf32, #tpu.memory_space<vmem>>, %arg6: memref<1x128xf32, #tpu.memory_space<vmem>>, %arg7: memref<128x1xf32, #tpu.memory_space<vmem>>, %arg8: memref<128x1xf32, #tpu.memory_space<vmem>>, %arg9: memref<1x128xf32, #tpu.memory_space<vmem>>, %arg10: memref<1x128xf32, #tpu.memory_space<vmem>>, %arg11: memref<8x128xf32, #tpu.memory_space<vmem>>, %arg12: memref<8x128xf32, #tpu.memory_space<vmem>>, %arg13: memref<128x16xf32, #tpu.memory_space<vmem>>, %arg14: memref<128x16xf32, #tpu.memory_space<vmem>>) attributes {dimension_semantics = [#tpu.dimension_semantics<parallel>], iteration_bounds = array<i64: 2>, scalar_prefetch = 0 : i64, scratch_operands = 3 : i64, tpu.core_type = #tpu.core_type<tc>, window_params = [{transform_indices = @transform_0, window_bounds = array<i64: 1, 16, 128>}, {transform_indices = @transform_1, window_bounds = array<i64: 1, 128, 16>}, {pipeline_mode = #tpu.pipeline_mode<synchronous>, transform_indices = @transform_2, window_bounds = array<i64: 128, 128>}, {pipeline_mode = #tpu.pipeline_mode<synchronous>, transform_indices = @transform_3, window_bounds = array<i64: 128, 128>}, {pipeline_mode = #tpu.pipeline_mode<synchronous>, transform_indices = @transform_4, window_bounds = array<i64: 128, 128>}, {pipeline_mode = #tpu.pipeline_mode<synchronous>, transform_indices = @transform_5, window_bounds = array<i64: 1, 128>}, {pipeline_mode = #tpu.pipeline_mode<synchronous>, transform_indices = @transform_6, window_bounds = array<i64: 128, 1>}, {pipeline_mode = #tpu.pipeline_mode<synchronous>, transform_indices = @transform_7, window_bounds = array<i64: 128, 1>}, {pipeline_mode = #tpu.pipeline_mode<synchronous>, transform_indices = @transform_8, window_bounds = array<i64: 1, 128>}, {pipeline_mode = #tpu.pipeline_mode<synchronous>, transform_indices = @transform_9, window_bounds = array<i64: 1, 128>}, {transform_indices = @transform_10, window_bounds = array<i64: 8, 128>}]} {
    %c0 = arith.constant 0 : index
    %c0_0 = arith.constant 0 : index
    %c0_1 = arith.constant 0 : index
    %0 = vector.load %arg1[%c0, %c0_0, %c0_1] : memref<1x16x128xf32, #tpu.memory_space<vmem>>, vector<1x16x128xf32>
    %1 = vector.shape_cast %0 : vector<1x16x128xf32> to vector<16x128xf32>
    %c0_2 = arith.constant 0 : index
    %c0_3 = arith.constant 0 : index
    %c0_4 = arith.constant 0 : index
    %2 = vector.load %arg2[%c0_2, %c0_3, %c0_4] : memref<1x128x16xf32, #tpu.memory_space<vmem>>, vector<1x128x16xf32>
    %3 = vector.shape_cast %2 : vector<1x128x16xf32> to vector<128x16xf32>
    %c0_5 = arith.constant 0 : index
    %c0_6 = arith.constant 0 : index
    %4 = vector.load %arg3[%c0_5, %c0_6] : memref<128x128xf32, #tpu.memory_space<vmem>>, vector<128x128xf32>
    %c0_7 = arith.constant 0 : index
    %c0_8 = arith.constant 0 : index
    %5 = vector.load %arg4[%c0_7, %c0_8] : memref<128x128xf32, #tpu.memory_space<vmem>>, vector<128x128xf32>
    %c0_9 = arith.constant 0 : index
    %c0_10 = arith.constant 0 : index
    %6 = vector.load %arg5[%c0_9, %c0_10] : memref<128x128xf32, #tpu.memory_space<vmem>>, vector<128x128xf32>
    %c0_11 = arith.constant 0 : index
    %c0_12 = arith.constant 0 : index
    %7 = vector.load %arg6[%c0_11, %c0_12] : memref<1x128xf32, #tpu.memory_space<vmem>>, vector<1x128xf32>
    %c0_13 = arith.constant 0 : index
    %c0_14 = arith.constant 0 : index
    %8 = vector.load %arg7[%c0_13, %c0_14] : memref<128x1xf32, #tpu.memory_space<vmem>>, vector<128x1xf32>
    %c0_15 = arith.constant 0 : index
    %c0_16 = arith.constant 0 : index
    %9 = vector.load %arg8[%c0_15, %c0_16] : memref<128x1xf32, #tpu.memory_space<vmem>>, vector<128x1xf32>
    %cst = arith.constant dense<0.000000e+00> : vector<16x128xf32>
    %10 = tpu.matmul %1, %4, %cst {dimension_numbers = #tpu.dot_dimension_numbers<[1], [0], [0], [1], [0, 0, 1, 1], [], []>} : vector<16x128xf32>, vector<128x128xf32>, vector<16x128xf32> -> vector<16x128xf32>
    %11 = vector.broadcast %7 : vector<1x128xf32> to vector<16x128xf32>
    %12 = arith.addf %10, %11 : vector<16x128xf32>
    %cst_17 = arith.constant dense<0.000000e+00> : vector<128x16xf32>
    %13 = tpu.matmul %5, %3, %cst_17 {dimension_numbers = #tpu.dot_dimension_numbers<[1], [0], [0], [1], [0, 0, 1, 1], [], []>} : vector<128x128xf32>, vector<128x16xf32>, vector<128x16xf32> -> vector<128x16xf32>
    %14 = vector.broadcast %8 : vector<128x1xf32> to vector<128x16xf32>
    %15 = arith.addf %13, %14 : vector<128x16xf32>
    %cst_18 = arith.constant dense<0.000000e+00> : vector<128x16xf32>
    %16 = tpu.matmul %6, %3, %cst_18 {dimension_numbers = #tpu.dot_dimension_numbers<[1], [0], [0], [1], [0, 0, 1, 1], [], []>} : vector<128x128xf32>, vector<128x16xf32>, vector<128x16xf32> -> vector<128x16xf32>
    %17 = vector.broadcast %9 : vector<128x1xf32> to vector<128x16xf32>
    %18 = arith.addf %16, %17 : vector<128x16xf32>
    %cst_19 = arith.constant dense<0xFF800000> : vector<16xf32>
    %19 = vector.multi_reduction <maximumf>, %15, %cst_19 [0] : vector<128x16xf32> to vector<16xf32>
    %20 = vector.shape_cast %19 : vector<16xf32> to vector<1x16xf32>
    %cst_20 = arith.constant dense<0x7F800000> : vector<16xf32>
    %21 = vector.multi_reduction <minimumf>, %15, %cst_20 [0] : vector<128x16xf32> to vector<16xf32>
    %22 = vector.shape_cast %21 : vector<16xf32> to vector<1x16xf32>
    %c0_21 = arith.constant 0 : index
    %c0_22 = arith.constant 0 : index
    %23 = vector.load %arg13[%c0_21, %c0_22] : memref<128x16xf32, #tpu.memory_space<vmem>>, vector<128x16xf32>
    tpu.vector_store %arg13[%c0_21, %c0_22], %15 {strides = array<i32>} : memref<128x16xf32, #tpu.memory_space<vmem>>, vector<128x16xf32>,
    %c0_23 = arith.constant 0 : index
    %c0_24 = arith.constant 0 : index
    %24 = vector.load %arg14[%c0_23, %c0_24] : memref<128x16xf32, #tpu.memory_space<vmem>>, vector<128x16xf32>
    tpu.vector_store %arg14[%c0_23, %c0_24], %18 {strides = array<i32>} : memref<128x16xf32, #tpu.memory_space<vmem>>, vector<128x16xf32>,
    %25 = vector.extract_strided_slice %12 {offsets = [0, 0], sizes = [1, 128], strides = [1, 1]} : vector<16x128xf32> to vector<1x128xf32>
    %c0_25 = arith.constant 0 : index
    %c8 = arith.constant 8 : index
    %26 = vector.load %arg13[%c0_25, %c8] : memref<128x16xf32, #tpu.memory_space<vmem>>, vector<128x1xf32>
    %c0_26 = arith.constant 0 : index
    %c8_27 = arith.constant 8 : index
    %27 = vector.load %arg14[%c0_26, %c8_27] : memref<128x16xf32, #tpu.memory_space<vmem>>, vector<128x1xf32>
    %28 = vector.extract_strided_slice %20 {offsets = [0, 8], sizes = [1, 1], strides = [1, 1]} : vector<1x16xf32> to vector<1x1xf32>
    %29 = vector.extract_strided_slice %22 {offsets = [0, 8], sizes = [1, 1], strides = [1, 1]} : vector<1x16xf32> to vector<1x1xf32>
    %cst_28 = arith.constant 0.000000e+00 : f32
    %30 = vector.broadcast %cst_28 : f32 to vector<1x128xf32>
    %31 = arith.cmpf oge, %25, %30 : vector<1x128xf32>
    %32 = vector.broadcast %28 : vector<1x1xf32> to vector<1x128xf32>
    %33 = arith.mulf %25, %32 : vector<1x128xf32>
    %34 = vector.broadcast %29 : vector<1x1xf32> to vector<1x128xf32>
    %35 = arith.mulf %25, %34 : vector<1x128xf32>
    %36 = arith.select %31, %33, %35 : vector<1x128xi1>, vector<1x128xf32>
    %37 = vector.broadcast %26 : vector<128x1xf32> to vector<128x128xf32>
    %38 = vector.broadcast %25 : vector<1x128xf32> to vector<128x128xf32>
    %39 = arith.mulf %37, %38 : vector<128x128xf32>
    %40 = vector.broadcast %36 : vector<1x128xf32> to vector<128x128xf32>
    %41 = arith.subf %39, %40 : vector<128x128xf32>
    %42 = math.exp %41 : vector<128x128xf32>
    %cst_29 = arith.constant dense<0.000000e+00> : vector<128xf32>
    %43 = vector.multi_reduction <add>, %42, %cst_29 [0] : vector<128x128xf32> to vector<128xf32>
    %44 = vector.shape_cast %43 : vector<128xf32> to vector<1x128xf32>
    %45 = vector.broadcast %27 : vector<128x1xf32> to vector<128x128xf32>
    %46 = arith.mulf %42, %45 : vector<128x128xf32>
    %cst_30 = arith.constant dense<0.000000e+00> : vector<128xf32>
    %47 = vector.multi_reduction <add>, %46, %cst_30 [0] : vector<128x128xf32> to vector<128xf32>
    %48 = vector.shape_cast %47 : vector<128xf32> to vector<1x128xf32>
    %49 = tpu.reciprocal %44 {approx = true} : vector<1x128xf32> -> vector<1x128xf32>
    %50 = arith.mulf %48, %49 : vector<1x128xf32>
    %51 = vector.extract_strided_slice %12 {offsets = [8, 0], sizes = [1, 128], strides = [1, 1]} : vector<16x128xf32> to vector<1x128xf32>
    %c0_31 = arith.constant 0 : index
    %c0_32 = arith.constant 0 : index
    %52 = vector.load %arg13[%c0_31, %c0_32] : memref<128x16xf32, #tpu.memory_space<vmem>>, vector<128x1xf32>
    %c0_33 = arith.constant 0 : index
    %c0_34 = arith.constant 0 : index
    %53 = vector.load %arg14[%c0_33, %c0_34] : memref<128x16xf32, #tpu.memory_space<vmem>>, vector<128x1xf32>
    %54 = vector.extract_strided_slice %20 {offsets = [0, 0], sizes = [1, 1], strides = [1, 1]} : vector<1x16xf32> to vector<1x1xf32>
    %55 = vector.extract_strided_slice %22 {offsets = [0, 0], sizes = [1, 1], strides = [1, 1]} : vector<1x16xf32> to vector<1x1xf32>
    %cst_35 = arith.constant 0.000000e+00 : f32
    %56 = vector.broadcast %cst_35 : f32 to vector<1x128xf32>
    %57 = arith.cmpf oge, %51, %56 : vector<1x128xf32>
    %58 = vector.broadcast %54 : vector<1x1xf32> to vector<1x128xf32>
    %59 = arith.mulf %51, %58 : vector<1x128xf32>
    %60 = vector.broadcast %55 : vector<1x1xf32> to vector<1x128xf32>
    %61 = arith.mulf %51, %60 : vector<1x128xf32>
    %62 = arith.select %57, %59, %61 : vector<1x128xi1>, vector<1x128xf32>
    %63 = vector.broadcast %52 : vector<128x1xf32> to vector<128x128xf32>
    %64 = vector.broadcast %51 : vector<1x128xf32> to vector<128x128xf32>
    %65 = arith.mulf %63, %64 : vector<128x128xf32>
    %66 = vector.broadcast %62 : vector<1x128xf32> to vector<128x128xf32>
    %67 = arith.subf %65, %66 : vector<128x128xf32>
    %68 = math.exp %67 : vector<128x128xf32>
    %cst_36 = arith.constant dense<0.000000e+00> : vector<128xf32>
    %69 = vector.multi_reduction <add>, %68, %cst_36 [0] : vector<128x128xf32> to vector<128xf32>
    %70 = vector.shape_cast %69 : vector<128xf32> to vector<1x128xf32>
    %71 = vector.broadcast %53 : vector<128x1xf32> to vector<128x128xf32>
    %72 = arith.mulf %68, %71 : vector<128x128xf32>
    %cst_37 = arith.constant dense<0.000000e+00> : vector<128xf32>
    %73 = vector.multi_reduction <add>, %72, %cst_37 [0] : vector<128x128xf32> to vector<128xf32>
    %74 = vector.shape_cast %73 : vector<128xf32> to vector<1x128xf32>
    %75 = tpu.reciprocal %70 {approx = true} : vector<1x128xf32> -> vector<1x128xf32>
    %76 = arith.mulf %74, %75 : vector<1x128xf32>
    %77 = arith.mulf %50, %76 : vector<1x128xf32>
    %c0_38 = arith.constant 0 : index
    %c0_39 = arith.constant 0 : index
    %78 = vector.load %arg12[%c0_38, %c0_39] : memref<8x128xf32, #tpu.memory_space<vmem>>, vector<1x128xf32>
    tpu.vector_store %arg12[%c0_38, %c0_39], %77 {strides = array<i32>} : memref<8x128xf32, #tpu.memory_space<vmem>>, vector<1x128xf32>,
    %79 = vector.extract_strided_slice %12 {offsets = [1, 0], sizes = [1, 128], strides = [1, 1]} : vector<16x128xf32> to vector<1x128xf32>
    %c0_40 = arith.constant 0 : index
    %c9 = arith.constant 9 : index
    %80 = vector.load %arg13[%c0_40, %c9] : memref<128x16xf32, #tpu.memory_space<vmem>>, vector<128x1xf32>
    %c0_41 = arith.constant 0 : index
    %c9_42 = arith.constant 9 : index
    %81 = vector.load %arg14[%c0_41, %c9_42] : memref<128x16xf32, #tpu.memory_space<vmem>>, vector<128x1xf32>
    %82 = vector.extract_strided_slice %20 {offsets = [0, 9], sizes = [1, 1], strides = [1, 1]} : vector<1x16xf32> to vector<1x1xf32>
    %83 = vector.extract_strided_slice %22 {offsets = [0, 9], sizes = [1, 1], strides = [1, 1]} : vector<1x16xf32> to vector<1x1xf32>
    %cst_43 = arith.constant 0.000000e+00 : f32
    %84 = vector.broadcast %cst_43 : f32 to vector<1x128xf32>
    %85 = arith.cmpf oge, %79, %84 : vector<1x128xf32>
    %86 = vector.broadcast %82 : vector<1x1xf32> to vector<1x128xf32>
    %87 = arith.mulf %79, %86 : vector<1x128xf32>
    %88 = vector.broadcast %83 : vector<1x1xf32> to vector<1x128xf32>
    %89 = arith.mulf %79, %88 : vector<1x128xf32>
    %90 = arith.select %85, %87, %89 : vector<1x128xi1>, vector<1x128xf32>
    %91 = vector.broadcast %80 : vector<128x1xf32> to vector<128x128xf32>
    %92 = vector.broadcast %79 : vector<1x128xf32> to vector<128x128xf32>
    %93 = arith.mulf %91, %92 : vector<128x128xf32>
    %94 = vector.broadcast %90 : vector<1x128xf32> to vector<128x128xf32>
    %95 = arith.subf %93, %94 : vector<128x128xf32>
    %96 = math.exp %95 : vector<128x128xf32>
    %cst_44 = arith.constant dense<0.000000e+00> : vector<128xf32>
    %97 = vector.multi_reduction <add>, %96, %cst_44 [0] : vector<128x128xf32> to vector<128xf32>
    %98 = vector.shape_cast %97 : vector<128xf32> to vector<1x128xf32>
    %99 = vector.broadcast %81 : vector<128x1xf32> to vector<128x128xf32>
    %100 = arith.mulf %96, %99 : vector<128x128xf32>
    %cst_45 = arith.constant dense<0.000000e+00> : vector<128xf32>
    %101 = vector.multi_reduction <add>, %100, %cst_45 [0] : vector<128x128xf32> to vector<128xf32>
    %102 = vector.shape_cast %101 : vector<128xf32> to vector<1x128xf32>
    %103 = tpu.reciprocal %98 {approx = true} : vector<1x128xf32> -> vector<1x128xf32>
    %104 = arith.mulf %102, %103 : vector<1x128xf32>
    %105 = vector.extract_strided_slice %12 {offsets = [9, 0], sizes = [1, 128], strides = [1, 1]} : vector<16x128xf32> to vector<1x128xf32>
    %c0_46 = arith.constant 0 : index
    %c1 = arith.constant 1 : index
    %106 = vector.load %arg13[%c0_46, %c1] : memref<128x16xf32, #tpu.memory_space<vmem>>, vector<128x1xf32>
    %c0_47 = arith.constant 0 : index
    %c1_48 = arith.constant 1 : index
    %107 = vector.load %arg14[%c0_47, %c1_48] : memref<128x16xf32, #tpu.memory_space<vmem>>, vector<128x1xf32>
    %108 = vector.extract_strided_slice %20 {offsets = [0, 1], sizes = [1, 1], strides = [1, 1]} : vector<1x16xf32> to vector<1x1xf32>
    %109 = vector.extract_strided_slice %22 {offsets = [0, 1], sizes = [1, 1], strides = [1, 1]} : vector<1x16xf32> to vector<1x1xf32>
    %cst_49 = arith.constant 0.000000e+00 : f32
    %110 = vector.broadcast %cst_49 : f32 to vector<1x128xf32>
    %111 = arith.cmpf oge, %105, %110 : vector<1x128xf32>
    %112 = vector.broadcast %108 : vector<1x1xf32> to vector<1x128xf32>
    %113 = arith.mulf %105, %112 : vector<1x128xf32>
    %114 = vector.broadcast %109 : vector<1x1xf32> to vector<1x128xf32>
    %115 = arith.mulf %105, %114 : vector<1x128xf32>
    %116 = arith.select %111, %113, %115 : vector<1x128xi1>, vector<1x128xf32>
    %117 = vector.broadcast %106 : vector<128x1xf32> to vector<128x128xf32>
    %118 = vector.broadcast %105 : vector<1x128xf32> to vector<128x128xf32>
    %119 = arith.mulf %117, %118 : vector<128x128xf32>
    %120 = vector.broadcast %116 : vector<1x128xf32> to vector<128x128xf32>
    %121 = arith.subf %119, %120 : vector<128x128xf32>
    %122 = math.exp %121 : vector<128x128xf32>
    %cst_50 = arith.constant dense<0.000000e+00> : vector<128xf32>
    %123 = vector.multi_reduction <add>, %122, %cst_50 [0] : vector<128x128xf32> to vector<128xf32>
    %124 = vector.shape_cast %123 : vector<128xf32> to vector<1x128xf32>
    %125 = vector.broadcast %107 : vector<128x1xf32> to vector<128x128xf32>
    %126 = arith.mulf %122, %125 : vector<128x128xf32>
    %cst_51 = arith.constant dense<0.000000e+00> : vector<128xf32>
    %127 = vector.multi_reduction <add>, %126, %cst_51 [0] : vector<128x128xf32> to vector<128xf32>
    %128 = vector.shape_cast %127 : vector<128xf32> to vector<1x128xf32>
    %129 = tpu.reciprocal %124 {approx = true} : vector<1x128xf32> -> vector<1x128xf32>
    %130 = arith.mulf %128, %129 : vector<1x128xf32>
    %131 = arith.mulf %104, %130 : vector<1x128xf32>
    %c1_52 = arith.constant 1 : index
    %c0_53 = arith.constant 0 : index
    %132 = vector.load %arg12[%c1_52, %c0_53] : memref<8x128xf32, #tpu.memory_space<vmem>>, vector<1x128xf32>
    tpu.vector_store %arg12[%c1_52, %c0_53], %131 {strides = array<i32>} : memref<8x128xf32, #tpu.memory_space<vmem>>, vector<1x128xf32>,
    %133 = vector.extract_strided_slice %12 {offsets = [2, 0], sizes = [1, 128], strides = [1, 1]} : vector<16x128xf32> to vector<1x128xf32>
    %c0_54 = arith.constant 0 : index
    %c10 = arith.constant 10 : index
    %134 = vector.load %arg13[%c0_54, %c10] : memref<128x16xf32, #tpu.memory_space<vmem>>, vector<128x1xf32>
    %c0_55 = arith.constant 0 : index
    %c10_56 = arith.constant 10 : index
    %135 = vector.load %arg14[%c0_55, %c10_56] : memref<128x16xf32, #tpu.memory_space<vmem>>, vector<128x1xf32>
    %136 = vector.extract_strided_slice %20 {offsets = [0, 10], sizes = [1, 1], strides = [1, 1]} : vector<1x16xf32> to vector<1x1xf32>
    %137 = vector.extract_strided_slice %22 {offsets = [0, 10], sizes = [1, 1], strides = [1, 1]} : vector<1x16xf32> to vector<1x1xf32>
    %cst_57 = arith.constant 0.000000e+00 : f32
    %138 = vector.broadcast %cst_57 : f32 to vector<1x128xf32>
    %139 = arith.cmpf oge, %133, %138 : vector<1x128xf32>
    %140 = vector.broadcast %136 : vector<1x1xf32> to vector<1x128xf32>
    %141 = arith.mulf %133, %140 : vector<1x128xf32>
    %142 = vector.broadcast %137 : vector<1x1xf32> to vector<1x128xf32>
    %143 = arith.mulf %133, %142 : vector<1x128xf32>
    %144 = arith.select %139, %141, %143 : vector<1x128xi1>, vector<1x128xf32>
    %145 = vector.broadcast %134 : vector<128x1xf32> to vector<128x128xf32>
    %146 = vector.broadcast %133 : vector<1x128xf32> to vector<128x128xf32>
    %147 = arith.mulf %145, %146 : vector<128x128xf32>
    %148 = vector.broadcast %144 : vector<1x128xf32> to vector<128x128xf32>
    %149 = arith.subf %147, %148 : vector<128x128xf32>
    %150 = math.exp %149 : vector<128x128xf32>
    %cst_58 = arith.constant dense<0.000000e+00> : vector<128xf32>
    %151 = vector.multi_reduction <add>, %150, %cst_58 [0] : vector<128x128xf32> to vector<128xf32>
    %152 = vector.shape_cast %151 : vector<128xf32> to vector<1x128xf32>
    %153 = vector.broadcast %135 : vector<128x1xf32> to vector<128x128xf32>
    %154 = arith.mulf %150, %153 : vector<128x128xf32>
    %cst_59 = arith.constant dense<0.000000e+00> : vector<128xf32>
    %155 = vector.multi_reduction <add>, %154, %cst_59 [0] : vector<128x128xf32> to vector<128xf32>
    %156 = vector.shape_cast %155 : vector<128xf32> to vector<1x128xf32>
    %157 = tpu.reciprocal %152 {approx = true} : vector<1x128xf32> -> vector<1x128xf32>
    %158 = arith.mulf %156, %157 : vector<1x128xf32>
    %159 = vector.extract_strided_slice %12 {offsets = [10, 0], sizes = [1, 128], strides = [1, 1]} : vector<16x128xf32> to vector<1x128xf32>
    %c0_60 = arith.constant 0 : index
    %c2 = arith.constant 2 : index
    %160 = vector.load %arg13[%c0_60, %c2] : memref<128x16xf32, #tpu.memory_space<vmem>>, vector<128x1xf32>
    %c0_61 = arith.constant 0 : index
    %c2_62 = arith.constant 2 : index
    %161 = vector.load %arg14[%c0_61, %c2_62] : memref<128x16xf32, #tpu.memory_space<vmem>>, vector<128x1xf32>
    %162 = vector.extract_strided_slice %20 {offsets = [0, 2], sizes = [1, 1], strides = [1, 1]} : vector<1x16xf32> to vector<1x1xf32>
    %163 = vector.extract_strided_slice %22 {offsets = [0, 2], sizes = [1, 1], strides = [1, 1]} : vector<1x16xf32> to vector<1x1xf32>
    %cst_63 = arith.constant 0.000000e+00 : f32
    %164 = vector.broadcast %cst_63 : f32 to vector<1x128xf32>
    %165 = arith.cmpf oge, %159, %164 : vector<1x128xf32>
    %166 = vector.broadcast %162 : vector<1x1xf32> to vector<1x128xf32>
    %167 = arith.mulf %159, %166 : vector<1x128xf32>
    %168 = vector.broadcast %163 : vector<1x1xf32> to vector<1x128xf32>
    %169 = arith.mulf %159, %168 : vector<1x128xf32>
    %170 = arith.select %165, %167, %169 : vector<1x128xi1>, vector<1x128xf32>
    %171 = vector.broadcast %160 : vector<128x1xf32> to vector<128x128xf32>
    %172 = vector.broadcast %159 : vector<1x128xf32> to vector<128x128xf32>
    %173 = arith.mulf %171, %172 : vector<128x128xf32>
    %174 = vector.broadcast %170 : vector<1x128xf32> to vector<128x128xf32>
    %175 = arith.subf %173, %174 : vector<128x128xf32>
    %176 = math.exp %175 : vector<128x128xf32>
    %cst_64 = arith.constant dense<0.000000e+00> : vector<128xf32>
    %177 = vector.multi_reduction <add>, %176, %cst_64 [0] : vector<128x128xf32> to vector<128xf32>
    %178 = vector.shape_cast %177 : vector<128xf32> to vector<1x128xf32>
    %179 = vector.broadcast %161 : vector<128x1xf32> to vector<128x128xf32>
    %180 = arith.mulf %176, %179 : vector<128x128xf32>
    %cst_65 = arith.constant dense<0.000000e+00> : vector<128xf32>
    %181 = vector.multi_reduction <add>, %180, %cst_65 [0] : vector<128x128xf32> to vector<128xf32>
    %182 = vector.shape_cast %181 : vector<128xf32> to vector<1x128xf32>
    %183 = tpu.reciprocal %178 {approx = true} : vector<1x128xf32> -> vector<1x128xf32>
    %184 = arith.mulf %182, %183 : vector<1x128xf32>
    %185 = arith.mulf %158, %184 : vector<1x128xf32>
    %c2_66 = arith.constant 2 : index
    %c0_67 = arith.constant 0 : index
    %186 = vector.load %arg12[%c2_66, %c0_67] : memref<8x128xf32, #tpu.memory_space<vmem>>, vector<1x128xf32>
    tpu.vector_store %arg12[%c2_66, %c0_67], %185 {strides = array<i32>} : memref<8x128xf32, #tpu.memory_space<vmem>>, vector<1x128xf32>,
    %187 = vector.extract_strided_slice %12 {offsets = [3, 0], sizes = [1, 128], strides = [1, 1]} : vector<16x128xf32> to vector<1x128xf32>
    %c0_68 = arith.constant 0 : index
    %c11 = arith.constant 11 : index
    %188 = vector.load %arg13[%c0_68, %c11] : memref<128x16xf32, #tpu.memory_space<vmem>>, vector<128x1xf32>
    %c0_69 = arith.constant 0 : index
    %c11_70 = arith.constant 11 : index
    %189 = vector.load %arg14[%c0_69, %c11_70] : memref<128x16xf32, #tpu.memory_space<vmem>>, vector<128x1xf32>
    %190 = vector.extract_strided_slice %20 {offsets = [0, 11], sizes = [1, 1], strides = [1, 1]} : vector<1x16xf32> to vector<1x1xf32>
    %191 = vector.extract_strided_slice %22 {offsets = [0, 11], sizes = [1, 1], strides = [1, 1]} : vector<1x16xf32> to vector<1x1xf32>
    %cst_71 = arith.constant 0.000000e+00 : f32
    %192 = vector.broadcast %cst_71 : f32 to vector<1x128xf32>
    %193 = arith.cmpf oge, %187, %192 : vector<1x128xf32>
    %194 = vector.broadcast %190 : vector<1x1xf32> to vector<1x128xf32>
    %195 = arith.mulf %187, %194 : vector<1x128xf32>
    %196 = vector.broadcast %191 : vector<1x1xf32> to vector<1x128xf32>
    %197 = arith.mulf %187, %196 : vector<1x128xf32>
    %198 = arith.select %193, %195, %197 : vector<1x128xi1>, vector<1x128xf32>
    %199 = vector.broadcast %188 : vector<128x1xf32> to vector<128x128xf32>
    %200 = vector.broadcast %187 : vector<1x128xf32> to vector<128x128xf32>
    %201 = arith.mulf %199, %200 : vector<128x128xf32>
    %202 = vector.broadcast %198 : vector<1x128xf32> to vector<128x128xf32>
    %203 = arith.subf %201, %202 : vector<128x128xf32>
    %204 = math.exp %203 : vector<128x128xf32>
    %cst_72 = arith.constant dense<0.000000e+00> : vector<128xf32>
    %205 = vector.multi_reduction <add>, %204, %cst_72 [0] : vector<128x128xf32> to vector<128xf32>
    %206 = vector.shape_cast %205 : vector<128xf32> to vector<1x128xf32>
    %207 = vector.broadcast %189 : vector<128x1xf32> to vector<128x128xf32>
    %208 = arith.mulf %204, %207 : vector<128x128xf32>
    %cst_73 = arith.constant dense<0.000000e+00> : vector<128xf32>
    %209 = vector.multi_reduction <add>, %208, %cst_73 [0] : vector<128x128xf32> to vector<128xf32>
    %210 = vector.shape_cast %209 : vector<128xf32> to vector<1x128xf32>
    %211 = tpu.reciprocal %206 {approx = true} : vector<1x128xf32> -> vector<1x128xf32>
    %212 = arith.mulf %210, %211 : vector<1x128xf32>
    %213 = vector.extract_strided_slice %12 {offsets = [11, 0], sizes = [1, 128], strides = [1, 1]} : vector<16x128xf32> to vector<1x128xf32>
    %c0_74 = arith.constant 0 : index
    %c3 = arith.constant 3 : index
    %214 = vector.load %arg13[%c0_74, %c3] : memref<128x16xf32, #tpu.memory_space<vmem>>, vector<128x1xf32>
    %c0_75 = arith.constant 0 : index
    %c3_76 = arith.constant 3 : index
    %215 = vector.load %arg14[%c0_75, %c3_76] : memref<128x16xf32, #tpu.memory_space<vmem>>, vector<128x1xf32>
    %216 = vector.extract_strided_slice %20 {offsets = [0, 3], sizes = [1, 1], strides = [1, 1]} : vector<1x16xf32> to vector<1x1xf32>
    %217 = vector.extract_strided_slice %22 {offsets = [0, 3], sizes = [1, 1], strides = [1, 1]} : vector<1x16xf32> to vector<1x1xf32>
    %cst_77 = arith.constant 0.000000e+00 : f32
    %218 = vector.broadcast %cst_77 : f32 to vector<1x128xf32>
    %219 = arith.cmpf oge, %213, %218 : vector<1x128xf32>
    %220 = vector.broadcast %216 : vector<1x1xf32> to vector<1x128xf32>
    %221 = arith.mulf %213, %220 : vector<1x128xf32>
    %222 = vector.broadcast %217 : vector<1x1xf32> to vector<1x128xf32>
    %223 = arith.mulf %213, %222 : vector<1x128xf32>
    %224 = arith.select %219, %221, %223 : vector<1x128xi1>, vector<1x128xf32>
    %225 = vector.broadcast %214 : vector<128x1xf32> to vector<128x128xf32>
    %226 = vector.broadcast %213 : vector<1x128xf32> to vector<128x128xf32>
    %227 = arith.mulf %225, %226 : vector<128x128xf32>
    %228 = vector.broadcast %224 : vector<1x128xf32> to vector<128x128xf32>
    %229 = arith.subf %227, %228 : vector<128x128xf32>
    %230 = math.exp %229 : vector<128x128xf32>
    %cst_78 = arith.constant dense<0.000000e+00> : vector<128xf32>
    %231 = vector.multi_reduction <add>, %230, %cst_78 [0] : vector<128x128xf32> to vector<128xf32>
    %232 = vector.shape_cast %231 : vector<128xf32> to vector<1x128xf32>
    %233 = vector.broadcast %215 : vector<128x1xf32> to vector<128x128xf32>
    %234 = arith.mulf %230, %233 : vector<128x128xf32>
    %cst_79 = arith.constant dense<0.000000e+00> : vector<128xf32>
    %235 = vector.multi_reduction <add>, %234, %cst_79 [0] : vector<128x128xf32> to vector<128xf32>
    %236 = vector.shape_cast %235 : vector<128xf32> to vector<1x128xf32>
    %237 = tpu.reciprocal %232 {approx = true} : vector<1x128xf32> -> vector<1x128xf32>
    %238 = arith.mulf %236, %237 : vector<1x128xf32>
    %239 = arith.mulf %212, %238 : vector<1x128xf32>
    %c3_80 = arith.constant 3 : index
    %c0_81 = arith.constant 0 : index
    %240 = vector.load %arg12[%c3_80, %c0_81] : memref<8x128xf32, #tpu.memory_space<vmem>>, vector<1x128xf32>
    tpu.vector_store %arg12[%c3_80, %c0_81], %239 {strides = array<i32>} : memref<8x128xf32, #tpu.memory_space<vmem>>, vector<1x128xf32>,
    %241 = vector.extract_strided_slice %12 {offsets = [4, 0], sizes = [1, 128], strides = [1, 1]} : vector<16x128xf32> to vector<1x128xf32>
    %c0_82 = arith.constant 0 : index
    %c12 = arith.constant 12 : index
    %242 = vector.load %arg13[%c0_82, %c12] : memref<128x16xf32, #tpu.memory_space<vmem>>, vector<128x1xf32>
    %c0_83 = arith.constant 0 : index
    %c12_84 = arith.constant 12 : index
    %243 = vector.load %arg14[%c0_83, %c12_84] : memref<128x16xf32, #tpu.memory_space<vmem>>, vector<128x1xf32>
    %244 = vector.extract_strided_slice %20 {offsets = [0, 12], sizes = [1, 1], strides = [1, 1]} : vector<1x16xf32> to vector<1x1xf32>
    %245 = vector.extract_strided_slice %22 {offsets = [0, 12], sizes = [1, 1], strides = [1, 1]} : vector<1x16xf32> to vector<1x1xf32>
    %cst_85 = arith.constant 0.000000e+00 : f32
    %246 = vector.broadcast %cst_85 : f32 to vector<1x128xf32>
    %247 = arith.cmpf oge, %241, %246 : vector<1x128xf32>
    %248 = vector.broadcast %244 : vector<1x1xf32> to vector<1x128xf32>
    %249 = arith.mulf %241, %248 : vector<1x128xf32>
    %250 = vector.broadcast %245 : vector<1x1xf32> to vector<1x128xf32>
    %251 = arith.mulf %241, %250 : vector<1x128xf32>
    %252 = arith.select %247, %249, %251 : vector<1x128xi1>, vector<1x128xf32>
    %253 = vector.broadcast %242 : vector<128x1xf32> to vector<128x128xf32>
    %254 = vector.broadcast %241 : vector<1x128xf32> to vector<128x128xf32>
    %255 = arith.mulf %253, %254 : vector<128x128xf32>
    %256 = vector.broadcast %252 : vector<1x128xf32> to vector<128x128xf32>
    %257 = arith.subf %255, %256 : vector<128x128xf32>
    %258 = math.exp %257 : vector<128x128xf32>
    %cst_86 = arith.constant dense<0.000000e+00> : vector<128xf32>
    %259 = vector.multi_reduction <add>, %258, %cst_86 [0] : vector<128x128xf32> to vector<128xf32>
    %260 = vector.shape_cast %259 : vector<128xf32> to vector<1x128xf32>
    %261 = vector.broadcast %243 : vector<128x1xf32> to vector<128x128xf32>
    %262 = arith.mulf %258, %261 : vector<128x128xf32>
    %cst_87 = arith.constant dense<0.000000e+00> : vector<128xf32>
    %263 = vector.multi_reduction <add>, %262, %cst_87 [0] : vector<128x128xf32> to vector<128xf32>
    %264 = vector.shape_cast %263 : vector<128xf32> to vector<1x128xf32>
    %265 = tpu.reciprocal %260 {approx = true} : vector<1x128xf32> -> vector<1x128xf32>
    %266 = arith.mulf %264, %265 : vector<1x128xf32>
    %267 = vector.extract_strided_slice %12 {offsets = [12, 0], sizes = [1, 128], strides = [1, 1]} : vector<16x128xf32> to vector<1x128xf32>
    %c0_88 = arith.constant 0 : index
    %c4 = arith.constant 4 : index
    %268 = vector.load %arg13[%c0_88, %c4] : memref<128x16xf32, #tpu.memory_space<vmem>>, vector<128x1xf32>
    %c0_89 = arith.constant 0 : index
    %c4_90 = arith.constant 4 : index
    %269 = vector.load %arg14[%c0_89, %c4_90] : memref<128x16xf32, #tpu.memory_space<vmem>>, vector<128x1xf32>
    %270 = vector.extract_strided_slice %20 {offsets = [0, 4], sizes = [1, 1], strides = [1, 1]} : vector<1x16xf32> to vector<1x1xf32>
    %271 = vector.extract_strided_slice %22 {offsets = [0, 4], sizes = [1, 1], strides = [1, 1]} : vector<1x16xf32> to vector<1x1xf32>
    %cst_91 = arith.constant 0.000000e+00 : f32
    %272 = vector.broadcast %cst_91 : f32 to vector<1x128xf32>
    %273 = arith.cmpf oge, %267, %272 : vector<1x128xf32>
    %274 = vector.broadcast %270 : vector<1x1xf32> to vector<1x128xf32>
    %275 = arith.mulf %267, %274 : vector<1x128xf32>
    %276 = vector.broadcast %271 : vector<1x1xf32> to vector<1x128xf32>
    %277 = arith.mulf %267, %276 : vector<1x128xf32>
    %278 = arith.select %273, %275, %277 : vector<1x128xi1>, vector<1x128xf32>
    %279 = vector.broadcast %268 : vector<128x1xf32> to vector<128x128xf32>
    %280 = vector.broadcast %267 : vector<1x128xf32> to vector<128x128xf32>
    %281 = arith.mulf %279, %280 : vector<128x128xf32>
    %282 = vector.broadcast %278 : vector<1x128xf32> to vector<128x128xf32>
    %283 = arith.subf %281, %282 : vector<128x128xf32>
    %284 = math.exp %283 : vector<128x128xf32>
    %cst_92 = arith.constant dense<0.000000e+00> : vector<128xf32>
    %285 = vector.multi_reduction <add>, %284, %cst_92 [0] : vector<128x128xf32> to vector<128xf32>
    %286 = vector.shape_cast %285 : vector<128xf32> to vector<1x128xf32>
    %287 = vector.broadcast %269 : vector<128x1xf32> to vector<128x128xf32>
    %288 = arith.mulf %284, %287 : vector<128x128xf32>
    %cst_93 = arith.constant dense<0.000000e+00> : vector<128xf32>
    %289 = vector.multi_reduction <add>, %288, %cst_93 [0] : vector<128x128xf32> to vector<128xf32>
    %290 = vector.shape_cast %289 : vector<128xf32> to vector<1x128xf32>
    %291 = tpu.reciprocal %286 {approx = true} : vector<1x128xf32> -> vector<1x128xf32>
    %292 = arith.mulf %290, %291 : vector<1x128xf32>
    %293 = arith.mulf %266, %292 : vector<1x128xf32>
    %c4_94 = arith.constant 4 : index
    %c0_95 = arith.constant 0 : index
    %294 = vector.load %arg12[%c4_94, %c0_95] : memref<8x128xf32, #tpu.memory_space<vmem>>, vector<1x128xf32>
    tpu.vector_store %arg12[%c4_94, %c0_95], %293 {strides = array<i32>} : memref<8x128xf32, #tpu.memory_space<vmem>>, vector<1x128xf32>,
    %295 = vector.extract_strided_slice %12 {offsets = [5, 0], sizes = [1, 128], strides = [1, 1]} : vector<16x128xf32> to vector<1x128xf32>
    %c0_96 = arith.constant 0 : index
    %c13 = arith.constant 13 : index
    %296 = vector.load %arg13[%c0_96, %c13] : memref<128x16xf32, #tpu.memory_space<vmem>>, vector<128x1xf32>
    %c0_97 = arith.constant 0 : index
    %c13_98 = arith.constant 13 : index
    %297 = vector.load %arg14[%c0_97, %c13_98] : memref<128x16xf32, #tpu.memory_space<vmem>>, vector<128x1xf32>
    %298 = vector.extract_strided_slice %20 {offsets = [0, 13], sizes = [1, 1], strides = [1, 1]} : vector<1x16xf32> to vector<1x1xf32>
    %299 = vector.extract_strided_slice %22 {offsets = [0, 13], sizes = [1, 1], strides = [1, 1]} : vector<1x16xf32> to vector<1x1xf32>
    %cst_99 = arith.constant 0.000000e+00 : f32
    %300 = vector.broadcast %cst_99 : f32 to vector<1x128xf32>
    %301 = arith.cmpf oge, %295, %300 : vector<1x128xf32>
    %302 = vector.broadcast %298 : vector<1x1xf32> to vector<1x128xf32>
    %303 = arith.mulf %295, %302 : vector<1x128xf32>
    %304 = vector.broadcast %299 : vector<1x1xf32> to vector<1x128xf32>
    %305 = arith.mulf %295, %304 : vector<1x128xf32>
    %306 = arith.select %301, %303, %305 : vector<1x128xi1>, vector<1x128xf32>
    %307 = vector.broadcast %296 : vector<128x1xf32> to vector<128x128xf32>
    %308 = vector.broadcast %295 : vector<1x128xf32> to vector<128x128xf32>
    %309 = arith.mulf %307, %308 : vector<128x128xf32>
    %310 = vector.broadcast %306 : vector<1x128xf32> to vector<128x128xf32>
    %311 = arith.subf %309, %310 : vector<128x128xf32>
    %312 = math.exp %311 : vector<128x128xf32>
    %cst_100 = arith.constant dense<0.000000e+00> : vector<128xf32>
    %313 = vector.multi_reduction <add>, %312, %cst_100 [0] : vector<128x128xf32> to vector<128xf32>
    %314 = vector.shape_cast %313 : vector<128xf32> to vector<1x128xf32>
    %315 = vector.broadcast %297 : vector<128x1xf32> to vector<128x128xf32>
    %316 = arith.mulf %312, %315 : vector<128x128xf32>
    %cst_101 = arith.constant dense<0.000000e+00> : vector<128xf32>
    %317 = vector.multi_reduction <add>, %316, %cst_101 [0] : vector<128x128xf32> to vector<128xf32>
    %318 = vector.shape_cast %317 : vector<128xf32> to vector<1x128xf32>
    %319 = tpu.reciprocal %314 {approx = true} : vector<1x128xf32> -> vector<1x128xf32>
    %320 = arith.mulf %318, %319 : vector<1x128xf32>
    %321 = vector.extract_strided_slice %12 {offsets = [13, 0], sizes = [1, 128], strides = [1, 1]} : vector<16x128xf32> to vector<1x128xf32>
    %c0_102 = arith.constant 0 : index
    %c5 = arith.constant 5 : index
    %322 = vector.load %arg13[%c0_102, %c5] : memref<128x16xf32, #tpu.memory_space<vmem>>, vector<128x1xf32>
    %c0_103 = arith.constant 0 : index
    %c5_104 = arith.constant 5 : index
    %323 = vector.load %arg14[%c0_103, %c5_104] : memref<128x16xf32, #tpu.memory_space<vmem>>, vector<128x1xf32>
    %324 = vector.extract_strided_slice %20 {offsets = [0, 5], sizes = [1, 1], strides = [1, 1]} : vector<1x16xf32> to vector<1x1xf32>
    %325 = vector.extract_strided_slice %22 {offsets = [0, 5], sizes = [1, 1], strides = [1, 1]} : vector<1x16xf32> to vector<1x1xf32>
    %cst_105 = arith.constant 0.000000e+00 : f32
    %326 = vector.broadcast %cst_105 : f32 to vector<1x128xf32>
    %327 = arith.cmpf oge, %321, %326 : vector<1x128xf32>
    %328 = vector.broadcast %324 : vector<1x1xf32> to vector<1x128xf32>
    %329 = arith.mulf %321, %328 : vector<1x128xf32>
    %330 = vector.broadcast %325 : vector<1x1xf32> to vector<1x128xf32>
    %331 = arith.mulf %321, %330 : vector<1x128xf32>
    %332 = arith.select %327, %329, %331 : vector<1x128xi1>, vector<1x128xf32>
    %333 = vector.broadcast %322 : vector<128x1xf32> to vector<128x128xf32>
    %334 = vector.broadcast %321 : vector<1x128xf32> to vector<128x128xf32>
    %335 = arith.mulf %333, %334 : vector<128x128xf32>
    %336 = vector.broadcast %332 : vector<1x128xf32> to vector<128x128xf32>
    %337 = arith.subf %335, %336 : vector<128x128xf32>
    %338 = math.exp %337 : vector<128x128xf32>
    %cst_106 = arith.constant dense<0.000000e+00> : vector<128xf32>
    %339 = vector.multi_reduction <add>, %338, %cst_106 [0] : vector<128x128xf32> to vector<128xf32>
    %340 = vector.shape_cast %339 : vector<128xf32> to vector<1x128xf32>
    %341 = vector.broadcast %323 : vector<128x1xf32> to vector<128x128xf32>
    %342 = arith.mulf %338, %341 : vector<128x128xf32>
    %cst_107 = arith.constant dense<0.000000e+00> : vector<128xf32>
    %343 = vector.multi_reduction <add>, %342, %cst_107 [0] : vector<128x128xf32> to vector<128xf32>
    %344 = vector.shape_cast %343 : vector<128xf32> to vector<1x128xf32>
    %345 = tpu.reciprocal %340 {approx = true} : vector<1x128xf32> -> vector<1x128xf32>
    %346 = arith.mulf %344, %345 : vector<1x128xf32>
    %347 = arith.mulf %320, %346 : vector<1x128xf32>
    %c5_108 = arith.constant 5 : index
    %c0_109 = arith.constant 0 : index
    %348 = vector.load %arg12[%c5_108, %c0_109] : memref<8x128xf32, #tpu.memory_space<vmem>>, vector<1x128xf32>
    tpu.vector_store %arg12[%c5_108, %c0_109], %347 {strides = array<i32>} : memref<8x128xf32, #tpu.memory_space<vmem>>, vector<1x128xf32>,
    %349 = vector.extract_strided_slice %12 {offsets = [6, 0], sizes = [1, 128], strides = [1, 1]} : vector<16x128xf32> to vector<1x128xf32>
    %c0_110 = arith.constant 0 : index
    %c14 = arith.constant 14 : index
    %350 = vector.load %arg13[%c0_110, %c14] : memref<128x16xf32, #tpu.memory_space<vmem>>, vector<128x1xf32>
    %c0_111 = arith.constant 0 : index
    %c14_112 = arith.constant 14 : index
    %351 = vector.load %arg14[%c0_111, %c14_112] : memref<128x16xf32, #tpu.memory_space<vmem>>, vector<128x1xf32>
    %352 = vector.extract_strided_slice %20 {offsets = [0, 14], sizes = [1, 1], strides = [1, 1]} : vector<1x16xf32> to vector<1x1xf32>
    %353 = vector.extract_strided_slice %22 {offsets = [0, 14], sizes = [1, 1], strides = [1, 1]} : vector<1x16xf32> to vector<1x1xf32>
    %cst_113 = arith.constant 0.000000e+00 : f32
    %354 = vector.broadcast %cst_113 : f32 to vector<1x128xf32>
    %355 = arith.cmpf oge, %349, %354 : vector<1x128xf32>
    %356 = vector.broadcast %352 : vector<1x1xf32> to vector<1x128xf32>
    %357 = arith.mulf %349, %356 : vector<1x128xf32>
    %358 = vector.broadcast %353 : vector<1x1xf32> to vector<1x128xf32>
    %359 = arith.mulf %349, %358 : vector<1x128xf32>
    %360 = arith.select %355, %357, %359 : vector<1x128xi1>, vector<1x128xf32>
    %361 = vector.broadcast %350 : vector<128x1xf32> to vector<128x128xf32>
    %362 = vector.broadcast %349 : vector<1x128xf32> to vector<128x128xf32>
    %363 = arith.mulf %361, %362 : vector<128x128xf32>
    %364 = vector.broadcast %360 : vector<1x128xf32> to vector<128x128xf32>
    %365 = arith.subf %363, %364 : vector<128x128xf32>
    %366 = math.exp %365 : vector<128x128xf32>
    %cst_114 = arith.constant dense<0.000000e+00> : vector<128xf32>
    %367 = vector.multi_reduction <add>, %366, %cst_114 [0] : vector<128x128xf32> to vector<128xf32>
    %368 = vector.shape_cast %367 : vector<128xf32> to vector<1x128xf32>
    %369 = vector.broadcast %351 : vector<128x1xf32> to vector<128x128xf32>
    %370 = arith.mulf %366, %369 : vector<128x128xf32>
    %cst_115 = arith.constant dense<0.000000e+00> : vector<128xf32>
    %371 = vector.multi_reduction <add>, %370, %cst_115 [0] : vector<128x128xf32> to vector<128xf32>
    %372 = vector.shape_cast %371 : vector<128xf32> to vector<1x128xf32>
    %373 = tpu.reciprocal %368 {approx = true} : vector<1x128xf32> -> vector<1x128xf32>
    %374 = arith.mulf %372, %373 : vector<1x128xf32>
    %375 = vector.extract_strided_slice %12 {offsets = [14, 0], sizes = [1, 128], strides = [1, 1]} : vector<16x128xf32> to vector<1x128xf32>
    %c0_116 = arith.constant 0 : index
    %c6 = arith.constant 6 : index
    %376 = vector.load %arg13[%c0_116, %c6] : memref<128x16xf32, #tpu.memory_space<vmem>>, vector<128x1xf32>
    %c0_117 = arith.constant 0 : index
    %c6_118 = arith.constant 6 : index
    %377 = vector.load %arg14[%c0_117, %c6_118] : memref<128x16xf32, #tpu.memory_space<vmem>>, vector<128x1xf32>
    %378 = vector.extract_strided_slice %20 {offsets = [0, 6], sizes = [1, 1], strides = [1, 1]} : vector<1x16xf32> to vector<1x1xf32>
    %379 = vector.extract_strided_slice %22 {offsets = [0, 6], sizes = [1, 1], strides = [1, 1]} : vector<1x16xf32> to vector<1x1xf32>
    %cst_119 = arith.constant 0.000000e+00 : f32
    %380 = vector.broadcast %cst_119 : f32 to vector<1x128xf32>
    %381 = arith.cmpf oge, %375, %380 : vector<1x128xf32>
    %382 = vector.broadcast %378 : vector<1x1xf32> to vector<1x128xf32>
    %383 = arith.mulf %375, %382 : vector<1x128xf32>
    %384 = vector.broadcast %379 : vector<1x1xf32> to vector<1x128xf32>
    %385 = arith.mulf %375, %384 : vector<1x128xf32>
    %386 = arith.select %381, %383, %385 : vector<1x128xi1>, vector<1x128xf32>
    %387 = vector.broadcast %376 : vector<128x1xf32> to vector<128x128xf32>
    %388 = vector.broadcast %375 : vector<1x128xf32> to vector<128x128xf32>
    %389 = arith.mulf %387, %388 : vector<128x128xf32>
    %390 = vector.broadcast %386 : vector<1x128xf32> to vector<128x128xf32>
    %391 = arith.subf %389, %390 : vector<128x128xf32>
    %392 = math.exp %391 : vector<128x128xf32>
    %cst_120 = arith.constant dense<0.000000e+00> : vector<128xf32>
    %393 = vector.multi_reduction <add>, %392, %cst_120 [0] : vector<128x128xf32> to vector<128xf32>
    %394 = vector.shape_cast %393 : vector<128xf32> to vector<1x128xf32>
    %395 = vector.broadcast %377 : vector<128x1xf32> to vector<128x128xf32>
    %396 = arith.mulf %392, %395 : vector<128x128xf32>
    %cst_121 = arith.constant dense<0.000000e+00> : vector<128xf32>
    %397 = vector.multi_reduction <add>, %396, %cst_121 [0] : vector<128x128xf32> to vector<128xf32>
    %398 = vector.shape_cast %397 : vector<128xf32> to vector<1x128xf32>
    %399 = tpu.reciprocal %394 {approx = true} : vector<1x128xf32> -> vector<1x128xf32>
    %400 = arith.mulf %398, %399 : vector<1x128xf32>
    %401 = arith.mulf %374, %400 : vector<1x128xf32>
    %c6_122 = arith.constant 6 : index
    %c0_123 = arith.constant 0 : index
    %402 = vector.load %arg12[%c6_122, %c0_123] : memref<8x128xf32, #tpu.memory_space<vmem>>, vector<1x128xf32>
    tpu.vector_store %arg12[%c6_122, %c0_123], %401 {strides = array<i32>} : memref<8x128xf32, #tpu.memory_space<vmem>>, vector<1x128xf32>,
    %403 = vector.extract_strided_slice %12 {offsets = [7, 0], sizes = [1, 128], strides = [1, 1]} : vector<16x128xf32> to vector<1x128xf32>
    %c0_124 = arith.constant 0 : index
    %c15 = arith.constant 15 : index
    %404 = vector.load %arg13[%c0_124, %c15] : memref<128x16xf32, #tpu.memory_space<vmem>>, vector<128x1xf32>
    %c0_125 = arith.constant 0 : index
    %c15_126 = arith.constant 15 : index
    %405 = vector.load %arg14[%c0_125, %c15_126] : memref<128x16xf32, #tpu.memory_space<vmem>>, vector<128x1xf32>
    %406 = vector.extract_strided_slice %20 {offsets = [0, 15], sizes = [1, 1], strides = [1, 1]} : vector<1x16xf32> to vector<1x1xf32>
    %407 = vector.extract_strided_slice %22 {offsets = [0, 15], sizes = [1, 1], strides = [1, 1]} : vector<1x16xf32> to vector<1x1xf32>
    %cst_127 = arith.constant 0.000000e+00 : f32
    %408 = vector.broadcast %cst_127 : f32 to vector<1x128xf32>
    %409 = arith.cmpf oge, %403, %408 : vector<1x128xf32>
    %410 = vector.broadcast %406 : vector<1x1xf32> to vector<1x128xf32>
    %411 = arith.mulf %403, %410 : vector<1x128xf32>
    %412 = vector.broadcast %407 : vector<1x1xf32> to vector<1x128xf32>
    %413 = arith.mulf %403, %412 : vector<1x128xf32>
    %414 = arith.select %409, %411, %413 : vector<1x128xi1>, vector<1x128xf32>
    %415 = vector.broadcast %404 : vector<128x1xf32> to vector<128x128xf32>
    %416 = vector.broadcast %403 : vector<1x128xf32> to vector<128x128xf32>
    %417 = arith.mulf %415, %416 : vector<128x128xf32>
    %418 = vector.broadcast %414 : vector<1x128xf32> to vector<128x128xf32>
    %419 = arith.subf %417, %418 : vector<128x128xf32>
    %420 = math.exp %419 : vector<128x128xf32>
    %cst_128 = arith.constant dense<0.000000e+00> : vector<128xf32>
    %421 = vector.multi_reduction <add>, %420, %cst_128 [0] : vector<128x128xf32> to vector<128xf32>
    %422 = vector.shape_cast %421 : vector<128xf32> to vector<1x128xf32>
    %423 = vector.broadcast %405 : vector<128x1xf32> to vector<128x128xf32>
    %424 = arith.mulf %420, %423 : vector<128x128xf32>
    %cst_129 = arith.constant dense<0.000000e+00> : vector<128xf32>
    %425 = vector.multi_reduction <add>, %424, %cst_129 [0] : vector<128x128xf32> to vector<128xf32>
    %426 = vector.shape_cast %425 : vector<128xf32> to vector<1x128xf32>
    %427 = tpu.reciprocal %422 {approx = true} : vector<1x128xf32> -> vector<1x128xf32>
    %428 = arith.mulf %426, %427 : vector<1x128xf32>
    %429 = vector.extract_strided_slice %12 {offsets = [15, 0], sizes = [1, 128], strides = [1, 1]} : vector<16x128xf32> to vector<1x128xf32>
    %c0_130 = arith.constant 0 : index
    %c7 = arith.constant 7 : index
    %430 = vector.load %arg13[%c0_130, %c7] : memref<128x16xf32, #tpu.memory_space<vmem>>, vector<128x1xf32>
    %c0_131 = arith.constant 0 : index
    %c7_132 = arith.constant 7 : index
    %431 = vector.load %arg14[%c0_131, %c7_132] : memref<128x16xf32, #tpu.memory_space<vmem>>, vector<128x1xf32>
    %432 = vector.extract_strided_slice %20 {offsets = [0, 7], sizes = [1, 1], strides = [1, 1]} : vector<1x16xf32> to vector<1x1xf32>
    %433 = vector.extract_strided_slice %22 {offsets = [0, 7], sizes = [1, 1], strides = [1, 1]} : vector<1x16xf32> to vector<1x1xf32>
    %cst_133 = arith.constant 0.000000e+00 : f32
    %434 = vector.broadcast %cst_133 : f32 to vector<1x128xf32>
    %435 = arith.cmpf oge, %429, %434 : vector<1x128xf32>
    %436 = vector.broadcast %432 : vector<1x1xf32> to vector<1x128xf32>
    %437 = arith.mulf %429, %436 : vector<1x128xf32>
    %438 = vector.broadcast %433 : vector<1x1xf32> to vector<1x128xf32>
    %439 = arith.mulf %429, %438 : vector<1x128xf32>
    %440 = arith.select %435, %437, %439 : vector<1x128xi1>, vector<1x128xf32>
    %441 = vector.broadcast %430 : vector<128x1xf32> to vector<128x128xf32>
    %442 = vector.broadcast %429 : vector<1x128xf32> to vector<128x128xf32>
    %443 = arith.mulf %441, %442 : vector<128x128xf32>
    %444 = vector.broadcast %440 : vector<1x128xf32> to vector<128x128xf32>
    %445 = arith.subf %443, %444 : vector<128x128xf32>
    %446 = math.exp %445 : vector<128x128xf32>
    %cst_134 = arith.constant dense<0.000000e+00> : vector<128xf32>
    %447 = vector.multi_reduction <add>, %446, %cst_134 [0] : vector<128x128xf32> to vector<128xf32>
    %448 = vector.shape_cast %447 : vector<128xf32> to vector<1x128xf32>
    %449 = vector.broadcast %431 : vector<128x1xf32> to vector<128x128xf32>
    %450 = arith.mulf %446, %449 : vector<128x128xf32>
    %cst_135 = arith.constant dense<0.000000e+00> : vector<128xf32>
    %451 = vector.multi_reduction <add>, %450, %cst_135 [0] : vector<128x128xf32> to vector<128xf32>
    %452 = vector.shape_cast %451 : vector<128xf32> to vector<1x128xf32>
    %453 = tpu.reciprocal %448 {approx = true} : vector<1x128xf32> -> vector<1x128xf32>
    %454 = arith.mulf %452, %453 : vector<1x128xf32>
    %455 = arith.mulf %428, %454 : vector<1x128xf32>
    %c7_136 = arith.constant 7 : index
    %c0_137 = arith.constant 0 : index
    %456 = vector.load %arg12[%c7_136, %c0_137] : memref<8x128xf32, #tpu.memory_space<vmem>>, vector<1x128xf32>
    tpu.vector_store %arg12[%c7_136, %c0_137], %455 {strides = array<i32>} : memref<8x128xf32, #tpu.memory_space<vmem>>, vector<1x128xf32>,
    %c0_138 = arith.constant 0 : index
    %c0_139 = arith.constant 0 : index
    %457 = vector.load %arg12[%c0_138, %c0_139] : memref<8x128xf32, #tpu.memory_space<vmem>>, vector<8x128xf32>
    %cst_140 = arith.constant 7.812500e-03 : f32
    %458 = vector.broadcast %cst_140 : f32 to vector<8x128xf32>
    %459 = arith.mulf %457, %458 : vector<8x128xf32>
    %cst_141 = arith.constant dense<0.000000e+00> : vector<8xf32>
    %460 = vector.multi_reduction <add>, %459, %cst_141 [1] : vector<8x128xf32> to vector<8xf32>
    %461 = vector.shape_cast %460 : vector<8xf32> to vector<8x1xf32>
    %cst_142 = arith.constant 1.280000e+02 : f32
    %462 = vector.broadcast %cst_142 : f32 to vector<8x1xf32>
    %463 = arith.divf %461, %462 : vector<8x1xf32>
    %464 = vector.broadcast %463 : vector<8x1xf32> to vector<8x128xf32>
    %465 = arith.subf %459, %464 : vector<8x128xf32>
    %466 = arith.mulf %465, %465 : vector<8x128xf32>
    %cst_143 = arith.constant dense<0.000000e+00> : vector<8xf32>
    %467 = vector.multi_reduction <add>, %466, %cst_143 [1] : vector<8x128xf32> to vector<8xf32>
    %468 = vector.shape_cast %467 : vector<8xf32> to vector<8x1xf32>
    %cst_144 = arith.constant 1.280000e+02 : f32
    %469 = vector.broadcast %cst_144 : f32 to vector<8x1xf32>
    %470 = arith.divf %468, %469 : vector<8x1xf32>
    %cst_145 = arith.constant 9.99999974E-6 : f32
    %471 = vector.broadcast %cst_145 : f32 to vector<8x1xf32>
    %472 = arith.addf %470, %471 : vector<8x1xf32>
    %473 = math.rsqrt %472 : vector<8x1xf32>
    %474 = vector.broadcast %473 : vector<8x1xf32> to vector<8x128xf32>
    %475 = arith.mulf %465, %474 : vector<8x128xf32>
    %c0_146 = arith.constant 0 : index
    %c0_147 = arith.constant 0 : index
    %476 = vector.load %arg9[%c0_146, %c0_147] : memref<1x128xf32, #tpu.memory_space<vmem>>, vector<1x128xf32>
    %477 = vector.broadcast %476 : vector<1x128xf32> to vector<8x128xf32>
    %478 = arith.mulf %475, %477 : vector<8x128xf32>
    %c0_148 = arith.constant 0 : index
    %c0_149 = arith.constant 0 : index
    %479 = vector.load %arg10[%c0_148, %c0_149] : memref<1x128xf32, #tpu.memory_space<vmem>>, vector<1x128xf32>
    %480 = vector.broadcast %479 : vector<1x128xf32> to vector<8x128xf32>
    %481 = arith.addf %478, %480 : vector<8x128xf32>
    %c0_150 = arith.constant 0 : index
    %c0_151 = arith.constant 0 : index
    %482 = vector.load %arg11[%c0_150, %c0_151] : memref<8x128xf32, #tpu.memory_space<vmem>>, vector<8x128xf32>
    tpu.vector_store %arg11[%c0_150, %c0_151], %481 {strides = array<i32>} : memref<8x128xf32, #tpu.memory_space<vmem>>, vector<8x128xf32>,
    return
  }
  func.func @transform_0(%arg0: i32) -> (i32, i32, i32) {
    %c0_i32 = arith.constant 0 : i32
    %c0_i32_0 = arith.constant 0 : i32
    %c0_i32_1 = arith.constant 0 : i32
    return %arg0, %c0_i32, %c0_i32_0 : i32, i32, i32
  }
  func.func @transform_1(%arg0: i32) -> (i32, i32, i32) {
    %c0_i32 = arith.constant 0 : i32
    %c0_i32_0 = arith.constant 0 : i32
    %c0_i32_1 = arith.constant 0 : i32
    return %arg0, %c0_i32, %c0_i32_0 : i32, i32, i32
  }
  func.func @transform_2(%arg0: i32) -> (i32, i32) {
    %c0_i32 = arith.constant 0 : i32
    %c0_i32_0 = arith.constant 0 : i32
    %c0_i32_1 = arith.constant 0 : i32
    return %c0_i32, %c0_i32_0 : i32, i32
  }
  func.func @transform_3(%arg0: i32) -> (i32, i32) {
    %c0_i32 = arith.constant 0 : i32
    %c0_i32_0 = arith.constant 0 : i32
    %c0_i32_1 = arith.constant 0 : i32
    return %c0_i32, %c0_i32_0 : i32, i32
  }
  func.func @transform_4(%arg0: i32) -> (i32, i32) {
    %c0_i32 = arith.constant 0 : i32
    %c0_i32_0 = arith.constant 0 : i32
    %c0_i32_1 = arith.constant 0 : i32
    return %c0_i32, %c0_i32_0 : i32, i32
  }
  func.func @transform_5(%arg0: i32) -> (i32, i32) {
    %c0_i32 = arith.constant 0 : i32
    %c0_i32_0 = arith.constant 0 : i32
    %c0_i32_1 = arith.constant 0 : i32
    return %c0_i32, %c0_i32_0 : i32, i32
  }
  func.func @transform_6(%arg0: i32) -> (i32, i32) {
    %c0_i32 = arith.constant 0 : i32
    %c0_i32_0 = arith.constant 0 : i32
    %c0_i32_1 = arith.constant 0 : i32
    return %c0_i32, %c0_i32_0 : i32, i32
  }
  func.func @transform_7(%arg0: i32) -> (i32, i32) {
    %c0_i32 = arith.constant 0 : i32
    %c0_i32_0 = arith.constant 0 : i32
    %c0_i32_1 = arith.constant 0 : i32
    return %c0_i32, %c0_i32_0 : i32, i32
  }
  func.func @transform_8(%arg0: i32) -> (i32, i32) {
    %c0_i32 = arith.constant 0 : i32
    %c0_i32_0 = arith.constant 0 : i32
    %c0_i32_1 = arith.constant 0 : i32
    return %c0_i32, %c0_i32_0 : i32, i32
  }
  func.func @transform_9(%arg0: i32) -> (i32, i32) {
    %c0_i32 = arith.constant 0 : i32
    %c0_i32_0 = arith.constant 0 : i32
    %c0_i32_1 = arith.constant 0 : i32
    return %c0_i32, %c0_i32_0 : i32, i32
  }
  func.func @transform_10(%arg0: i32) -> (i32, i32) {
    %c0_i32 = arith.constant 0 : i32
    %c0_i32_0 = arith.constant 0 : i32
    return %arg0, %c0_i32 : i32, i32
  }
}

</mosaic_0001>

<llo_original>
// kernel: tpu_custom_call.1
$region0: #{tpu_custom_call.1}
  #allocation0 [shape = 'u32[]', space=smem, size = 0x4, offset = 0x4, fixed_abs, tag = 'smem constant byte address 0x4 - core index']
  #allocation1 [shape = 'u32[144,128]{1,0:T(1,128)}', space=vmem, size = 0x12000, scoped, tag = 'internal scratch']
  #allocation2 [shape = 'f32[8,128]{1,0:T(8,128)}', space=vmem, size = 0x1000, scoped, tag = 'scratch operand']
  #allocation3 [shape = 'f32[128,16]{1,0:T(8,128)}', space=vmem, size = 0x10000, scoped, tag = 'scratch operand']
  #allocation4 [shape = 'f32[128,16]{1,0:T(8,128)}', space=vmem, size = 0x10000, scoped, tag = 'scratch operand']
  %s0 = inlined_call_operand.vmem [shape: f32[2,16,128], index: 0, kind: input, shape index: {}]
  %s1 = inlined_call_operand.vmem [shape: f32[2,128,16], index: 1, kind: input, shape index: {}]
  %s2 = inlined_call_operand.vmem [shape: f32[128,128], index: 2, kind: input, shape index: {}]
  %s3 = inlined_call_operand.vmem [shape: f32[128,128], index: 3, kind: input, shape index: {}]
  %s4 = inlined_call_operand.vmem [shape: f32[128,128], index: 4, kind: input, shape index: {}]
  %s5 = inlined_call_operand.vmem [shape: f32[1,128], index: 5, kind: input, shape index: {}]
  %s6 = inlined_call_operand.vmem [shape: f32[128,1], index: 6, kind: input, shape index: {}]
  %s7 = inlined_call_operand.vmem [shape: f32[128,1], index: 7, kind: input, shape index: {}]
  %s8 = inlined_call_operand.vmem [shape: f32[1,128], index: 8, kind: input, shape index: {}]
  %s9 = inlined_call_operand.vmem [shape: f32[1,128], index: 9, kind: input, shape index: {}]
  %s10 = inlined_call_operand.hbm [shape: f32[16,128], index: 10, kind: output, shape index: {}]
  %s11 = sld [smem:[#allocation0]]
  $region73: #{tpu_custom_call.1} parent=0
    _
  %s13 = ssub.s32 1, %s11
  %s14 = scalar_select 0, %s13, %s11
  $region1: #{tpu_custom_call.1} parent=0
    #allocation5 [shape = 'u8[8192]{0}', space=vmem, size = 0x2000, scoped, tag = 'output window, operand 0']
    #allocation6 [shape = 's32[2]{0}', space=sflag, size = 0x8, scoped, tag = 'scoped memory for tpu_custom_call.1']
    %15 = vsyncpa [#allocation6], 0
    %s16 = scalar_lea.sflag [#allocation6], 1
    %17 = vsyncpa %s16, 0
    loop: start=0, step=1, limit=4
    $region2: #{tpu_custom_call.1} parent=1 // loop_pre_header
      _
    $region3: #{tpu_custom_call.1} parent=1 // loop_header
      %s19 = sphi 0, %s23
      %p20 = scmp.ge.s32.totalorder %s19, 4
      %s29 = sphi 0, %s31
      %s32 = sphi 0, %s29
      %s33 = sphi 0, %s32
      %s49 = sphi 0, %s33
      %s55 = sphi 0, %s57
      %s58 = sphi 0, %s55
      %s59 = sphi 0, %s58
      %s75 = sphi 0, %s59
      %s79 = sphi 0, %s79
      %s81 = sphi 0, %s79
      %s82 = sphi 0, %s81
      %s96 = sphi 0, %s82
      %s100 = sphi 0, %s100
      %s102 = sphi 0, %s100
      %s103 = sphi 0, %s102
      %s117 = sphi 0, %s103
      %s121 = sphi 0, %s121
      %s123 = sphi 0, %s121
      %s124 = sphi 0, %s123
      %s138 = sphi 0, %s124
      %s142 = sphi 0, %s142
      %s144 = sphi 0, %s142
      %s145 = sphi 0, %s144
      %s159 = sphi 0, %s145
      %s163 = sphi 0, %s163
      %s165 = sphi 0, %s163
      %s166 = sphi 0, %s165
      %s180 = sphi 0, %s166
      %s184 = sphi 0, %s184
      %s186 = sphi 0, %s184
      %s187 = sphi 0, %s186
      %s201 = sphi 0, %s187
      %s205 = sphi 0, %s205
      %s207 = sphi 0, %s205
      %s208 = sphi 0, %s207
      %s222 = sphi 0, %s208
      %s226 = sphi 0, %s226
      %s228 = sphi 0, %s226
      %s229 = sphi 0, %s228
      %s243 = sphi 0, %s229
      %s249 = sphi 0, %s251
      %s252 = sphi 0, %s249
      %s253 = sphi 0, %s252
      %s269 = sphi 0, %s253
    $region4: #{tpu_custom_call.1} parent=1 // loop_header_branch
      %22 = sbr.rel (%p20) target = $region8
    $region5: #{tpu_custom_call.1} parent=1 // loop_body
      %s24 = ssub.s32 %s19, 1
      %s25 = ssub.s32 %s19, 2
      %s26 = sadd.s32 %s19, 1
      %s27 = ssub.s32 %s19, %s26
      %p28 = scmp.eq.s32.totalorder %s27, 0
      %s30 = sadd.s32 %s29, 1
      %s31 = scalar_select %p28, %s29, %s30
      %p34 = pneg %p28
      %p35 = scmp.eq.s32.totalorder %s19, 1
      %p36 = por %p34, %p35
      %p37 = scmp.ne.s32.totalorder %s29, %s32
      %p38 = scmp.eq.s32.totalorder %s19, 0
      %p39 = por %p37, %p38
      %p40 = scmp.ne.s32.totalorder %s29, %s32
      %p41 = scmp.eq.s32.totalorder %s24, 1
      %p42 = por %p40, %p41
      %p43 = scmp.ne.s32.totalorder %s32, %s33
      %p44 = scmp.eq.s32.totalorder %s24, 0
      %p45 = por %p43, %p44
      %p46 = scmp.ne.s32.totalorder %s32, %s33
      %p47 = scmp.eq.s32.totalorder %s25, 1
      %p48 = por %p46, %p47
      %p50 = scmp.ne.s32.totalorder %s33, %s49
      %p51 = scmp.eq.s32.totalorder %s25, 0
      %p52 = por %p50, %p51
      %s53 = ssub.s32 %s19, %s26
      %p54 = scmp.eq.s32.totalorder %s53, 0
      %s56 = sadd.s32 %s55, 1
      %s57 = scalar_select %p54, %s55, %s56
      %p60 = pneg %p54
      %p61 = scmp.eq.s32.totalorder %s19, 1
      %p62 = por %p60, %p61
      %p63 = scmp.ne.s32.totalorder %s55, %s58
      %p64 = scmp.eq.s32.totalorder %s19, 0
      %p65 = por %p63, %p64
      %p66 = scmp.ne.s32.totalorder %s55, %s58
      %p67 = scmp.eq.s32.totalorder %s24, 1
      %p68 = por %p66, %p67
      %p69 = scmp.ne.s32.totalorder %s58, %s59
      %p70 = scmp.eq.s32.totalorder %s24, 0
      %p71 = por %p69, %p70
      %p72 = scmp.ne.s32.totalorder %s58, %s59
      %p73 = scmp.eq.s32.totalorder %s25, 1
      %p74 = por %p72, %p73
      %p76 = scmp.ne.s32.totalorder %s59, %s75
      %p77 = scmp.eq.s32.totalorder %s25, 0
      %p78 = por %p76, %p77
      %s80 = sadd.s32 %s79, 1
      %p83 = scmp.eq.s32.totalorder %s19, 1
      %p84 = scmp.ne.s32.totalorder %s79, %s81
      %p85 = scmp.eq.s32.totalorder %s19, 0
      %p86 = por %p84, %p85
      %p87 = scmp.ne.s32.totalorder %s79, %s81
      %p88 = scmp.eq.s32.totalorder %s24, 1
      %p89 = por %p87, %p88
      %p90 = scmp.ne.s32.totalorder %s81, %s82
      %p91 = scmp.eq.s32.totalorder %s24, 0
      %p92 = por %p90, %p91
      %p93 = scmp.ne.s32.totalorder %s81, %s82
      %p94 = scmp.eq.s32.totalorder %s25, 1
      %p95 = por %p93, %p94
      %p97 = scmp.ne.s32.totalorder %s82, %s96
      %p98 = scmp.eq.s32.totalorder %s25, 0
      %p99 = por %p97, %p98
      %s101 = sadd.s32 %s100, 1
      %p104 = scmp.eq.s32.totalorder %s19, 1
      %p105 = scmp.ne.s32.totalorder %s100, %s102
      %p106 = scmp.eq.s32.totalorder %s19, 0
      %p107 = por %p105, %p106
      %p108 = scmp.ne.s32.totalorder %s100, %s102
      %p109 = scmp.eq.s32.totalorder %s24, 1
      %p110 = por %p108, %p109
      %p111 = scmp.ne.s32.totalorder %s102, %s103
      %p112 = scmp.eq.s32.totalorder %s24, 0
      %p113 = por %p111, %p112
      %p114 = scmp.ne.s32.totalorder %s102, %s103
      %p115 = scmp.eq.s32.totalorder %s25, 1
      %p116 = por %p114, %p115
      %p118 = scmp.ne.s32.totalorder %s103, %s117
      %p119 = scmp.eq.s32.totalorder %s25, 0
      %p120 = por %p118, %p119
      %s122 = sadd.s32 %s121, 1
      %p125 = scmp.eq.s32.totalorder %s19, 1
      %p126 = scmp.ne.s32.totalorder %s121, %s123
      %p127 = scmp.eq.s32.totalorder %s19, 0
      %p128 = por %p126, %p127
      %p129 = scmp.ne.s32.totalorder %s121, %s123
      %p130 = scmp.eq.s32.totalorder %s24, 1
      %p131 = por %p129, %p130
      %p132 = scmp.ne.s32.totalorder %s123, %s124
      %p133 = scmp.eq.s32.totalorder %s24, 0
      %p134 = por %p132, %p133
      %p135 = scmp.ne.s32.totalorder %s123, %s124
      %p136 = scmp.eq.s32.totalorder %s25, 1
      %p137 = por %p135, %p136
      %p139 = scmp.ne.s32.totalorder %s124, %s138
      %p140 = scmp.eq.s32.totalorder %s25, 0
      %p141 = por %p139, %p140
      %s143 = sadd.s32 %s142, 1
      %p146 = scmp.eq.s32.totalorder %s19, 1
      %p147 = scmp.ne.s32.totalorder %s142, %s144
      %p148 = scmp.eq.s32.totalorder %s19, 0
      %p149 = por %p147, %p148
      %p150 = scmp.ne.s32.totalorder %s142, %s144
      %p151 = scmp.eq.s32.totalorder %s24, 1
      %p152 = por %p150, %p151
      %p153 = scmp.ne.s32.totalorder %s144, %s145
      %p154 = scmp.eq.s32.totalorder %s24, 0
      %p155 = por %p153, %p154
      %p156 = scmp.ne.s32.totalorder %s144, %s145
      %p157 = scmp.eq.s32.totalorder %s25, 1
      %p158 = por %p156, %p157
      %p160 = scmp.ne.s32.totalorder %s145, %s159
      %p161 = scmp.eq.s32.totalorder %s25, 0
      %p162 = por %p160, %p161
      %s164 = sadd.s32 %s163, 1
      %p167 = scmp.eq.s32.totalorder %s19, 1
      %p168 = scmp.ne.s32.totalorder %s163, %s165
      %p169 = scmp.eq.s32.totalorder %s19, 0
      %p170 = por %p168, %p169
      %p171 = scmp.ne.s32.totalorder %s163, %s165
      %p172 = scmp.eq.s32.totalorder %s24, 1
      %p173 = por %p171, %p172
      %p174 = scmp.ne.s32.totalorder %s165, %s166
      %p175 = scmp.eq.s32.totalorder %s24, 0
      %p176 = por %p174, %p175
      %p177 = scmp.ne.s32.totalorder %s165, %s166
      %p178 = scmp.eq.s32.totalorder %s25, 1
      %p179 = por %p177, %p178
      %p181 = scmp.ne.s32.totalorder %s166, %s180
      %p182 = scmp.eq.s32.totalorder %s25, 0
      %p183 = por %p181, %p182
      %s185 = sadd.s32 %s184, 1
      %p188 = scmp.eq.s32.totalorder %s19, 1
      %p189 = scmp.ne.s32.totalorder %s184, %s186
      %p190 = scmp.eq.s32.totalorder %s19, 0
      %p191 = por %p189, %p190
      %p192 = scmp.ne.s32.totalorder %s184, %s186
      %p193 = scmp.eq.s32.totalorder %s24, 1
      %p194 = por %p192, %p193
      %p195 = scmp.ne.s32.totalorder %s186, %s187
      %p196 = scmp.eq.s32.totalorder %s24, 0
      %p197 = por %p195, %p196
      %p198 = scmp.ne.s32.totalorder %s186, %s187
      %p199 = scmp.eq.s32.totalorder %s25, 1
      %p200 = por %p198, %p199
      %p202 = scmp.ne.s32.totalorder %s187, %s201
      %p203 = scmp.eq.s32.totalorder %s25, 0
      %p204 = por %p202, %p203
      %s206 = sadd.s32 %s205, 1
      %p209 = scmp.eq.s32.totalorder %s19, 1
      %p210 = scmp.ne.s32.totalorder %s205, %s207
      %p211 = scmp.eq.s32.totalorder %s19, 0
      %p212 = por %p210, %p211
      %p213 = scmp.ne.s32.totalorder %s205, %s207
      %p214 = scmp.eq.s32.totalorder %s24, 1
      %p215 = por %p213, %p214
      %p216 = scmp.ne.s32.totalorder %s207, %s208
      %p217 = scmp.eq.s32.totalorder %s24, 0
      %p218 = por %p216, %p217
      %p219 = scmp.ne.s32.totalorder %s207, %s208
      %p220 = scmp.eq.s32.totalorder %s25, 1
      %p221 = por %p219, %p220
      %p223 = scmp.ne.s32.totalorder %s208, %s222
      %p224 = scmp.eq.s32.totalorder %s25, 0
      %p225 = por %p223, %p224
      %s227 = sadd.s32 %s226, 1
      %p230 = scmp.eq.s32.totalorder %s19, 1
      %p231 = scmp.ne.s32.totalorder %s226, %s228
      %p232 = scmp.eq.s32.totalorder %s19, 0
      %p233 = por %p231, %p232
      %p234 = scmp.ne.s32.totalorder %s226, %s228
      %p235 = scmp.eq.s32.totalorder %s24, 1
      %p236 = por %p234, %p235
      %p237 = scmp.ne.s32.totalorder %s228, %s229
      %p238 = scmp.eq.s32.totalorder %s24, 0
      %p239 = por %p237, %p238
      %p240 = scmp.ne.s32.totalorder %s228, %s229
      %p241 = scmp.eq.s32.totalorder %s25, 1
      %p242 = por %p240, %p241
      %p244 = scmp.ne.s32.totalorder %s229, %s243
      %p245 = scmp.eq.s32.totalorder %s25, 0
      %p246 = por %p244, %p245
      %s247 = ssub.s32 %s19, %s26
      %p248 = scmp.eq.s32.totalorder %s247, 0
      %s250 = sadd.s32 %s249, 1
      %s251 = scalar_select %p248, %s249, %s250
      %p254 = pneg %p248
      %p255 = scmp.eq.s32.totalorder %s19, 1
      %p256 = por %p254, %p255
      %p257 = scmp.ne.s32.totalorder %s249, %s252
      %p258 = scmp.eq.s32.totalorder %s19, 0
      %p259 = por %p257, %p258
      %p260 = scmp.ne.s32.totalorder %s249, %s252
      %p261 = scmp.eq.s32.totalorder %s24, 1
      %p262 = por %p260, %p261
      %p263 = scmp.ne.s32.totalorder %s252, %s253
      %p264 = scmp.eq.s32.totalorder %s24, 0
      %p265 = por %p263, %p264
      %p266 = scmp.ne.s32.totalorder %s252, %s253
      %p267 = scmp.eq.s32.totalorder %s25, 1
      %p268 = por %p266, %p267
      %p270 = scmp.ne.s32.totalorder %s253, %s269
      %p271 = scmp.eq.s32.totalorder %s25, 0
      %p272 = por %p270, %p271
      %p273 = scmp.le.s32.totalorder 1, %s19
      %p274 = scmp.lt.s32.totalorder %s19, 3
      %p275 = pnand %p273, %p274
      %p276 = pneg %p275
      // Predicated region
      $region9: #{tpu_custom_call.1} parent=5 // pred_check
        _
      $region10: #{tpu_custom_call.1} parent=5 // pred_check_branch
        %278 = sbr.rel (%p275) target = $region12
      $region11: #{tpu_custom_call.1} parent=5 // pred_region
        %s279 = ssub.s32 %s19, 1
        // Predicated region
        $region13: #{tpu_custom_call.1} parent=11 // pred_check
          %p280 = pneg %p92
        $region14: #{tpu_custom_call.1} parent=11 // pred_check_branch
          %282 = sbr.rel (%p280) target = $region16
        $region15: #{tpu_custom_call.1} parent=11 // pred_region
          _
        $region16: #{tpu_custom_call.1} parent=11 // pred_fallthru
          _
        // Predicated region
        $region17: #{tpu_custom_call.1} parent=11 // pred_check
          %p283 = pneg %p113
        $region18: #{tpu_custom_call.1} parent=11 // pred_check_branch
          %285 = sbr.rel (%p283) target = $region20
        $region19: #{tpu_custom_call.1} parent=11 // pred_region
          _
        $region20: #{tpu_custom_call.1} parent=11 // pred_fallthru
          _
        // Predicated region
        $region21: #{tpu_custom_call.1} parent=11 // pred_check
          %p286 = pneg %p134
        $region22: #{tpu_custom_call.1} parent=11 // pred_check_branch
          %288 = sbr.rel (%p286) target = $region24
        $region23: #{tpu_custom_call.1} parent=11 // pred_region
          _
        $region24: #{tpu_custom_call.1} parent=11 // pred_fallthru
          _
        // Predicated region
        $region25: #{tpu_custom_call.1} parent=11 // pred_check
          %p289 = pneg %p155
        $region26: #{tpu_custom_call.1} parent=11 // pred_check_branch
          %291 = sbr.rel (%p289) target = $region28
        $region27: #{tpu_custom_call.1} parent=11 // pred_region
          _
        $region28: #{tpu_custom_call.1} parent=11 // pred_fallthru
          _
        // Predicated region
        $region29: #{tpu_custom_call.1} parent=11 // pred_check
          %p292 = pneg %p176
        $region30: #{tpu_custom_call.1} parent=11 // pred_check_branch
          %294 = sbr.rel (%p292) target = $region32
        $region31: #{tpu_custom_call.1} parent=11 // pred_region
          _
        $region32: #{tpu_custom_call.1} parent=11 // pred_fallthru
          _
        // Predicated region
        $region33: #{tpu_custom_call.1} parent=11 // pred_check
          %p295 = pneg %p197
        $region34: #{tpu_custom_call.1} parent=11 // pred_check_branch
          %297 = sbr.rel (%p295) target = $region36
        $region35: #{tpu_custom_call.1} parent=11 // pred_region
          _
        $region36: #{tpu_custom_call.1} parent=11 // pred_fallthru
          _
        // Predicated region
        $region37: #{tpu_custom_call.1} parent=11 // pred_check
          %p298 = pneg %p218
        $region38: #{tpu_custom_call.1} parent=11 // pred_check_branch
          %300 = sbr.rel (%p298) target = $region40
        $region39: #{tpu_custom_call.1} parent=11 // pred_region
          _
        $region40: #{tpu_custom_call.1} parent=11 // pred_fallthru
          _
        // Predicated region
        $region41: #{tpu_custom_call.1} parent=11 // pred_check
          %p301 = pneg %p239
        $region42: #{tpu_custom_call.1} parent=11 // pred_check_branch
          %303 = sbr.rel (%p301) target = $region44
        $region43: #{tpu_custom_call.1} parent=11 // pred_region
          _
        $region44: #{tpu_custom_call.1} parent=11 // pred_fallthru
          _
      $region12: #{tpu_custom_call.1} parent=5 // pred_fallthru
        _
      %p304 = scmp.lt.s32.totalorder %s19, 2
      // Predicated region
      $region45: #{tpu_custom_call.1} parent=5 // pred_check
        %p305 = pneg %p304
      $region46: #{tpu_custom_call.1} parent=5 // pred_check_branch
        %307 = sbr.rel (%p305) target = $region48
      $region47: #{tpu_custom_call.1} parent=5 // pred_region
        // Predicated region
        $region49: #{tpu_custom_call.1} parent=47 // pred_check
          %p308 = pneg %p39
        $region50: #{tpu_custom_call.1} parent=47 // pred_check_branch
          %310 = sbr.rel (%p308) target = $region52
        $region51: #{tpu_custom_call.1} parent=47 // pred_region
          %p311 = scmp.lt.s32.totalorder %s19, 1
          %s312 = scalar_select %p311, %s19, 1
          %s313 = smul.addr %s312, 2
          %s314 = smul.addr %s313, 8
          %s315 = scalar_lea.vmem %s0, %s314
        $region52: #{tpu_custom_call.1} parent=47 // pred_fallthru
          _
        // Predicated region
        $region53: #{tpu_custom_call.1} parent=47 // pred_check
          %p316 = pneg %p65
        $region54: #{tpu_custom_call.1} parent=47 // pred_check_branch
          %318 = sbr.rel (%p316) target = $region56
        $region55: #{tpu_custom_call.1} parent=47 // pred_region
          %p319 = scmp.lt.s32.totalorder %s19, 1
          %s320 = scalar_select %p319, %s19, 1
          %s321 = smul.addr %s320, 16
          %s322 = smul.addr %s321, 8
          %s323 = scalar_lea.vmem %s1, %s322
        $region56: #{tpu_custom_call.1} parent=47 // pred_fallthru
          _
      $region48: #{tpu_custom_call.1} parent=5 // pred_fallthru
        _
      %p324 = scmp.le.s32.totalorder 1, %s19
      %p325 = scmp.lt.s32.totalorder %s19, 3
      %p326 = pnand %p324, %p325
      %p327 = pneg %p326
      // Predicated region
      $region57: #{tpu_custom_call.1} parent=5 // pred_check
        _
      $region58: #{tpu_custom_call.1} parent=5 // pred_check_branch
        %329 = sbr.rel (%p326) target = $region60
      $region59: #{tpu_custom_call.1} parent=5 // pred_region
        %s330 = ssub.s32 %s19, 1
        %p331 = scmp.lt.s32.totalorder %s24, 1
        %s332 = scalar_select %p331, %s24, 1
        %s333 = smul.addr %s332, 2
        %s334 = smul.addr %s333, 8
        %s335 = scalar_lea.vmem %s0, %s334
        %p336 = pneg %p45
        %p337 = pneg %p42
        %p338 = scmp.lt.s32.totalorder %s24, 1
        %s339 = scalar_select %p338, %s24, 1
        %s340 = smul.addr %s339, 16
        %s341 = smul.addr %s340, 8
        %s342 = scalar_lea.vmem %s1, %s341
        %p343 = pneg %p71
        %p344 = pneg %p68
        %p345 = pneg %p92
        %p346 = pneg %p89
        %p347 = pneg %p113
        %p348 = pneg %p110
        %p349 = pneg %p134
        %p350 = pneg %p131
        %p351 = pneg %p155
        %p352 = pneg %p152
        %p353 = pneg %p176
        %p354 = pneg %p173
        %p355 = pneg %p197
        %p356 = pneg %p194
        %p357 = pneg %p218
        %p358 = pneg %p215
        %p359 = pneg %p239
        %p360 = pneg %p236
        %p361 = pneg %p265
        %p362 = pneg %p262
        %s363 = sand.u32 %s252, 1
        %s364 = scalar_lea.sflag [#allocation6], %s363
        %s365 = sand.u32 %s252, 1
        %s366 = smul.addr %s365, 8
        %s367 = scalar_lea.vmem [#allocation5], %s366
        %p368 = scmp.lt.s32.totalorder %s24, 1
        %s369 = scalar_select %p368, %s24, 1
        %s370 = smul.addr %s369, 2
        %s371 = smul.addr %s370, 8
        %s372 = scalar_lea.vmem %s0, %s371
        %p373 = scmp.lt.s32.totalorder %s24, 1
        %s374 = scalar_select %p373, %s24, 1
        %s375 = smul.addr %s374, 16
        %s376 = smul.addr %s375, 8
        %s377 = scalar_lea.vmem %s1, %s376
        %v378 = vld [vmem:[%s372] sm:$0xff]
        %v379 = vld [vmem:[%s372 + $0x8] sm:$0xff]
        %v380 = vld [vmem:[%s377] sm:$0xff]
        %v381 = vld [vmem:[%s377 + $0x8] sm:$0xff]
        %v382 = vld [vmem:[%s377 + $0x10] sm:$0xff]
        %v383 = vld [vmem:[%s377 + $0x18] sm:$0xff]
        %v384 = vld [vmem:[%s377 + $0x20] sm:$0xff]
        %v385 = vld [vmem:[%s377 + $0x28] sm:$0xff]
        %v386 = vld [vmem:[%s377 + $0x30] sm:$0xff]
        %v387 = vld [vmem:[%s377 + $0x38] sm:$0xff]
        %v388 = vld [vmem:[%s377 + $0x40] sm:$0xff]
        %v389 = vld [vmem:[%s377 + $0x48] sm:$0xff]
        %v390 = vld [vmem:[%s377 + $0x50] sm:$0xff]
        %v391 = vld [vmem:[%s377 + $0x58] sm:$0xff]
        %v392 = vld [vmem:[%s377 + $0x60] sm:$0xff]
        %v393 = vld [vmem:[%s377 + $0x68] sm:$0xff]
        %v394 = vld [vmem:[%s377 + $0x70] sm:$0xff]
        %v395 = vld [vmem:[%s377 + $0x78] sm:$0xff]
        %v396 = vld [vmem:[%s2] sm:$0xff]
        %v397 = vld [vmem:[%s2 + $0x8] sm:$0xff]
        %v398 = vld [vmem:[%s2 + $0x10] sm:$0xff]
        %v399 = vld [vmem:[%s2 + $0x18] sm:$0xff]
        %v400 = vld [vmem:[%s2 + $0x20] sm:$0xff]
        %v401 = vld [vmem:[%s2 + $0x28] sm:$0xff]
        %v402 = vld [vmem:[%s2 + $0x30] sm:$0xff]
        %v403 = vld [vmem:[%s2 + $0x38] sm:$0xff]
        %v404 = vld [vmem:[%s2 + $0x40] sm:$0xff]
        %v405 = vld [vmem:[%s2 + $0x48] sm:$0xff]
        %v406 = vld [vmem:[%s2 + $0x50] sm:$0xff]
        %v407 = vld [vmem:[%s2 + $0x58] sm:$0xff]
        %v408 = vld [vmem:[%s2 + $0x60] sm:$0xff]
        %v409 = vld [vmem:[%s2 + $0x68] sm:$0xff]
        %v410 = vld [vmem:[%s2 + $0x70] sm:$0xff]
        %v411 = vld [vmem:[%s2 + $0x78] sm:$0xff]
        %v412 = vld [vmem:[%s3] sm:$0xff]
        %v413 = vld [vmem:[%s3 + $0x8] sm:$0xff]
        %v414 = vld [vmem:[%s3 + $0x10] sm:$0xff]
        %v415 = vld [vmem:[%s3 + $0x18] sm:$0xff]
        %v416 = vld [vmem:[%s3 + $0x20] sm:$0xff]
        %v417 = vld [vmem:[%s3 + $0x28] sm:$0xff]
        %v418 = vld [vmem:[%s3 + $0x30] sm:$0xff]
        %v419 = vld [vmem:[%s3 + $0x38] sm:$0xff]
        %v420 = vld [vmem:[%s3 + $0x40] sm:$0xff]
        %v421 = vld [vmem:[%s3 + $0x48] sm:$0xff]
        %v422 = vld [vmem:[%s3 + $0x50] sm:$0xff]
        %v423 = vld [vmem:[%s3 + $0x58] sm:$0xff]
        %v424 = vld [vmem:[%s3 + $0x60] sm:$0xff]
        %v425 = vld [vmem:[%s3 + $0x68] sm:$0xff]
        %v426 = vld [vmem:[%s3 + $0x70] sm:$0xff]
        %v427 = vld [vmem:[%s3 + $0x78] sm:$0xff]
        %v428 = vld [vmem:[%s4] sm:$0xff]
        %v429 = vld [vmem:[%s4 + $0x8] sm:$0xff]
        %v430 = vld [vmem:[%s4 + $0x10] sm:$0xff]
        %v431 = vld [vmem:[%s4 + $0x18] sm:$0xff]
        %v432 = vld [vmem:[%s4 + $0x20] sm:$0xff]
        %v433 = vld [vmem:[%s4 + $0x28] sm:$0xff]
        %v434 = vld [vmem:[%s4 + $0x30] sm:$0xff]
        %v435 = vld [vmem:[%s4 + $0x38] sm:$0xff]
        %v436 = vld [vmem:[%s4 + $0x40] sm:$0xff]
        %v437 = vld [vmem:[%s4 + $0x48] sm:$0xff]
        %v438 = vld [vmem:[%s4 + $0x50] sm:$0xff]
        %v439 = vld [vmem:[%s4 + $0x58] sm:$0xff]
        %v440 = vld [vmem:[%s4 + $0x60] sm:$0xff]
        %v441 = vld [vmem:[%s4 + $0x68] sm:$0xff]
        %v442 = vld [vmem:[%s4 + $0x70] sm:$0xff]
        %v443 = vld [vmem:[%s4 + $0x78] sm:$0xff]
        %v444 = vld [vmem:[%s5] sm:$0x1]
        %v445 = vld [vmem:[%s6] sm:$0xff]
        %v446 = vld [vmem:[%s6 + $0x8] sm:$0xff]
        %v447 = vld [vmem:[%s6 + $0x10] sm:$0xff]
        %v448 = vld [vmem:[%s6 + $0x18] sm:$0xff]
        %v449 = vld [vmem:[%s6 + $0x20] sm:$0xff]
        %v450 = vld [vmem:[%s6 + $0x28] sm:$0xff]
        %v451 = vld [vmem:[%s6 + $0x30] sm:$0xff]
        %v452 = vld [vmem:[%s6 + $0x38] sm:$0xff]
        %v453 = vld [vmem:[%s6 + $0x40] sm:$0xff]
        %v454 = vld [vmem:[%s6 + $0x48] sm:$0xff]
        %v455 = vld [vmem:[%s6 + $0x50] sm:$0xff]
        %v456 = vld [vmem:[%s6 + $0x58] sm:$0xff]
        %v457 = vld [vmem:[%s6 + $0x60] sm:$0xff]
        %v458 = vld [vmem:[%s6 + $0x68] sm:$0xff]
        %v459 = vld [vmem:[%s6 + $0x70] sm:$0xff]
        %v460 = vld [vmem:[%s6 + $0x78] sm:$0xff]
        %v461 = vld [vmem:[%s7] sm:$0xff]
        %v462 = vld [vmem:[%s7 + $0x8] sm:$0xff]
        %v463 = vld [vmem:[%s7 + $0x10] sm:$0xff]
        %v464 = vld [vmem:[%s7 + $0x18] sm:$0xff]
        %v465 = vld [vmem:[%s7 + $0x20] sm:$0xff]
        %v466 = vld [vmem:[%s7 + $0x28] sm:$0xff]
        %v467 = vld [vmem:[%s7 + $0x30] sm:$0xff]
        %v468 = vld [vmem:[%s7 + $0x38] sm:$0xff]
        %v469 = vld [vmem:[%s7 + $0x40] sm:$0xff]
        %v470 = vld [vmem:[%s7 + $0x48] sm:$0xff]
        %v471 = vld [vmem:[%s7 + $0x50] sm:$0xff]
        %v472 = vld [vmem:[%s7 + $0x58] sm:$0xff]
        %v473 = vld [vmem:[%s7 + $0x60] sm:$0xff]
        %v474 = vld [vmem:[%s7 + $0x68] sm:$0xff]
        %v475 = vld [vmem:[%s7 + $0x70] sm:$0xff]
        %v476 = vld [vmem:[%s7 + $0x78] sm:$0xff]
        %v478 = vlaneseq
        %v479 = vshrl.u32 %v478, 7
        %v480 = vsub.s32 0, %v479
        %v481 = vrot.slane %v444, %v480
        %483 = vmatprep.subr.mxu0 0.0
        %484 = vmatpush1.msra.mxu0 %v411
        %485 = vmatprep.subr.mxu0 0.0
        %486 = vmatpush1.msra.mxu0 %v410
        %487 = vmatprep.subr.mxu0 0.0
        %488 = vmatpush1.msra.mxu0 %v409
        %489 = vmatprep.subr.mxu0 0.0
        %490 = vmatpush1.msra.mxu0 %v408
        %491 = vmatprep.subr.mxu0 0.0
        %492 = vmatpush1.msra.mxu0 %v407
        %493 = vmatprep.subr.mxu0 0.0
        %494 = vmatpush1.msra.mxu0 %v406
        %495 = vmatprep.subr.mxu0 0.0
        %496 = vmatpush1.msra.mxu0 %v405
        %497 = vmatprep.subr.mxu0 0.0
        %498 = vmatpush1.msra.mxu0 %v404
        %499 = vmatprep.subr.mxu0 0.0
        %500 = vmatpush1.msra.mxu0 %v403
        %501 = vmatprep.subr.mxu0 0.0
        %502 = vmatpush1.msra.mxu0 %v402
        %503 = vmatprep.subr.mxu0 0.0
        %504 = vmatpush1.msra.mxu0 %v401
        %505 = vmatprep.subr.mxu0 0.0
        %506 = vmatpush1.msra.mxu0 %v400
        %507 = vmatprep.subr.mxu0 0.0
        %508 = vmatpush1.msra.mxu0 %v399
        %509 = vmatprep.subr.mxu0 0.0
        %510 = vmatpush1.msra.mxu0 %v398
        %511 = vmatprep.subr.mxu0 0.0
        %512 = vmatpush1.msra.mxu0 %v397
        %513 = vmatprep.subr.mxu0 0.0
        %514 = vmatpush1.msra.mxu0 %v396
        %515 = vmatprep.subr.mxu0 0.0
        %516 = vmatpush2.msra.mxu0 0.0
        %517 = vmatprep.subr.mxu0 0.0
        %518 = vmatpush2.msra.mxu0 0.0
        %519 = vmatprep.subr.mxu0 0.0
        %520 = vmatpush2.msra.mxu0 0.0
        %521 = vmatprep.subr.mxu0 0.0
        %522 = vmatpush2.msra.mxu0 0.0
        %523 = vmatprep.subr.mxu0 0.0
        %524 = vmatpush2.msra.mxu0 0.0
        %525 = vmatprep.subr.mxu0 0.0
        %526 = vmatpush2.msra.mxu0 0.0
        %527 = vmatprep.subr.mxu0 0.0
        %528 = vmatpush2.msra.mxu0 0.0
        %529 = vmatprep.subr.mxu0 0.0
        %530 = vmatpush2.msra.mxu0 0.0
        %531 = vmatprep.subr.mxu0 0.0
        %532 = vmatpush2.msra.mxu0 0.0
        %533 = vmatprep.subr.mxu0 0.0
        %534 = vmatpush2.msra.mxu0 0.0
        %535 = vmatprep.subr.mxu0 0.0
        %536 = vmatpush2.msra.mxu0 0.0
        %537 = vmatprep.subr.mxu0 0.0
        %538 = vmatpush2.msra.mxu0 0.0
        %539 = vmatprep.subr.mxu0 0.0
        %540 = vmatpush2.msra.mxu0 0.0
        %541 = vmatprep.subr.mxu0 0.0
        %542 = vmatpush2.msra.mxu0 0.0
        %543 = vmatprep.subr.mxu0 0.0
        %544 = vmatpush2.msra.mxu0 0.0
        %545 = vmatprep.subr.mxu0 0.0
        %546 = vmatpush2.msra.mxu0 0.0
        %547 = vmatprep.mubr.f32.mxu0 0.0
        %548 = vmatmul.mubr.f32.gmra.mxu0 %v378
        %v549 = vpop.f32.mrf.mxu0
        %v550 = vadd.f32 %v481, %v549
        %v551 = vpop.f32.mrf.mxu0
        %552 = vmatprep.mubr.f32.mxu0 0.0
        %553 = vmatmul.mubr.f32.gmra.mxu0 %v379
        %v554 = vpop.f32.mrf.mxu0
        %v555 = vadd.f32 %v481, %v554
        %v556 = vpop.f32.mrf.mxu0
        %557 = vdwg.mxu0
        %559 = vset.pattern.permute.xlu0 0
        %560 = vperm.xlu0 %559, %v445
        %v561 = vpop.permute.xlu0 %560
        %564 = vset.pattern.permute.xlu0 0
        %565 = vperm.xlu0 %564, %v446
        %v566 = vpop.permute.xlu0 %565
        %569 = vset.pattern.permute.xlu0 0
        %570 = vperm.xlu0 %569, %v447
        %v571 = vpop.permute.xlu0 %570
        %574 = vset.pattern.permute.xlu0 0
        %575 = vperm.xlu0 %574, %v448
        %v576 = vpop.permute.xlu0 %575
        %579 = vset.pattern.permute.xlu0 0
        %580 = vperm.xlu0 %579, %v449
        %v581 = vpop.permute.xlu0 %580
        %584 = vset.pattern.permute.xlu0 0
        %585 = vperm.xlu0 %584, %v450
        %v586 = vpop.permute.xlu0 %585
        %589 = vset.pattern.permute.xlu0 0
        %590 = vperm.xlu0 %589, %v451
        %v591 = vpop.permute.xlu0 %590
        %594 = vset.pattern.permute.xlu0 0
        %595 = vperm.xlu0 %594, %v452
        %v596 = vpop.permute.xlu0 %595
        %599 = vset.pattern.permute.xlu0 0
        %600 = vperm.xlu0 %599, %v453
        %v601 = vpop.permute.xlu0 %600
        %604 = vset.pattern.permute.xlu0 0
        %605 = vperm.xlu0 %604, %v454
        %v606 = vpop.permute.xlu0 %605
        %609 = vset.pattern.permute.xlu0 0
        %610 = vperm.xlu0 %609, %v455
        %v611 = vpop.permute.xlu0 %610
        %614 = vset.pattern.permute.xlu0 0
        %615 = vperm.xlu0 %614, %v456
        %v616 = vpop.permute.xlu0 %615
        %619 = vset.pattern.permute.xlu0 0
        %620 = vperm.xlu0 %619, %v457
        %v621 = vpop.permute.xlu0 %620
        %624 = vset.pattern.permute.xlu0 0
        %625 = vperm.xlu0 %624, %v458
        %v626 = vpop.permute.xlu0 %625
        %629 = vset.pattern.permute.xlu0 0
        %630 = vperm.xlu0 %629, %v459
        %v631 = vpop.permute.xlu0 %630
        %634 = vset.pattern.permute.xlu0 0
        %635 = vperm.xlu0 %634, %v460
        %v636 = vpop.permute.xlu0 %635
        %638 = vmatprep.subr.mxu0 0.0
        %639 = vmatpush1.msra.mxu0 %v395
        %640 = vmatprep.subr.mxu0 0.0
        %641 = vmatpush1.msra.mxu0 %v394
        %642 = vmatprep.subr.mxu0 0.0
        %643 = vmatpush1.msra.mxu0 %v393
        %644 = vmatprep.subr.mxu0 0.0
        %645 = vmatpush1.msra.mxu0 %v392
        %646 = vmatprep.subr.mxu0 0.0
        %647 = vmatpush1.msra.mxu0 %v391
        %648 = vmatprep.subr.mxu0 0.0
        %649 = vmatpush1.msra.mxu0 %v390
        %650 = vmatprep.subr.mxu0 0.0
        %651 = vmatpush1.msra.mxu0 %v389
        %652 = vmatprep.subr.mxu0 0.0
        %653 = vmatpush1.msra.mxu0 %v388
        %654 = vmatprep.subr.mxu0 0.0
        %655 = vmatpush1.msra.mxu0 %v387
        %656 = vmatprep.subr.mxu0 0.0
        %657 = vmatpush1.msra.mxu0 %v386
        %658 = vmatprep.subr.mxu0 0.0
        %659 = vmatpush1.msra.mxu0 %v385
        %660 = vmatprep.subr.mxu0 0.0
        %661 = vmatpush1.msra.mxu0 %v384
        %662 = vmatprep.subr.mxu0 0.0
        %663 = vmatpush1.msra.mxu0 %v383
        %664 = vmatprep.subr.mxu0 0.0
        %665 = vmatpush1.msra.mxu0 %v382
        %666 = vmatprep.subr.mxu0 0.0
        %667 = vmatpush1.msra.mxu0 %v381
        %668 = vmatprep.subr.mxu0 0.0
        %669 = vmatpush1.msra.mxu0 %v380
        %670 = vmatprep.subr.mxu0 0.0
        %671 = vmatpush2.msra.mxu0 0.0
        %672 = vmatprep.subr.mxu0 0.0
        %673 = vmatpush2.msra.mxu0 0.0
        %674 = vmatprep.subr.mxu0 0.0
        %675 = vmatpush2.msra.mxu0 0.0
        %676 = vmatprep.subr.mxu0 0.0
        %677 = vmatpush2.msra.mxu0 0.0
        %678 = vmatprep.subr.mxu0 0.0
        %679 = vmatpush2.msra.mxu0 0.0
        %680 = vmatprep.subr.mxu0 0.0
        %681 = vmatpush2.msra.mxu0 0.0
        %682 = vmatprep.subr.mxu0 0.0
        %683 = vmatpush2.msra.mxu0 0.0
        %684 = vmatprep.subr.mxu0 0.0
        %685 = vmatpush2.msra.mxu0 0.0
        %686 = vmatprep.subr.mxu0 0.0
        %687 = vmatpush2.msra.mxu0 0.0
        %688 = vmatprep.subr.mxu0 0.0
        %689 = vmatpush2.msra.mxu0 0.0
        %690 = vmatprep.subr.mxu0 0.0
        %691 = vmatpush2.msra.mxu0 0.0
        %692 = vmatprep.subr.mxu0 0.0
        %693 = vmatpush2.msra.mxu0 0.0
        %694 = vmatprep.subr.mxu0 0.0
        %695 = vmatpush2.msra.mxu0 0.0
        %696 = vmatprep.subr.mxu0 0.0
        %697 = vmatpush2.msra.mxu0 0.0
        %698 = vmatprep.subr.mxu0 0.0
        %699 = vmatpush2.msra.mxu0 0.0
        %700 = vmatprep.subr.mxu0 0.0
        %701 = vmatpush2.msra.mxu0 0.0
        %702 = vmatprep.mubr.f32.mxu0 0.0
        %703 = vmatmul.mubr.f32.gmra.mxu0 %v412
        %v704 = vpop.f32.mrf.mxu0
        %v705 = vadd.f32 %v561, %v704
        %v706 = vpop.f32.mrf.mxu0
        %707 = vmatprep.mubr.f32.mxu0 0.0
        %708 = vmatmul.mubr.f32.gmra.mxu0 %v413
        %v709 = vpop.f32.mrf.mxu0
        %v710 = vadd.f32 %v566, %v709
        %v711 = vpop.f32.mrf.mxu0
        %712 = vmatprep.mubr.f32.mxu0 0.0
        %713 = vmatmul.mubr.f32.gmra.mxu0 %v414
        %v714 = vpop.f32.mrf.mxu0
        %v715 = vadd.f32 %v571, %v714
        %v716 = vpop.f32.mrf.mxu0
        %717 = vmatprep.mubr.f32.mxu0 0.0
        %718 = vmatmul.mubr.f32.gmra.mxu0 %v415
        %v719 = vpop.f32.mrf.mxu0
        %v720 = vadd.f32 %v576, %v719
        %v721 = vpop.f32.mrf.mxu0
        %722 = vmatprep.mubr.f32.mxu0 0.0
        %723 = vmatmul.mubr.f32.gmra.mxu0 %v416
        %v724 = vpop.f32.mrf.mxu0
        %v725 = vadd.f32 %v581, %v724
        %v726 = vpop.f32.mrf.mxu0
        %727 = vmatprep.mubr.f32.mxu0 0.0
        %728 = vmatmul.mubr.f32.gmra.mxu0 %v417
        %v729 = vpop.f32.mrf.mxu0
        %v730 = vadd.f32 %v586, %v729
        %v731 = vpop.f32.mrf.mxu0
        %732 = vmatprep.mubr.f32.mxu0 0.0
        %733 = vmatmul.mubr.f32.gmra.mxu0 %v418
        %v734 = vpop.f32.mrf.mxu0
        %v735 = vadd.f32 %v591, %v734
        %v736 = vpop.f32.mrf.mxu0
        %737 = vmatprep.mubr.f32.mxu0 0.0
        %738 = vmatmul.mubr.f32.gmra.mxu0 %v419
        %v739 = vpop.f32.mrf.mxu0
        %v740 = vadd.f32 %v596, %v739
        %v741 = vpop.f32.mrf.mxu0
        %742 = vmatprep.mubr.f32.mxu0 0.0
        %743 = vmatmul.mubr.f32.gmra.mxu0 %v420
        %v744 = vpop.f32.mrf.mxu0
        %v745 = vadd.f32 %v601, %v744
        %v746 = vpop.f32.mrf.mxu0
        %747 = vmatprep.mubr.f32.mxu0 0.0
        %748 = vmatmul.mubr.f32.gmra.mxu0 %v421
        %v749 = vpop.f32.mrf.mxu0
        %v750 = vadd.f32 %v606, %v749
        %v751 = vpop.f32.mrf.mxu0
        %752 = vmatprep.mubr.f32.mxu0 0.0
        %753 = vmatmul.mubr.f32.gmra.mxu0 %v422
        %v754 = vpop.f32.mrf.mxu0
        %v755 = vadd.f32 %v611, %v754
        %v756 = vpop.f32.mrf.mxu0
        %757 = vmatprep.mubr.f32.mxu0 0.0
        %758 = vmatmul.mubr.f32.gmra.mxu0 %v423
        %v759 = vpop.f32.mrf.mxu0
        %v760 = vadd.f32 %v616, %v759
        %v761 = vpop.f32.mrf.mxu0
        %762 = vmatprep.mubr.f32.mxu0 0.0
        %763 = vmatmul.mubr.f32.gmra.mxu0 %v424
        %v764 = vpop.f32.mrf.mxu0
        %v765 = vadd.f32 %v621, %v764
        %v766 = vpop.f32.mrf.mxu0
        %767 = vmatprep.mubr.f32.mxu0 0.0
        %768 = vmatmul.mubr.f32.gmra.mxu0 %v425
        %v769 = vpop.f32.mrf.mxu0
        %v770 = vadd.f32 %v626, %v769
        %v771 = vpop.f32.mrf.mxu0
        %772 = vmatprep.mubr.f32.mxu0 0.0
        %773 = vmatmul.mubr.f32.gmra.mxu0 %v426
        %v774 = vpop.f32.mrf.mxu0
        %v775 = vadd.f32 %v631, %v774
        %v776 = vpop.f32.mrf.mxu0
        %777 = vmatprep.mubr.f32.mxu0 0.0
        %778 = vmatmul.mubr.f32.gmra.mxu0 %v427
        %v779 = vpop.f32.mrf.mxu0
        %v780 = vadd.f32 %v636, %v779
        %v781 = vpop.f32.mrf.mxu0
        %782 = vdwg.mxu0
        %784 = vset.pattern.permute.xlu0 0
        %785 = vperm.xlu0 %784, %v461
        %v786 = vpop.permute.xlu0 %785
        %789 = vset.pattern.permute.xlu0 0
        %790 = vperm.xlu0 %789, %v462
        %v791 = vpop.permute.xlu0 %790
        %794 = vset.pattern.permute.xlu0 0
        %795 = vperm.xlu0 %794, %v463
        %v796 = vpop.permute.xlu0 %795
        %799 = vset.pattern.permute.xlu0 0
        %800 = vperm.xlu0 %799, %v464
        %v801 = vpop.permute.xlu0 %800
        %804 = vset.pattern.permute.xlu0 0
        %805 = vperm.xlu0 %804, %v465
        %v806 = vpop.permute.xlu0 %805
        %809 = vset.pattern.permute.xlu0 0
        %810 = vperm.xlu0 %809, %v466
        %v811 = vpop.permute.xlu0 %810
        %814 = vset.pattern.permute.xlu0 0
        %815 = vperm.xlu0 %814, %v467
        %v816 = vpop.permute.xlu0 %815
        %819 = vset.pattern.permute.xlu0 0
        %820 = vperm.xlu0 %819, %v468
        %v821 = vpop.permute.xlu0 %820
        %824 = vset.pattern.permute.xlu0 0
        %825 = vperm.xlu0 %824, %v469
        %v826 = vpop.permute.xlu0 %825
        %829 = vset.pattern.permute.xlu0 0
        %830 = vperm.xlu0 %829, %v470
        %v831 = vpop.permute.xlu0 %830
        %834 = vset.pattern.permute.xlu0 0
        %835 = vperm.xlu0 %834, %v471
        %v836 = vpop.permute.xlu0 %835
        %839 = vset.pattern.permute.xlu0 0
        %840 = vperm.xlu0 %839, %v472
        %v841 = vpop.permute.xlu0 %840
        %844 = vset.pattern.permute.xlu0 0
        %845 = vperm.xlu0 %844, %v473
        %v846 = vpop.permute.xlu0 %845
        %849 = vset.pattern.permute.xlu0 0
        %850 = vperm.xlu0 %849, %v474
        %v851 = vpop.permute.xlu0 %850
        %854 = vset.pattern.permute.xlu0 0
        %855 = vperm.xlu0 %854, %v475
        %v856 = vpop.permute.xlu0 %855
        %859 = vset.pattern.permute.xlu0 0
        %860 = vperm.xlu0 %859, %v476
        %v861 = vpop.permute.xlu0 %860
        %863 = vmatprep.subr.mxu0 0.0
        %864 = vmatpush1.msra.mxu0 %v395
        %865 = vmatprep.subr.mxu0 0.0
        %866 = vmatpush1.msra.mxu0 %v394
        %867 = vmatprep.subr.mxu0 0.0
        %868 = vmatpush1.msra.mxu0 %v393
        %869 = vmatprep.subr.mxu0 0.0
        %870 = vmatpush1.msra.mxu0 %v392
        %871 = vmatprep.subr.mxu0 0.0
        %872 = vmatpush1.msra.mxu0 %v391
        %873 = vmatprep.subr.mxu0 0.0
        %874 = vmatpush1.msra.mxu0 %v390
        %875 = vmatprep.subr.mxu0 0.0
        %876 = vmatpush1.msra.mxu0 %v389
        %877 = vmatprep.subr.mxu0 0.0
        %878 = vmatpush1.msra.mxu0 %v388
        %879 = vmatprep.subr.mxu0 0.0
        %880 = vmatpush1.msra.mxu0 %v387
        %881 = vmatprep.subr.mxu0 0.0
        %882 = vmatpush1.msra.mxu0 %v386
        %883 = vmatprep.subr.mxu0 0.0
        %884 = vmatpush1.msra.mxu0 %v385
        %885 = vmatprep.subr.mxu0 0.0
        %886 = vmatpush1.msra.mxu0 %v384
        %887 = vmatprep.subr.mxu0 0.0
        %888 = vmatpush1.msra.mxu0 %v383
        %889 = vmatprep.subr.mxu0 0.0
        %890 = vmatpush1.msra.mxu0 %v382
        %891 = vmatprep.subr.mxu0 0.0
        %892 = vmatpush1.msra.mxu0 %v381
        %893 = vmatprep.subr.mxu0 0.0
        %894 = vmatpush1.msra.mxu0 %v380
        %895 = vmatprep.subr.mxu0 0.0
        %896 = vmatpush2.msra.mxu0 0.0
        %897 = vmatprep.subr.mxu0 0.0
        %898 = vmatpush2.msra.mxu0 0.0
        %899 = vmatprep.subr.mxu0 0.0
        %900 = vmatpush2.msra.mxu0 0.0
        %901 = vmatprep.subr.mxu0 0.0
        %902 = vmatpush2.msra.mxu0 0.0
        %903 = vmatprep.subr.mxu0 0.0
        %904 = vmatpush2.msra.mxu0 0.0
        %905 = vmatprep.subr.mxu0 0.0
        %906 = vmatpush2.msra.mxu0 0.0
        %907 = vmatprep.subr.mxu0 0.0
        %908 = vmatpush2.msra.mxu0 0.0
        %909 = vmatprep.subr.mxu0 0.0
        %910 = vmatpush2.msra.mxu0 0.0
        %911 = vmatprep.subr.mxu0 0.0
        %912 = vmatpush2.msra.mxu0 0.0
        %913 = vmatprep.subr.mxu0 0.0
        %914 = vmatpush2.msra.mxu0 0.0
        %915 = vmatprep.subr.mxu0 0.0
        %916 = vmatpush2.msra.mxu0 0.0
        %917 = vmatprep.subr.mxu0 0.0
        %918 = vmatpush2.msra.mxu0 0.0
        %919 = vmatprep.subr.mxu0 0.0
        %920 = vmatpush2.msra.mxu0 0.0
        %921 = vmatprep.subr.mxu0 0.0
        %922 = vmatpush2.msra.mxu0 0.0
        %923 = vmatprep.subr.mxu0 0.0
        %924 = vmatpush2.msra.mxu0 0.0
        %925 = vmatprep.subr.mxu0 0.0
        %926 = vmatpush2.msra.mxu0 0.0
        %927 = vmatprep.mubr.f32.mxu0 0.0
        %928 = vmatmul.mubr.f32.gmra.mxu0 %v428
        %v929 = vpop.f32.mrf.mxu0
        %v930 = vadd.f32 %v786, %v929
        %v931 = vpop.f32.mrf.mxu0
        %932 = vmatprep.mubr.f32.mxu0 0.0
        %933 = vmatmul.mubr.f32.gmra.mxu0 %v429
        %v934 = vpop.f32.mrf.mxu0
        %v935 = vadd.f32 %v791, %v934
        %v936 = vpop.f32.mrf.mxu0
        %937 = vmatprep.mubr.f32.mxu0 0.0
        %938 = vmatmul.mubr.f32.gmra.mxu0 %v430
        %v939 = vpop.f32.mrf.mxu0
        %v940 = vadd.f32 %v796, %v939
        %v941 = vpop.f32.mrf.mxu0
        %942 = vmatprep.mubr.f32.mxu0 0.0
        %943 = vmatmul.mubr.f32.gmra.mxu0 %v431
        %v944 = vpop.f32.mrf.mxu0
        %v945 = vadd.f32 %v801, %v944
        %v946 = vpop.f32.mrf.mxu0
        %947 = vmatprep.mubr.f32.mxu0 0.0
        %948 = vmatmul.mubr.f32.gmra.mxu0 %v432
        %v949 = vpop.f32.mrf.mxu0
        %v950 = vadd.f32 %v806, %v949
        %v951 = vpop.f32.mrf.mxu0
        %952 = vmatprep.mubr.f32.mxu0 0.0
        %953 = vmatmul.mubr.f32.gmra.mxu0 %v433
        %v954 = vpop.f32.mrf.mxu0
        %v955 = vadd.f32 %v811, %v954
        %v956 = vpop.f32.mrf.mxu0
        %957 = vmatprep.mubr.f32.mxu0 0.0
        %958 = vmatmul.mubr.f32.gmra.mxu0 %v434
        %v959 = vpop.f32.mrf.mxu0
        %v960 = vadd.f32 %v816, %v959
        %v961 = vpop.f32.mrf.mxu0
        %962 = vmatprep.mubr.f32.mxu0 0.0
        %963 = vmatmul.mubr.f32.gmra.mxu0 %v435
        %v964 = vpop.f32.mrf.mxu0
        %v965 = vadd.f32 %v821, %v964
        %v966 = vpop.f32.mrf.mxu0
        %967 = vmatprep.mubr.f32.mxu0 0.0
        %968 = vmatmul.mubr.f32.gmra.mxu0 %v436
        %v969 = vpop.f32.mrf.mxu0
        %v970 = vadd.f32 %v826, %v969
        %v971 = vpop.f32.mrf.mxu0
        %972 = vmatprep.mubr.f32.mxu0 0.0
        %973 = vmatmul.mubr.f32.gmra.mxu0 %v437
        %v974 = vpop.f32.mrf.mxu0
        %v975 = vadd.f32 %v831, %v974
        %v976 = vpop.f32.mrf.mxu0
        %977 = vmatprep.mubr.f32.mxu0 0.0
        %978 = vmatmul.mubr.f32.gmra.mxu0 %v438
        %v979 = vpop.f32.mrf.mxu0
        %v980 = vadd.f32 %v836, %v979
        %v981 = vpop.f32.mrf.mxu0
        %982 = vmatprep.mubr.f32.mxu0 0.0
        %983 = vmatmul.mubr.f32.gmra.mxu0 %v439
        %v984 = vpop.f32.mrf.mxu0
        %v985 = vadd.f32 %v841, %v984
        %v986 = vpop.f32.mrf.mxu0
        %987 = vmatprep.mubr.f32.mxu0 0.0
        %988 = vmatmul.mubr.f32.gmra.mxu0 %v440
        %v989 = vpop.f32.mrf.mxu0
        %v990 = vadd.f32 %v846, %v989
        %v991 = vpop.f32.mrf.mxu0
        %992 = vmatprep.mubr.f32.mxu0 0.0
        %993 = vmatmul.mubr.f32.gmra.mxu0 %v441
        %v994 = vpop.f32.mrf.mxu0
        %v995 = vadd.f32 %v851, %v994
        %v996 = vpop.f32.mrf.mxu0
        %997 = vmatprep.mubr.f32.mxu0 0.0
        %998 = vmatmul.mubr.f32.gmra.mxu0 %v442
        %v999 = vpop.f32.mrf.mxu0
        %v1000 = vadd.f32 %v856, %v999
        %v1001 = vpop.f32.mrf.mxu0
        %1002 = vmatprep.mubr.f32.mxu0 0.0
        %1003 = vmatmul.mubr.f32.gmra.mxu0 %v443
        %v1004 = vpop.f32.mrf.mxu0
        %v1005 = vadd.f32 %v861, %v1004
        %v1006 = vpop.f32.mrf.mxu0
        %1007 = vdwg.mxu0
        %vm1008 = vcmask 130048
        %v1009 = vsel %vm1008, %v705, -inf
        %v1010 = vsel %vm1008, %v710, -inf
        %v1011 = vsel %vm1008, %v715, -inf
        %v1012 = vsel %vm1008, %v720, -inf
        %v1013 = vsel %vm1008, %v725, -inf
        %v1014 = vmax.f32 %v1009, %v1013
        %v1015 = vsel %vm1008, %v730, -inf
        %v1016 = vmax.f32 %v1010, %v1015
        %v1017 = vsel %vm1008, %v735, -inf
        %v1018 = vmax.f32 %v1011, %v1017
        %v1019 = vsel %vm1008, %v740, -inf
        %v1020 = vmax.f32 %v1012, %v1019
        %v1021 = vsel %vm1008, %v745, -inf
        %v1022 = vmax.f32 %v1014, %v1021
        %v1023 = vsel %vm1008, %v750, -inf
        %v1024 = vmax.f32 %v1016, %v1023
        %v1025 = vsel %vm1008, %v755, -inf
        %v1026 = vmax.f32 %v1018, %v1025
        %v1027 = vsel %vm1008, %v760, -inf
        %v1028 = vmax.f32 %v1020, %v1027
        %v1029 = vsel %vm1008, %v765, -inf
        %v1030 = vmax.f32 %v1022, %v1029
        %v1031 = vsel %vm1008, %v770, -inf
        %v1032 = vmax.f32 %v1024, %v1031
        %v1033 = vsel %vm1008, %v775, -inf
        %v1034 = vmax.f32 %v1026, %v1033
        %v1035 = vsel %vm1008, %v780, -inf
        %v1036 = vmax.f32 %v1028, %v1035
        %v1037 = vmax.f32 %v1030, %v1032
        %v1038 = vmax.f32 %v1034, %v1036
        %v1039 = vmax.f32 %v1037, %v1038
        %v1040 = vrot.slane %v1039, 4
        %v1041 = vmax.f32 %v1039, %v1040
        %v1042 = vrot.slane %v1041, 2
        %v1043 = vmax.f32 %v1041, %v1042
        %v1044 = vrot.slane %v1043, 1
        %v1045 = vmax.f32 %v1043, %v1044
        %v1046 = vsel %vm1008, %v705, inf
        %v1047 = vsel %vm1008, %v710, inf
        %v1048 = vsel %vm1008, %v715, inf
        %v1049 = vsel %vm1008, %v720, inf
        %v1050 = vsel %vm1008, %v725, inf
        %v1051 = vmin.f32 %v1046, %v1050
        %v1052 = vsel %vm1008, %v730, inf
        %v1053 = vmin.f32 %v1047, %v1052
        %v1054 = vsel %vm1008, %v735, inf
        %v1055 = vmin.f32 %v1048, %v1054
        %v1056 = vsel %vm1008, %v740, inf
        %v1057 = vmin.f32 %v1049, %v1056
        %v1058 = vsel %vm1008, %v745, inf
        %v1059 = vmin.f32 %v1051, %v1058
        %v1060 = vsel %vm1008, %v750, inf
        %v1061 = vmin.f32 %v1053, %v1060
        %v1062 = vsel %vm1008, %v755, inf
        %v1063 = vmin.f32 %v1055, %v1062
        %v1064 = vsel %vm1008, %v760, inf
        %v1065 = vmin.f32 %v1057, %v1064
        %v1066 = vsel %vm1008, %v765, inf
        %v1067 = vmin.f32 %v1059, %v1066
        %v1068 = vsel %vm1008, %v770, inf
        %v1069 = vmin.f32 %v1061, %v1068
        %v1070 = vsel %vm1008, %v775, inf
        %v1071 = vmin.f32 %v1063, %v1070
        %v1072 = vsel %vm1008, %v780, inf
        %v1073 = vmin.f32 %v1065, %v1072
        %v1074 = vmin.f32 %v1067, %v1069
        %v1075 = vmin.f32 %v1071, %v1073
        %v1076 = vmin.f32 %v1074, %v1075
        %v1077 = vrot.slane %v1076, 4
        %v1078 = vmin.f32 %v1076, %v1077
        %v1079 = vrot.slane %v1078, 2
        %v1080 = vmin.f32 %v1078, %v1079
        %v1081 = vrot.slane %v1080, 1
        %v1082 = vmin.f32 %v1080, %v1081
        %1083 = vst.msk [vmem:[#allocation3] sm:$0xff] %vm1008, %v705
        %1084 = vst.msk [vmem:[#allocation3 + $0x8] sm:$0xff] %vm1008, %v710
        %1085 = vst.msk [vmem:[#allocation3 + $0x10] sm:$0xff] %vm1008, %v715
        %1086 = vst.msk [vmem:[#allocation3 + $0x18] sm:$0xff] %vm1008, %v720
        %1087 = vst.msk [vmem:[#allocation3 + $0x20] sm:$0xff] %vm1008, %v725
        %1088 = vst.msk [vmem:[#allocation3 + $0x28] sm:$0xff] %vm1008, %v730
        %1089 = vst.msk [vmem:[#allocation3 + $0x30] sm:$0xff] %vm1008, %v735
        %1090 = vst.msk [vmem:[#allocation3 + $0x38] sm:$0xff] %vm1008, %v740
        %1091 = vst.msk [vmem:[#allocation3 + $0x40] sm:$0xff] %vm1008, %v745
        %1092 = vst.msk [vmem:[#allocation3 + $0x48] sm:$0xff] %vm1008, %v750
        %1093 = vst.msk [vmem:[#allocation3 + $0x50] sm:$0xff] %vm1008, %v755
        %1094 = vst.msk [vmem:[#allocation3 + $0x58] sm:$0xff] %vm1008, %v760
        %1095 = vst.msk [vmem:[#allocation3 + $0x60] sm:$0xff] %vm1008, %v765
        %1096 = vst.msk [vmem:[#allocation3 + $0x68] sm:$0xff] %vm1008, %v770
        %1097 = vst.msk [vmem:[#allocation3 + $0x70] sm:$0xff] %vm1008, %v775
        %1098 = vst.msk [vmem:[#allocation3 + $0x78] sm:$0xff] %vm1008, %v780
        %1099 = vst.msk [vmem:[#allocation4] sm:$0xff] %vm1008, %v930
        %1100 = vst.msk [vmem:[#allocation4 + $0x8] sm:$0xff] %vm1008, %v935
        %1101 = vst.msk [vmem:[#allocation4 + $0x10] sm:$0xff] %vm1008, %v940
        %1102 = vst.msk [vmem:[#allocation4 + $0x18] sm:$0xff] %vm1008, %v945
        %1103 = vst.msk [vmem:[#allocation4 + $0x20] sm:$0xff] %vm1008, %v950
        %1104 = vst.msk [vmem:[#allocation4 + $0x28] sm:$0xff] %vm1008, %v955
        %1105 = vst.msk [vmem:[#allocation4 + $0x30] sm:$0xff] %vm1008, %v960
        %1106 = vst.msk [vmem:[#allocation4 + $0x38] sm:$0xff] %vm1008, %v965
        %1107 = vst.msk [vmem:[#allocation4 + $0x40] sm:$0xff] %vm1008, %v970
        %1108 = vst.msk [vmem:[#allocation4 + $0x48] sm:$0xff] %vm1008, %v975
        %1109 = vst.msk [vmem:[#allocation4 + $0x50] sm:$0xff] %vm1008, %v980
        %1110 = vst.msk [vmem:[#allocation4 + $0x58] sm:$0xff] %vm1008, %v985
        %1111 = vst.msk [vmem:[#allocation4 + $0x60] sm:$0xff] %vm1008, %v990
        %1112 = vst.msk [vmem:[#allocation4 + $0x68] sm:$0xff] %vm1008, %v995
        %1113 = vst.msk [vmem:[#allocation4 + $0x70] sm:$0xff] %vm1008, %v1000
        %1114 = vst.msk [vmem:[#allocation4 + $0x78] sm:$0xff] %vm1008, %v1005
        %v1115 = vld [vmem:[#allocation3] sm:$0xff]
        %v1116 = vld [vmem:[#allocation3 + $0x8] sm:$0xff]
        %v1117 = vld [vmem:[#allocation3 + $0x10] sm:$0xff]
        %v1118 = vld [vmem:[#allocation3 + $0x18] sm:$0xff]
        %v1119 = vld [vmem:[#allocation3 + $0x20] sm:$0xff]
        %v1120 = vld [vmem:[#allocation3 + $0x28] sm:$0xff]
        %v1121 = vld [vmem:[#allocation3 + $0x30] sm:$0xff]
        %v1122 = vld [vmem:[#allocation3 + $0x38] sm:$0xff]
        %v1123 = vld [vmem:[#allocation3 + $0x40] sm:$0xff]
        %v1124 = vld [vmem:[#allocation3 + $0x48] sm:$0xff]
        %v1125 = vld [vmem:[#allocation3 + $0x50] sm:$0xff]
        %v1126 = vld [vmem:[#allocation3 + $0x58] sm:$0xff]
        %v1127 = vld [vmem:[#allocation3 + $0x60] sm:$0xff]
        %v1128 = vld [vmem:[#allocation3 + $0x68] sm:$0xff]
        %v1129 = vld [vmem:[#allocation3 + $0x70] sm:$0xff]
        %v1130 = vld [vmem:[#allocation3 + $0x78] sm:$0xff]
        %v1131 = vld [vmem:[#allocation4] sm:$0xff]
        %v1132 = vld [vmem:[#allocation4 + $0x8] sm:$0xff]
        %v1133 = vld [vmem:[#allocation4 + $0x10] sm:$0xff]
        %v1134 = vld [vmem:[#allocation4 + $0x18] sm:$0xff]
        %v1135 = vld [vmem:[#allocation4 + $0x20] sm:$0xff]
        %v1136 = vld [vmem:[#allocation4 + $0x28] sm:$0xff]
        %v1137 = vld [vmem:[#allocation4 + $0x30] sm:$0xff]
        %v1138 = vld [vmem:[#allocation4 + $0x38] sm:$0xff]
        %v1139 = vld [vmem:[#allocation4 + $0x40] sm:$0xff]
        %v1140 = vld [vmem:[#allocation4 + $0x48] sm:$0xff]
        %v1141 = vld [vmem:[#allocation4 + $0x50] sm:$0xff]
        %v1142 = vld [vmem:[#allocation4 + $0x58] sm:$0xff]
        %v1143 = vld [vmem:[#allocation4 + $0x60] sm:$0xff]
        %v1144 = vld [vmem:[#allocation4 + $0x68] sm:$0xff]
        %v1145 = vld [vmem:[#allocation4 + $0x70] sm:$0xff]
        %v1146 = vld [vmem:[#allocation4 + $0x78] sm:$0xff]
        %vm1147 = vcmp.ge.f32.partialorder %v550, 0.0
        %1149 = vset.pattern.permute.xlu0 8
        %1150 = vperm.xlu0 %1149, %v1045
        %v1151 = vpop.permute.xlu0 %1150
        %v1153 = vmul.f32 %v550, %v1151
        %1155 = vset.pattern.permute.xlu0 8
        %1156 = vperm.xlu0 %1155, %v1082
        %v1157 = vpop.permute.xlu0 %1156
        %v1159 = vmul.f32 %v550, %v1157
        %v1160 = vsel %vm1147, %v1153, %v1159
        %1162 = vset.pattern.permute.xlu0 8
        %1163 = vperm.xlu0 %1162, %v1115
        %v1164 = vpop.permute.xlu0 %1163
        %1167 = vset.pattern.permute.xlu0 8
        %1168 = vperm.xlu0 %1167, %v1116
        %v1169 = vpop.permute.xlu0 %1168
        %1172 = vset.pattern.permute.xlu0 8
        %1173 = vperm.xlu0 %1172, %v1117
        %v1174 = vpop.permute.xlu0 %1173
        %1177 = vset.pattern.permute.xlu0 8
        %1178 = vperm.xlu0 %1177, %v1118
        %v1179 = vpop.permute.xlu0 %1178
        %1182 = vset.pattern.permute.xlu0 8
        %1183 = vperm.xlu0 %1182, %v1119
        %v1184 = vpop.permute.xlu0 %1183
        %1187 = vset.pattern.permute.xlu0 8
        %1188 = vperm.xlu0 %1187, %v1120
        %v1189 = vpop.permute.xlu0 %1188
        %1192 = vset.pattern.permute.xlu0 8
        %1193 = vperm.xlu0 %1192, %v1121
        %v1194 = vpop.permute.xlu0 %1193
        %1197 = vset.pattern.permute.xlu0 8
        %1198 = vperm.xlu0 %1197, %v1122
        %v1199 = vpop.permute.xlu0 %1198
        %1202 = vset.pattern.permute.xlu0 8
        %1203 = vperm.xlu0 %1202, %v1123
        %v1204 = vpop.permute.xlu0 %1203
        %1207 = vset.pattern.permute.xlu0 8
        %1208 = vperm.xlu0 %1207, %v1124
        %v1209 = vpop.permute.xlu0 %1208
        %1212 = vset.pattern.permute.xlu0 8
        %1213 = vperm.xlu0 %1212, %v1125
        %v1214 = vpop.permute.xlu0 %1213
        %1217 = vset.pattern.permute.xlu0 8
        %1218 = vperm.xlu0 %1217, %v1126
        %v1219 = vpop.permute.xlu0 %1218
        %1222 = vset.pattern.permute.xlu0 8
        %1223 = vperm.xlu0 %1222, %v1127
        %v1224 = vpop.permute.xlu0 %1223
        %1227 = vset.pattern.permute.xlu0 8
        %1228 = vperm.xlu0 %1227, %v1128
        %v1229 = vpop.permute.xlu0 %1228
        %1232 = vset.pattern.permute.xlu0 8
        %1233 = vperm.xlu0 %1232, %v1129
        %v1234 = vpop.permute.xlu0 %1233
        %1237 = vset.pattern.permute.xlu0 8
        %1238 = vperm.xlu0 %1237, %v1130
        %v1239 = vpop.permute.xlu0 %1238
        %v1241 = vlaneseq
        %v1242 = vshrl.u32 %v1241, 7
        %v1243 = vsub.s32 0, %v1242
        %v1244 = vrot.slane %v550, %v1243
        %v1245 = vmul.f32 %v1164, %v1244
        %v1246 = vmul.f32 %v1169, %v1244
        %v1247 = vmul.f32 %v1174, %v1244
        %v1248 = vmul.f32 %v1179, %v1244
        %v1249 = vmul.f32 %v1184, %v1244
        %v1250 = vmul.f32 %v1189, %v1244
        %v1251 = vmul.f32 %v1194, %v1244
        %v1252 = vmul.f32 %v1199, %v1244
        %v1253 = vmul.f32 %v1204, %v1244
        %v1254 = vmul.f32 %v1209, %v1244
        %v1255 = vmul.f32 %v1214, %v1244
        %v1256 = vmul.f32 %v1219, %v1244
        %v1257 = vmul.f32 %v1224, %v1244
        %v1258 = vmul.f32 %v1229, %v1244
        %v1259 = vmul.f32 %v1234, %v1244
        %v1260 = vmul.f32 %v1239, %v1244
        %v1261 = vlaneseq
        %v1262 = vshrl.u32 %v1261, 7
        %v1263 = vsub.s32 0, %v1262
        %v1264 = vrot.slane %v1160, %v1263
        %v1265 = vsub.f32 %v1245, %v1264
        %v1266 = vsub.f32 %v1246, %v1264
        %v1267 = vsub.f32 %v1247, %v1264
        %v1268 = vsub.f32 %v1248, %v1264
        %v1269 = vsub.f32 %v1249, %v1264
        %v1270 = vsub.f32 %v1250, %v1264
        %v1271 = vsub.f32 %v1251, %v1264
        %v1272 = vsub.f32 %v1252, %v1264
        %v1273 = vsub.f32 %v1253, %v1264
        %v1274 = vsub.f32 %v1254, %v1264
        %v1275 = vsub.f32 %v1255, %v1264
        %v1276 = vsub.f32 %v1256, %v1264
        %v1277 = vsub.f32 %v1257, %v1264
        %v1278 = vsub.f32 %v1258, %v1264
        %v1279 = vsub.f32 %v1259, %v1264
        %v1280 = vsub.f32 %v1260, %v1264
        %v1281 = vmul.f32 %v1265, 1.442695
        %v1282 = vpow.pop %v1281
        %v1283 = vmul.f32 %v1266, 1.442695
        %v1284 = vpow.pop %v1283
        %v1285 = vmul.f32 %v1267, 1.442695
        %v1286 = vpow.pop %v1285
        %v1287 = vmul.f32 %v1268, 1.442695
        %v1288 = vpow.pop %v1287
        %v1289 = vmul.f32 %v1269, 1.442695
        %v1290 = vpow.pop %v1289
        %v1291 = vmul.f32 %v1270, 1.442695
        %v1292 = vpow.pop %v1291
        %v1293 = vmul.f32 %v1271, 1.442695
        %v1294 = vpow.pop %v1293
        %v1295 = vmul.f32 %v1272, 1.442695
        %v1296 = vpow.pop %v1295
        %v1297 = vmul.f32 %v1273, 1.442695
        %v1298 = vpow.pop %v1297
        %v1299 = vmul.f32 %v1274, 1.442695
        %v1300 = vpow.pop %v1299
        %v1301 = vmul.f32 %v1275, 1.442695
        %v1302 = vpow.pop %v1301
        %v1303 = vmul.f32 %v1276, 1.442695
        %v1304 = vpow.pop %v1303
        %v1305 = vmul.f32 %v1277, 1.442695
        %v1306 = vpow.pop %v1305
        %v1307 = vmul.f32 %v1278, 1.442695
        %v1308 = vpow.pop %v1307
        %v1309 = vmul.f32 %v1279, 1.442695
        %v1310 = vpow.pop %v1309
        %v1311 = vmul.f32 %v1280, 1.442695
        %v1312 = vpow.pop %v1311
        %v1313 = vadd.f32 %v1282, %v1284
        %v1314 = vadd.f32 %v1313, %v1286
        %v1315 = vadd.f32 %v1314, %v1288
        %v1316 = vadd.f32 %v1315, %v1290
        %v1317 = vadd.f32 %v1316, %v1292
        %v1318 = vadd.f32 %v1317, %v1294
        %v1319 = vadd.f32 %v1318, %v1296
        %v1320 = vadd.f32 %v1319, %v1298
        %v1321 = vadd.f32 %v1320, %v1300
        %v1322 = vadd.f32 %v1321, %v1302
        %v1323 = vadd.f32 %v1322, %v1304
        %v1324 = vadd.f32 %v1323, %v1306
        %v1325 = vadd.f32 %v1324, %v1308
        %v1326 = vadd.f32 %v1325, %v1310
        %v1327 = vadd.f32 %v1326, %v1312
        %v1328 = vrot.slane %v1327, 4
        %v1329 = vadd.f32 %v1327, %v1328
        %v1330 = vrot.slane %v1329, 2
        %v1331 = vadd.f32 %v1329, %v1330
        %v1332 = vrot.slane %v1331, 1
        %v1333 = vadd.f32 %v1331, %v1332
        %1335 = vset.pattern.permute.xlu0 8
        %1336 = vperm.xlu0 %1335, %v1131
        %v1337 = vpop.permute.xlu0 %1336
        %1340 = vset.pattern.permute.xlu0 8
        %1341 = vperm.xlu0 %1340, %v1132
        %v1342 = vpop.permute.xlu0 %1341
        %1345 = vset.pattern.permute.xlu0 8
        %1346 = vperm.xlu0 %1345, %v1133
        %v1347 = vpop.permute.xlu0 %1346
        %1350 = vset.pattern.permute.xlu0 8
        %1351 = vperm.xlu0 %1350, %v1134
        %v1352 = vpop.permute.xlu0 %1351
        %1355 = vset.pattern.permute.xlu0 8
        %1356 = vperm.xlu0 %1355, %v1135
        %v1357 = vpop.permute.xlu0 %1356
        %1360 = vset.pattern.permute.xlu0 8
        %1361 = vperm.xlu0 %1360, %v1136
        %v1362 = vpop.permute.xlu0 %1361
        %1365 = vset.pattern.permute.xlu0 8
        %1366 = vperm.xlu0 %1365, %v1137
        %v1367 = vpop.permute.xlu0 %1366
        %1370 = vset.pattern.permute.xlu0 8
        %1371 = vperm.xlu0 %1370, %v1138
        %v1372 = vpop.permute.xlu0 %1371
        %1375 = vset.pattern.permute.xlu0 8
        %1376 = vperm.xlu0 %1375, %v1139
        %v1377 = vpop.permute.xlu0 %1376
        %1380 = vset.pattern.permute.xlu0 8
        %1381 = vperm.xlu0 %1380, %v1140
        %v1382 = vpop.permute.xlu0 %1381
        %1385 = vset.pattern.permute.xlu0 8
        %1386 = vperm.xlu0 %1385, %v1141
        %v1387 = vpop.permute.xlu0 %1386
        %1390 = vset.pattern.permute.xlu0 8
        %1391 = vperm.xlu0 %1390, %v1142
        %v1392 = vpop.permute.xlu0 %1391
        %1395 = vset.pattern.permute.xlu0 8
        %1396 = vperm.xlu0 %1395, %v1143
        %v1397 = vpop.permute.xlu0 %1396
        %1400 = vset.pattern.permute.xlu0 8
        %1401 = vperm.xlu0 %1400, %v1144
        %v1402 = vpop.permute.xlu0 %1401
        %1405 = vset.pattern.permute.xlu0 8
        %1406 = vperm.xlu0 %1405, %v1145
        %v1407 = vpop.permute.xlu0 %1406
        %1410 = vset.pattern.permute.xlu0 8
        %1411 = vperm.xlu0 %1410, %v1146
        %v1412 = vpop.permute.xlu0 %1411
        %v1414 = vmul.f32 %v1282, %v1337
        %v1415 = vmul.f32 %v1284, %v1342
        %v1416 = vmul.f32 %v1286, %v1347
        %v1417 = vmul.f32 %v1288, %v1352
        %v1418 = vmul.f32 %v1290, %v1357
        %v1419 = vmul.f32 %v1292, %v1362
        %v1420 = vmul.f32 %v1294, %v1367
        %v1421 = vmul.f32 %v1296, %v1372
        %v1422 = vmul.f32 %v1298, %v1377
        %v1423 = vmul.f32 %v1300, %v1382
        %v1424 = vmul.f32 %v1302, %v1387
        %v1425 = vmul.f32 %v1304, %v1392
        %v1426 = vmul.f32 %v1306, %v1397
        %v1427 = vmul.f32 %v1308, %v1402
        %v1428 = vmul.f32 %v1310, %v1407
        %v1429 = vmul.f32 %v1312, %v1412
        %v1430 = vadd.f32 %v1414, %v1415
        %v1431 = vadd.f32 %v1430, %v1416
        %v1432 = vadd.f32 %v1431, %v1417
        %v1433 = vadd.f32 %v1432, %v1418
        %v1434 = vadd.f32 %v1433, %v1419
        %v1435 = vadd.f32 %v1434, %v1420
        %v1436 = vadd.f32 %v1435, %v1421
        %v1437 = vadd.f32 %v1436, %v1422
        %v1438 = vadd.f32 %v1437, %v1423
        %v1439 = vadd.f32 %v1438, %v1424
        %v1440 = vadd.f32 %v1439, %v1425
        %v1441 = vadd.f32 %v1440, %v1426
        %v1442 = vadd.f32 %v1441, %v1427
        %v1443 = vadd.f32 %v1442, %v1428
        %v1444 = vadd.f32 %v1443, %v1429
        %v1445 = vrot.slane %v1444, 4
        %v1446 = vadd.f32 %v1444, %v1445
        %v1447 = vrot.slane %v1446, 2
        %v1448 = vadd.f32 %v1446, %v1447
        %v1449 = vrot.slane %v1448, 1
        %v1450 = vadd.f32 %v1448, %v1449
        %v1451 = vrcp.pop %v1333
        %v1452 = vmul.f32 %v1450, %v1451
        %vm1453 = vcmp.ge.f32.partialorder %v555, 0.0
        %1454 = vset.pattern.permute.xlu0 0
        %1455 = vperm.xlu0 %1454, %v1045
        %v1456 = vpop.permute.xlu0 %1455
        %v1458 = vmul.f32 %v555, %v1456
        %1459 = vset.pattern.permute.xlu0 0
        %1460 = vperm.xlu0 %1459, %v1082
        %v1461 = vpop.permute.xlu0 %1460
        %v1463 = vmul.f32 %v555, %v1461
        %v1464 = vsel %vm1453, %v1458, %v1463
        %1465 = vset.pattern.permute.xlu0 0
        %1466 = vperm.xlu0 %1465, %v1115
        %v1467 = vpop.permute.xlu0 %1466
        %1469 = vset.pattern.permute.xlu0 0
        %1470 = vperm.xlu0 %1469, %v1116
        %v1471 = vpop.permute.xlu0 %1470
        %1473 = vset.pattern.permute.xlu0 0
        %1474 = vperm.xlu0 %1473, %v1117
        %v1475 = vpop.permute.xlu0 %1474
        %1477 = vset.pattern.permute.xlu0 0
        %1478 = vperm.xlu0 %1477, %v1118
        %v1479 = vpop.permute.xlu0 %1478
        %1481 = vset.pattern.permute.xlu0 0
        %1482 = vperm.xlu0 %1481, %v1119
        %v1483 = vpop.permute.xlu0 %1482
        %1485 = vset.pattern.permute.xlu0 0
        %1486 = vperm.xlu0 %1485, %v1120
        %v1487 = vpop.permute.xlu0 %1486
        %1489 = vset.pattern.permute.xlu0 0
        %1490 = vperm.xlu0 %1489, %v1121
        %v1491 = vpop.permute.xlu0 %1490
        %1493 = vset.pattern.permute.xlu0 0
        %1494 = vperm.xlu0 %1493, %v1122
        %v1495 = vpop.permute.xlu0 %1494
        %1497 = vset.pattern.permute.xlu0 0
        %1498 = vperm.xlu0 %1497, %v1123
        %v1499 = vpop.permute.xlu0 %1498
        %1501 = vset.pattern.permute.xlu0 0
        %1502 = vperm.xlu0 %1501, %v1124
        %v1503 = vpop.permute.xlu0 %1502
        %1505 = vset.pattern.permute.xlu0 0
        %1506 = vperm.xlu0 %1505, %v1125
        %v1507 = vpop.permute.xlu0 %1506
        %1509 = vset.pattern.permute.xlu0 0
        %1510 = vperm.xlu0 %1509, %v1126
        %v1511 = vpop.permute.xlu0 %1510
        %1513 = vset.pattern.permute.xlu0 0
        %1514 = vperm.xlu0 %1513, %v1127
        %v1515 = vpop.permute.xlu0 %1514
        %1517 = vset.pattern.permute.xlu0 0
        %1518 = vperm.xlu0 %1517, %v1128
        %v1519 = vpop.permute.xlu0 %1518
        %1521 = vset.pattern.permute.xlu0 0
        %1522 = vperm.xlu0 %1521, %v1129
        %v1523 = vpop.permute.xlu0 %1522
        %1525 = vset.pattern.permute.xlu0 0
        %1526 = vperm.xlu0 %1525, %v1130
        %v1527 = vpop.permute.xlu0 %1526
        %v1529 = vlaneseq
        %v1530 = vshrl.u32 %v1529, 7
        %v1531 = vsub.s32 0, %v1530
        %v1532 = vrot.slane %v555, %v1531
        %v1533 = vmul.f32 %v1467, %v1532
        %v1534 = vmul.f32 %v1471, %v1532
        %v1535 = vmul.f32 %v1475, %v1532
        %v1536 = vmul.f32 %v1479, %v1532
        %v1537 = vmul.f32 %v1483, %v1532
        %v1538 = vmul.f32 %v1487, %v1532
        %v1539 = vmul.f32 %v1491, %v1532
        %v1540 = vmul.f32 %v1495, %v1532
        %v1541 = vmul.f32 %v1499, %v1532
        %v1542 = vmul.f32 %v1503, %v1532
        %v1543 = vmul.f32 %v1507, %v1532
        %v1544 = vmul.f32 %v1511, %v1532
        %v1545 = vmul.f32 %v1515, %v1532
        %v1546 = vmul.f32 %v1519, %v1532
        %v1547 = vmul.f32 %v1523, %v1532
        %v1548 = vmul.f32 %v1527, %v1532
        %v1549 = vlaneseq
        %v1550 = vshrl.u32 %v1549, 7
        %v1551 = vsub.s32 0, %v1550
        %v1552 = vrot.slane %v1464, %v1551
        %v1553 = vsub.f32 %v1533, %v1552
        %v1554 = vsub.f32 %v1534, %v1552
        %v1555 = vsub.f32 %v1535, %v1552
        %v1556 = vsub.f32 %v1536, %v1552
        %v1557 = vsub.f32 %v1537, %v1552
        %v1558 = vsub.f32 %v1538, %v1552
        %v1559 = vsub.f32 %v1539, %v1552
        %v1560 = vsub.f32 %v1540, %v1552
        %v1561 = vsub.f32 %v1541, %v1552
        %v1562 = vsub.f32 %v1542, %v1552
        %v1563 = vsub.f32 %v1543, %v1552
        %v1564 = vsub.f32 %v1544, %v1552
        %v1565 = vsub.f32 %v1545, %v1552
        %v1566 = vsub.f32 %v1546, %v1552
        %v1567 = vsub.f32 %v1547, %v1552
        %v1568 = vsub.f32 %v1548, %v1552
        %v1569 = vmul.f32 %v1553, 1.442695
        %v1570 = vpow.pop %v1569
        %v1571 = vmul.f32 %v1554, 1.442695
        %v1572 = vpow.pop %v1571
        %v1573 = vmul.f32 %v1555, 1.442695
        %v1574 = vpow.pop %v1573
        %v1575 = vmul.f32 %v1556, 1.442695
        %v1576 = vpow.pop %v1575
        %v1577 = vmul.f32 %v1557, 1.442695
        %v1578 = vpow.pop %v1577
        %v1579 = vmul.f32 %v1558, 1.442695
        %v1580 = vpow.pop %v1579
        %v1581 = vmul.f32 %v1559, 1.442695
        %v1582 = vpow.pop %v1581
        %v1583 = vmul.f32 %v1560, 1.442695
        %v1584 = vpow.pop %v1583
        %v1585 = vmul.f32 %v1561, 1.442695
        %v1586 = vpow.pop %v1585
        %v1587 = vmul.f32 %v1562, 1.442695
        %v1588 = vpow.pop %v1587
        %v1589 = vmul.f32 %v1563, 1.442695
        %v1590 = vpow.pop %v1589
        %v1591 = vmul.f32 %v1564, 1.442695
        %v1592 = vpow.pop %v1591
        %v1593 = vmul.f32 %v1565, 1.442695
        %v1594 = vpow.pop %v1593
        %v1595 = vmul.f32 %v1566, 1.442695
        %v1596 = vpow.pop %v1595
        %v1597 = vmul.f32 %v1567, 1.442695
        %v1598 = vpow.pop %v1597
        %v1599 = vmul.f32 %v1568, 1.442695
        %v1600 = vpow.pop %v1599
        %v1601 = vadd.f32 %v1570, %v1572
        %v1602 = vadd.f32 %v1601, %v1574
        %v1603 = vadd.f32 %v1602, %v1576
        %v1604 = vadd.f32 %v1603, %v1578
        %v1605 = vadd.f32 %v1604, %v1580
        %v1606 = vadd.f32 %v1605, %v1582
        %v1607 = vadd.f32 %v1606, %v1584
        %v1608 = vadd.f32 %v1607, %v1586
        %v1609 = vadd.f32 %v1608, %v1588
        %v1610 = vadd.f32 %v1609, %v1590
        %v1611 = vadd.f32 %v1610, %v1592
        %v1612 = vadd.f32 %v1611, %v1594
        %v1613 = vadd.f32 %v1612, %v1596
        %v1614 = vadd.f32 %v1613, %v1598
        %v1615 = vadd.f32 %v1614, %v1600
        %v1616 = vrot.slane %v1615, 4
        %v1617 = vadd.f32 %v1615, %v1616
        %v1618 = vrot.slane %v1617, 2
        %v1619 = vadd.f32 %v1617, %v1618
        %v1620 = vrot.slane %v1619, 1
        %v1621 = vadd.f32 %v1619, %v1620
        %1622 = vset.pattern.permute.xlu0 0
        %1623 = vperm.xlu0 %1622, %v1131
        %v1624 = vpop.permute.xlu0 %1623
        %1626 = vset.pattern.permute.xlu0 0
        %1627 = vperm.xlu0 %1626, %v1132
        %v1628 = vpop.permute.xlu0 %1627
        %1630 = vset.pattern.permute.xlu0 0
        %1631 = vperm.xlu0 %1630, %v1133
        %v1632 = vpop.permute.xlu0 %1631
        %1634 = vset.pattern.permute.xlu0 0
        %1635 = vperm.xlu0 %1634, %v1134
        %v1636 = vpop.permute.xlu0 %1635
        %1638 = vset.pattern.permute.xlu0 0
        %1639 = vperm.xlu0 %1638, %v1135
        %v1640 = vpop.permute.xlu0 %1639
        %1642 = vset.pattern.permute.xlu0 0
        %1643 = vperm.xlu0 %1642, %v1136
        %v1644 = vpop.permute.xlu0 %1643
        %1646 = vset.pattern.permute.xlu0 0
        %1647 = vperm.xlu0 %1646, %v1137
        %v1648 = vpop.permute.xlu0 %1647
        %1650 = vset.pattern.permute.xlu0 0
        %1651 = vperm.xlu0 %1650, %v1138
        %v1652 = vpop.permute.xlu0 %1651
        %1654 = vset.pattern.permute.xlu0 0
        %1655 = vperm.xlu0 %1654, %v1139
        %v1656 = vpop.permute.xlu0 %1655
        %1658 = vset.pattern.permute.xlu0 0
        %1659 = vperm.xlu0 %1658, %v1140
        %v1660 = vpop.permute.xlu0 %1659
        %1662 = vset.pattern.permute.xlu0 0
        %1663 = vperm.xlu0 %1662, %v1141
        %v1664 = vpop.permute.xlu0 %1663
        %1666 = vset.pattern.permute.xlu0 0
        %1667 = vperm.xlu0 %1666, %v1142
        %v1668 = vpop.permute.xlu0 %1667
        %1670 = vset.pattern.permute.xlu0 0
        %1671 = vperm.xlu0 %1670, %v1143
        %v1672 = vpop.permute.xlu0 %1671
        %1674 = vset.pattern.permute.xlu0 0
        %1675 = vperm.xlu0 %1674, %v1144
        %v1676 = vpop.permute.xlu0 %1675
        %1678 = vset.pattern.permute.xlu0 0
        %1679 = vperm.xlu0 %1678, %v1145
        %v1680 = vpop.permute.xlu0 %1679
        %1682 = vset.pattern.permute.xlu0 0
        %1683 = vperm.xlu0 %1682, %v1146
        %v1684 = vpop.permute.xlu0 %1683
        %v1686 = vmul.f32 %v1570, %v1624
        %v1687 = vmul.f32 %v1572, %v1628
        %v1688 = vmul.f32 %v1574, %v1632
        %v1689 = vmul.f32 %v1576, %v1636
        %v1690 = vmul.f32 %v1578, %v1640
        %v1691 = vmul.f32 %v1580, %v1644
        %v1692 = vmul.f32 %v1582, %v1648
        %v1693 = vmul.f32 %v1584, %v1652
        %v1694 = vmul.f32 %v1586, %v1656
        %v1695 = vmul.f32 %v1588, %v1660
        %v1696 = vmul.f32 %v1590, %v1664
        %v1697 = vmul.f32 %v1592, %v1668
        %v1698 = vmul.f32 %v1594, %v1672
        %v1699 = vmul.f32 %v1596, %v1676
        %v1700 = vmul.f32 %v1598, %v1680
        %v1701 = vmul.f32 %v1600, %v1684
        %v1702 = vadd.f32 %v1686, %v1687
        %v1703 = vadd.f32 %v1702, %v1688
        %v1704 = vadd.f32 %v1703, %v1689
        %v1705 = vadd.f32 %v1704, %v1690
        %v1706 = vadd.f32 %v1705, %v1691
        %v1707 = vadd.f32 %v1706, %v1692
        %v1708 = vadd.f32 %v1707, %v1693
        %v1709 = vadd.f32 %v1708, %v1694
        %v1710 = vadd.f32 %v1709, %v1695
        %v1711 = vadd.f32 %v1710, %v1696
        %v1712 = vadd.f32 %v1711, %v1697
        %v1713 = vadd.f32 %v1712, %v1698
        %v1714 = vadd.f32 %v1713, %v1699
        %v1715 = vadd.f32 %v1714, %v1700
        %v1716 = vadd.f32 %v1715, %v1701
        %v1717 = vrot.slane %v1716, 4
        %v1718 = vadd.f32 %v1716, %v1717
        %v1719 = vrot.slane %v1718, 2
        %v1720 = vadd.f32 %v1718, %v1719
        %v1721 = vrot.slane %v1720, 1
        %v1722 = vadd.f32 %v1720, %v1721
        %v1723 = vrcp.pop %v1621
        %v1724 = vmul.f32 %v1722, %v1723
        %v1725 = vmul.f32 %v1452, %v1724
        %1726 = vst [vmem:[#allocation2] sm:$0x1] %v1725
        %v1727 = vld [vmem:[#allocation3] sm:$0xff]
        %v1728 = vld [vmem:[#allocation3 + $0x8] sm:$0xff]
        %v1729 = vld [vmem:[#allocation3 + $0x10] sm:$0xff]
        %v1730 = vld [vmem:[#allocation3 + $0x18] sm:$0xff]
        %v1731 = vld [vmem:[#allocation3 + $0x20] sm:$0xff]
        %v1732 = vld [vmem:[#allocation3 + $0x28] sm:$0xff]
        %v1733 = vld [vmem:[#allocation3 + $0x30] sm:$0xff]
        %v1734 = vld [vmem:[#allocation3 + $0x38] sm:$0xff]
        %v1735 = vld [vmem:[#allocation3 + $0x40] sm:$0xff]
        %v1736 = vld [vmem:[#allocation3 + $0x48] sm:$0xff]
        %v1737 = vld [vmem:[#allocation3 + $0x50] sm:$0xff]
        %v1738 = vld [vmem:[#allocation3 + $0x58] sm:$0xff]
        %v1739 = vld [vmem:[#allocation3 + $0x60] sm:$0xff]
        %v1740 = vld [vmem:[#allocation3 + $0x68] sm:$0xff]
        %v1741 = vld [vmem:[#allocation3 + $0x70] sm:$0xff]
        %v1742 = vld [vmem:[#allocation3 + $0x78] sm:$0xff]
        %v1743 = vld [vmem:[#allocation4] sm:$0xff]
        %v1744 = vld [vmem:[#allocation4 + $0x8] sm:$0xff]
        %v1745 = vld [vmem:[#allocation4 + $0x10] sm:$0xff]
        %v1746 = vld [vmem:[#allocation4 + $0x18] sm:$0xff]
        %v1747 = vld [vmem:[#allocation4 + $0x20] sm:$0xff]
        %v1748 = vld [vmem:[#allocation4 + $0x28] sm:$0xff]
        %v1749 = vld [vmem:[#allocation4 + $0x30] sm:$0xff]
        %v1750 = vld [vmem:[#allocation4 + $0x38] sm:$0xff]
        %v1751 = vld [vmem:[#allocation4 + $0x40] sm:$0xff]
        %v1752 = vld [vmem:[#allocation4 + $0x48] sm:$0xff]
        %v1753 = vld [vmem:[#allocation4 + $0x50] sm:$0xff]
        %v1754 = vld [vmem:[#allocation4 + $0x58] sm:$0xff]
        %v1755 = vld [vmem:[#allocation4 + $0x60] sm:$0xff]
        %v1756 = vld [vmem:[#allocation4 + $0x68] sm:$0xff]
        %v1757 = vld [vmem:[#allocation4 + $0x70] sm:$0xff]
        %v1758 = vld [vmem:[#allocation4 + $0x78] sm:$0xff]
        %1759 = vset.pattern.permute.xlu0 9
        %1760 = vperm.xlu0 %1759, %v1045
        %v1761 = vpop.permute.xlu0 %1760
        %v1763 = vmul.f32 %v550, %v1761
        %1764 = vset.pattern.permute.xlu0 9
        %1765 = vperm.xlu0 %1764, %v1082
        %v1766 = vpop.permute.xlu0 %1765
        %v1768 = vmul.f32 %v550, %v1766
        %v1769 = vsel %vm1147, %v1763, %v1768
        %1771 = vset.pattern.permute.xlu0 9
        %1772 = vperm.xlu0 %1771, %v1727
        %v1773 = vpop.permute.xlu0 %1772
        %1776 = vset.pattern.permute.xlu0 9
        %1777 = vperm.xlu0 %1776, %v1728
        %v1778 = vpop.permute.xlu0 %1777
        %1781 = vset.pattern.permute.xlu0 9
        %1782 = vperm.xlu0 %1781, %v1729
        %v1783 = vpop.permute.xlu0 %1782
        %1786 = vset.pattern.permute.xlu0 9
        %1787 = vperm.xlu0 %1786, %v1730
        %v1788 = vpop.permute.xlu0 %1787
        %1791 = vset.pattern.permute.xlu0 9
        %1792 = vperm.xlu0 %1791, %v1731
        %v1793 = vpop.permute.xlu0 %1792
        %1796 = vset.pattern.permute.xlu0 9
        %1797 = vperm.xlu0 %1796, %v1732
        %v1798 = vpop.permute.xlu0 %1797
        %1801 = vset.pattern.permute.xlu0 9
        %1802 = vperm.xlu0 %1801, %v1733
        %v1803 = vpop.permute.xlu0 %1802
        %1806 = vset.pattern.permute.xlu0 9
        %1807 = vperm.xlu0 %1806, %v1734
        %v1808 = vpop.permute.xlu0 %1807
        %1811 = vset.pattern.permute.xlu0 9
        %1812 = vperm.xlu0 %1811, %v1735
        %v1813 = vpop.permute.xlu0 %1812
        %1816 = vset.pattern.permute.xlu0 9
        %1817 = vperm.xlu0 %1816, %v1736
        %v1818 = vpop.permute.xlu0 %1817
        %1821 = vset.pattern.permute.xlu0 9
        %1822 = vperm.xlu0 %1821, %v1737
        %v1823 = vpop.permute.xlu0 %1822
        %1826 = vset.pattern.permute.xlu0 9
        %1827 = vperm.xlu0 %1826, %v1738
        %v1828 = vpop.permute.xlu0 %1827
        %1831 = vset.pattern.permute.xlu0 9
        %1832 = vperm.xlu0 %1831, %v1739
        %v1833 = vpop.permute.xlu0 %1832
        %1836 = vset.pattern.permute.xlu0 9
        %1837 = vperm.xlu0 %1836, %v1740
        %v1838 = vpop.permute.xlu0 %1837
        %1841 = vset.pattern.permute.xlu0 9
        %1842 = vperm.xlu0 %1841, %v1741
        %v1843 = vpop.permute.xlu0 %1842
        %1846 = vset.pattern.permute.xlu0 9
        %1847 = vperm.xlu0 %1846, %v1742
        %v1848 = vpop.permute.xlu0 %1847
        %v1850 = vlaneseq
        %v1851 = vshrl.u32 %v1850, 7
        %v1852 = vsub.s32 1, %v1851
        %v1853 = vrot.slane %v550, %v1852
        %v1854 = vmul.f32 %v1773, %v1853
        %v1855 = vmul.f32 %v1778, %v1853
        %v1856 = vmul.f32 %v1783, %v1853
        %v1857 = vmul.f32 %v1788, %v1853
        %v1858 = vmul.f32 %v1793, %v1853
        %v1859 = vmul.f32 %v1798, %v1853
        %v1860 = vmul.f32 %v1803, %v1853
        %v1861 = vmul.f32 %v1808, %v1853
        %v1862 = vmul.f32 %v1813, %v1853
        %v1863 = vmul.f32 %v1818, %v1853
        %v1864 = vmul.f32 %v1823, %v1853
        %v1865 = vmul.f32 %v1828, %v1853
        %v1866 = vmul.f32 %v1833, %v1853
        %v1867 = vmul.f32 %v1838, %v1853
        %v1868 = vmul.f32 %v1843, %v1853
        %v1869 = vmul.f32 %v1848, %v1853
        %v1870 = vlaneseq
        %v1871 = vshrl.u32 %v1870, 7
        %v1872 = vsub.s32 1, %v1871
        %v1873 = vrot.slane %v1769, %v1872
        %v1874 = vsub.f32 %v1854, %v1873
        %v1875 = vsub.f32 %v1855, %v1873
        %v1876 = vsub.f32 %v1856, %v1873
        %v1877 = vsub.f32 %v1857, %v1873
        %v1878 = vsub.f32 %v1858, %v1873
        %v1879 = vsub.f32 %v1859, %v1873
        %v1880 = vsub.f32 %v1860, %v1873
        %v1881 = vsub.f32 %v1861, %v1873
        %v1882 = vsub.f32 %v1862, %v1873
        %v1883 = vsub.f32 %v1863, %v1873
        %v1884 = vsub.f32 %v1864, %v1873
        %v1885 = vsub.f32 %v1865, %v1873
        %v1886 = vsub.f32 %v1866, %v1873
        %v1887 = vsub.f32 %v1867, %v1873
        %v1888 = vsub.f32 %v1868, %v1873
        %v1889 = vsub.f32 %v1869, %v1873
        %v1890 = vmul.f32 %v1874, 1.442695
        %v1891 = vpow.pop %v1890
        %v1892 = vmul.f32 %v1875, 1.442695
        %v1893 = vpow.pop %v1892
        %v1894 = vmul.f32 %v1876, 1.442695
        %v1895 = vpow.pop %v1894
        %v1896 = vmul.f32 %v1877, 1.442695
        %v1897 = vpow.pop %v1896
        %v1898 = vmul.f32 %v1878, 1.442695
        %v1899 = vpow.pop %v1898
        %v1900 = vmul.f32 %v1879, 1.442695
        %v1901 = vpow.pop %v1900
        %v1902 = vmul.f32 %v1880, 1.442695
        %v1903 = vpow.pop %v1902
        %v1904 = vmul.f32 %v1881, 1.442695
        %v1905 = vpow.pop %v1904
        %v1906 = vmul.f32 %v1882, 1.442695
        %v1907 = vpow.pop %v1906
        %v1908 = vmul.f32 %v1883, 1.442695
        %v1909 = vpow.pop %v1908
        %v1910 = vmul.f32 %v1884, 1.442695
        %v1911 = vpow.pop %v1910
        %v1912 = vmul.f32 %v1885, 1.442695
        %v1913 = vpow.pop %v1912
        %v1914 = vmul.f32 %v1886, 1.442695
        %v1915 = vpow.pop %v1914
        %v1916 = vmul.f32 %v1887, 1.442695
        %v1917 = vpow.pop %v1916
        %v1918 = vmul.f32 %v1888, 1.442695
        %v1919 = vpow.pop %v1918
        %v1920 = vmul.f32 %v1889, 1.442695
        %v1921 = vpow.pop %v1920
        %v1922 = vadd.f32 %v1891, %v1893
        %v1923 = vadd.f32 %v1922, %v1895
        %v1924 = vadd.f32 %v1923, %v1897
        %v1925 = vadd.f32 %v1924, %v1899
        %v1926 = vadd.f32 %v1925, %v1901
        %v1927 = vadd.f32 %v1926, %v1903
        %v1928 = vadd.f32 %v1927, %v1905
        %v1929 = vadd.f32 %v1928, %v1907
        %v1930 = vadd.f32 %v1929, %v1909
        %v1931 = vadd.f32 %v1930, %v1911
        %v1932 = vadd.f32 %v1931, %v1913
        %v1933 = vadd.f32 %v1932, %v1915
        %v1934 = vadd.f32 %v1933, %v1917
        %v1935 = vadd.f32 %v1934, %v1919
        %v1936 = vadd.f32 %v1935, %v1921
        %v1937 = vrot.slane %v1936, 4
        %v1938 = vadd.f32 %v1936, %v1937
        %v1939 = vrot.slane %v1938, 2
        %v1940 = vadd.f32 %v1938, %v1939
        %v1941 = vrot.slane %v1940, 1
        %v1942 = vadd.f32 %v1940, %v1941
        %1944 = vset.pattern.permute.xlu0 9
        %1945 = vperm.xlu0 %1944, %v1743
        %v1946 = vpop.permute.xlu0 %1945
        %1949 = vset.pattern.permute.xlu0 9
        %1950 = vperm.xlu0 %1949, %v1744
        %v1951 = vpop.permute.xlu0 %1950
        %1954 = vset.pattern.permute.xlu0 9
        %1955 = vperm.xlu0 %1954, %v1745
        %v1956 = vpop.permute.xlu0 %1955
        %1959 = vset.pattern.permute.xlu0 9
        %1960 = vperm.xlu0 %1959, %v1746
        %v1961 = vpop.permute.xlu0 %1960
        %1964 = vset.pattern.permute.xlu0 9
        %1965 = vperm.xlu0 %1964, %v1747
        %v1966 = vpop.permute.xlu0 %1965
        %1969 = vset.pattern.permute.xlu0 9
        %1970 = vperm.xlu0 %1969, %v1748
        %v1971 = vpop.permute.xlu0 %1970
        %1974 = vset.pattern.permute.xlu0 9
        %1975 = vperm.xlu0 %1974, %v1749
        %v1976 = vpop.permute.xlu0 %1975
        %1979 = vset.pattern.permute.xlu0 9
        %1980 = vperm.xlu0 %1979, %v1750
        %v1981 = vpop.permute.xlu0 %1980
        %1984 = vset.pattern.permute.xlu0 9
        %1985 = vperm.xlu0 %1984, %v1751
        %v1986 = vpop.permute.xlu0 %1985
        %1989 = vset.pattern.permute.xlu0 9
        %1990 = vperm.xlu0 %1989, %v1752
        %v1991 = vpop.permute.xlu0 %1990
        %1994 = vset.pattern.permute.xlu0 9
        %1995 = vperm.xlu0 %1994, %v1753
        %v1996 = vpop.permute.xlu0 %1995
        %1999 = vset.pattern.permute.xlu0 9
        %2000 = vperm.xlu0 %1999, %v1754
        %v2001 = vpop.permute.xlu0 %2000
        %2004 = vset.pattern.permute.xlu0 9
        %2005 = vperm.xlu0 %2004, %v1755
        %v2006 = vpop.permute.xlu0 %2005
        %2009 = vset.pattern.permute.xlu0 9
        %2010 = vperm.xlu0 %2009, %v1756
        %v2011 = vpop.permute.xlu0 %2010
        %2014 = vset.pattern.permute.xlu0 9
        %2015 = vperm.xlu0 %2014, %v1757
        %v2016 = vpop.permute.xlu0 %2015
        %2019 = vset.pattern.permute.xlu0 9
        %2020 = vperm.xlu0 %2019, %v1758
        %v2021 = vpop.permute.xlu0 %2020
        %v2023 = vmul.f32 %v1891, %v1946
        %v2024 = vmul.f32 %v1893, %v1951
        %v2025 = vmul.f32 %v1895, %v1956
        %v2026 = vmul.f32 %v1897, %v1961
        %v2027 = vmul.f32 %v1899, %v1966
        %v2028 = vmul.f32 %v1901, %v1971
        %v2029 = vmul.f32 %v1903, %v1976
        %v2030 = vmul.f32 %v1905, %v1981
        %v2031 = vmul.f32 %v1907, %v1986
        %v2032 = vmul.f32 %v1909, %v1991
        %v2033 = vmul.f32 %v1911, %v1996
        %v2034 = vmul.f32 %v1913, %v2001
        %v2035 = vmul.f32 %v1915, %v2006
        %v2036 = vmul.f32 %v1917, %v2011
        %v2037 = vmul.f32 %v1919, %v2016
        %v2038 = vmul.f32 %v1921, %v2021
        %v2039 = vadd.f32 %v2023, %v2024
        %v2040 = vadd.f32 %v2039, %v2025
        %v2041 = vadd.f32 %v2040, %v2026
        %v2042 = vadd.f32 %v2041, %v2027
        %v2043 = vadd.f32 %v2042, %v2028
        %v2044 = vadd.f32 %v2043, %v2029
        %v2045 = vadd.f32 %v2044, %v2030
        %v2046 = vadd.f32 %v2045, %v2031
        %v2047 = vadd.f32 %v2046, %v2032
        %v2048 = vadd.f32 %v2047, %v2033
        %v2049 = vadd.f32 %v2048, %v2034
        %v2050 = vadd.f32 %v2049, %v2035
        %v2051 = vadd.f32 %v2050, %v2036
        %v2052 = vadd.f32 %v2051, %v2037
        %v2053 = vadd.f32 %v2052, %v2038
        %v2054 = vrot.slane %v2053, 4
        %v2055 = vadd.f32 %v2053, %v2054
        %v2056 = vrot.slane %v2055, 2
        %v2057 = vadd.f32 %v2055, %v2056
        %v2058 = vrot.slane %v2057, 1
        %v2059 = vadd.f32 %v2057, %v2058
        %v2060 = vrcp.pop %v1942
        %v2061 = vmul.f32 %v2059, %v2060
        %2062 = vset.pattern.permute.xlu0 1
        %2063 = vperm.xlu0 %2062, %v1045
        %v2064 = vpop.permute.xlu0 %2063
        %v2066 = vmul.f32 %v555, %v2064
        %2067 = vset.pattern.permute.xlu0 1
        %2068 = vperm.xlu0 %2067, %v1082
        %v2069 = vpop.permute.xlu0 %2068
        %v2071 = vmul.f32 %v555, %v2069
        %v2072 = vsel %vm1453, %v2066, %v2071
        %2073 = vset.pattern.permute.xlu0 1
        %2074 = vperm.xlu0 %2073, %v1727
        %v2075 = vpop.permute.xlu0 %2074
        %2077 = vset.pattern.permute.xlu0 1
        %2078 = vperm.xlu0 %2077, %v1728
        %v2079 = vpop.permute.xlu0 %2078
        %2081 = vset.pattern.permute.xlu0 1
        %2082 = vperm.xlu0 %2081, %v1729
        %v2083 = vpop.permute.xlu0 %2082
        %2085 = vset.pattern.permute.xlu0 1
        %2086 = vperm.xlu0 %2085, %v1730
        %v2087 = vpop.permute.xlu0 %2086
        %2089 = vset.pattern.permute.xlu0 1
        %2090 = vperm.xlu0 %2089, %v1731
        %v2091 = vpop.permute.xlu0 %2090
        %2093 = vset.pattern.permute.xlu0 1
        %2094 = vperm.xlu0 %2093, %v1732
        %v2095 = vpop.permute.xlu0 %2094
        %2097 = vset.pattern.permute.xlu0 1
        %2098 = vperm.xlu0 %2097, %v1733
        %v2099 = vpop.permute.xlu0 %2098
        %2101 = vset.pattern.permute.xlu0 1
        %2102 = vperm.xlu0 %2101, %v1734
        %v2103 = vpop.permute.xlu0 %2102
        %2105 = vset.pattern.permute.xlu0 1
        %2106 = vperm.xlu0 %2105, %v1735
        %v2107 = vpop.permute.xlu0 %2106
        %2109 = vset.pattern.permute.xlu0 1
        %2110 = vperm.xlu0 %2109, %v1736
        %v2111 = vpop.permute.xlu0 %2110
        %2113 = vset.pattern.permute.xlu0 1
        %2114 = vperm.xlu0 %2113, %v1737
        %v2115 = vpop.permute.xlu0 %2114
        %2117 = vset.pattern.permute.xlu0 1
        %2118 = vperm.xlu0 %2117, %v1738
        %v2119 = vpop.permute.xlu0 %2118
        %2121 = vset.pattern.permute.xlu0 1
        %2122 = vperm.xlu0 %2121, %v1739
        %v2123 = vpop.permute.xlu0 %2122
        %2125 = vset.pattern.permute.xlu0 1
        %2126 = vperm.xlu0 %2125, %v1740
        %v2127 = vpop.permute.xlu0 %2126
        %2129 = vset.pattern.permute.xlu0 1
        %2130 = vperm.xlu0 %2129, %v1741
        %v2131 = vpop.permute.xlu0 %2130
        %2133 = vset.pattern.permute.xlu0 1
        %2134 = vperm.xlu0 %2133, %v1742
        %v2135 = vpop.permute.xlu0 %2134
        %v2137 = vlaneseq
        %v2138 = vshrl.u32 %v2137, 7
        %v2139 = vsub.s32 1, %v2138
        %v2140 = vrot.slane %v555, %v2139
        %v2141 = vmul.f32 %v2075, %v2140
        %v2142 = vmul.f32 %v2079, %v2140
        %v2143 = vmul.f32 %v2083, %v2140
        %v2144 = vmul.f32 %v2087, %v2140
        %v2145 = vmul.f32 %v2091, %v2140
        %v2146 = vmul.f32 %v2095, %v2140
        %v2147 = vmul.f32 %v2099, %v2140
        %v2148 = vmul.f32 %v2103, %v2140
        %v2149 = vmul.f32 %v2107, %v2140
        %v2150 = vmul.f32 %v2111, %v2140
        %v2151 = vmul.f32 %v2115, %v2140
        %v2152 = vmul.f32 %v2119, %v2140
        %v2153 = vmul.f32 %v2123, %v2140
        %v2154 = vmul.f32 %v2127, %v2140
        %v2155 = vmul.f32 %v2131, %v2140
        %v2156 = vmul.f32 %v2135, %v2140
        %v2157 = vlaneseq
        %v2158 = vshrl.u32 %v2157, 7
        %v2159 = vsub.s32 1, %v2158
        %v2160 = vrot.slane %v2072, %v2159
        %v2161 = vsub.f32 %v2141, %v2160
        %v2162 = vsub.f32 %v2142, %v2160
        %v2163 = vsub.f32 %v2143, %v2160
        %v2164 = vsub.f32 %v2144, %v2160
        %v2165 = vsub.f32 %v2145, %v2160
        %v2166 = vsub.f32 %v2146, %v2160
        %v2167 = vsub.f32 %v2147, %v2160
        %v2168 = vsub.f32 %v2148, %v2160
        %v2169 = vsub.f32 %v2149, %v2160
        %v2170 = vsub.f32 %v2150, %v2160
        %v2171 = vsub.f32 %v2151, %v2160
        %v2172 = vsub.f32 %v2152, %v2160
        %v2173 = vsub.f32 %v2153, %v2160
        %v2174 = vsub.f32 %v2154, %v2160
        %v2175 = vsub.f32 %v2155, %v2160
        %v2176 = vsub.f32 %v2156, %v2160
        %v2177 = vmul.f32 %v2161, 1.442695
        %v2178 = vpow.pop %v2177
        %v2179 = vmul.f32 %v2162, 1.442695
        %v2180 = vpow.pop %v2179
        %v2181 = vmul.f32 %v2163, 1.442695
        %v2182 = vpow.pop %v2181
        %v2183 = vmul.f32 %v2164, 1.442695
        %v2184 = vpow.pop %v2183
        %v2185 = vmul.f32 %v2165, 1.442695
        %v2186 = vpow.pop %v2185
        %v2187 = vmul.f32 %v2166, 1.442695
        %v2188 = vpow.pop %v2187
        %v2189 = vmul.f32 %v2167, 1.442695
        %v2190 = vpow.pop %v2189
        %v2191 = vmul.f32 %v2168, 1.442695
        %v2192 = vpow.pop %v2191
        %v2193 = vmul.f32 %v2169, 1.442695
        %v2194 = vpow.pop %v2193
        %v2195 = vmul.f32 %v2170, 1.442695
        %v2196 = vpow.pop %v2195
        %v2197 = vmul.f32 %v2171, 1.442695
        %v2198 = vpow.pop %v2197
        %v2199 = vmul.f32 %v2172, 1.442695
        %v2200 = vpow.pop %v2199
        %v2201 = vmul.f32 %v2173, 1.442695
        %v2202 = vpow.pop %v2201
        %v2203 = vmul.f32 %v2174, 1.442695
        %v2204 = vpow.pop %v2203
        %v2205 = vmul.f32 %v2175, 1.442695
        %v2206 = vpow.pop %v2205
        %v2207 = vmul.f32 %v2176, 1.442695
        %v2208 = vpow.pop %v2207
        %v2209 = vadd.f32 %v2178, %v2180
        %v2210 = vadd.f32 %v2209, %v2182
        %v2211 = vadd.f32 %v2210, %v2184
        %v2212 = vadd.f32 %v2211, %v2186
        %v2213 = vadd.f32 %v2212, %v2188
        %v2214 = vadd.f32 %v2213, %v2190
        %v2215 = vadd.f32 %v2214, %v2192
        %v2216 = vadd.f32 %v2215, %v2194
        %v2217 = vadd.f32 %v2216, %v2196
        %v2218 = vadd.f32 %v2217, %v2198
        %v2219 = vadd.f32 %v2218, %v2200
        %v2220 = vadd.f32 %v2219, %v2202
        %v2221 = vadd.f32 %v2220, %v2204
        %v2222 = vadd.f32 %v2221, %v2206
        %v2223 = vadd.f32 %v2222, %v2208
        %v2224 = vrot.slane %v2223, 4
        %v2225 = vadd.f32 %v2223, %v2224
        %v2226 = vrot.slane %v2225, 2
        %v2227 = vadd.f32 %v2225, %v2226
        %v2228 = vrot.slane %v2227, 1
        %v2229 = vadd.f32 %v2227, %v2228
        %2230 = vset.pattern.permute.xlu0 1
        %2231 = vperm.xlu0 %2230, %v1743
        %v2232 = vpop.permute.xlu0 %2231
        %2234 = vset.pattern.permute.xlu0 1
        %2235 = vperm.xlu0 %2234, %v1744
        %v2236 = vpop.permute.xlu0 %2235
        %2238 = vset.pattern.permute.xlu0 1
        %2239 = vperm.xlu0 %2238, %v1745
        %v2240 = vpop.permute.xlu0 %2239
        %2242 = vset.pattern.permute.xlu0 1
        %2243 = vperm.xlu0 %2242, %v1746
        %v2244 = vpop.permute.xlu0 %2243
        %2246 = vset.pattern.permute.xlu0 1
        %2247 = vperm.xlu0 %2246, %v1747
        %v2248 = vpop.permute.xlu0 %2247
        %2250 = vset.pattern.permute.xlu0 1
        %2251 = vperm.xlu0 %2250, %v1748
        %v2252 = vpop.permute.xlu0 %2251
        %2254 = vset.pattern.permute.xlu0 1
        %2255 = vperm.xlu0 %2254, %v1749
        %v2256 = vpop.permute.xlu0 %2255
        %2258 = vset.pattern.permute.xlu0 1
        %2259 = vperm.xlu0 %2258, %v1750
        %v2260 = vpop.permute.xlu0 %2259
        %2262 = vset.pattern.permute.xlu0 1
        %2263 = vperm.xlu0 %2262, %v1751
        %v2264 = vpop.permute.xlu0 %2263
        %2266 = vset.pattern.permute.xlu0 1
        %2267 = vperm.xlu0 %2266, %v1752
        %v2268 = vpop.permute.xlu0 %2267
        %2270 = vset.pattern.permute.xlu0 1
        %2271 = vperm.xlu0 %2270, %v1753
        %v2272 = vpop.permute.xlu0 %2271
        %2274 = vset.pattern.permute.xlu0 1
        %2275 = vperm.xlu0 %2274, %v1754
        %v2276 = vpop.permute.xlu0 %2275
        %2278 = vset.pattern.permute.xlu0 1
        %2279 = vperm.xlu0 %2278, %v1755
        %v2280 = vpop.permute.xlu0 %2279
        %2282 = vset.pattern.permute.xlu0 1
        %2283 = vperm.xlu0 %2282, %v1756
        %v2284 = vpop.permute.xlu0 %2283
        %2286 = vset.pattern.permute.xlu0 1
        %2287 = vperm.xlu0 %2286, %v1757
        %v2288 = vpop.permute.xlu0 %2287
        %2290 = vset.pattern.permute.xlu0 1
        %2291 = vperm.xlu0 %2290, %v1758
        %v2292 = vpop.permute.xlu0 %2291
        %v2294 = vmul.f32 %v2178, %v2232
        %v2295 = vmul.f32 %v2180, %v2236
        %v2296 = vmul.f32 %v2182, %v2240
        %v2297 = vmul.f32 %v2184, %v2244
        %v2298 = vmul.f32 %v2186, %v2248
        %v2299 = vmul.f32 %v2188, %v2252
        %v2300 = vmul.f32 %v2190, %v2256
        %v2301 = vmul.f32 %v2192, %v2260
        %v2302 = vmul.f32 %v2194, %v2264
        %v2303 = vmul.f32 %v2196, %v2268
        %v2304 = vmul.f32 %v2198, %v2272
        %v2305 = vmul.f32 %v2200, %v2276
        %v2306 = vmul.f32 %v2202, %v2280
        %v2307 = vmul.f32 %v2204, %v2284
        %v2308 = vmul.f32 %v2206, %v2288
        %v2309 = vmul.f32 %v2208, %v2292
        %v2310 = vadd.f32 %v2294, %v2295
        %v2311 = vadd.f32 %v2310, %v2296
        %v2312 = vadd.f32 %v2311, %v2297
        %v2313 = vadd.f32 %v2312, %v2298
        %v2314 = vadd.f32 %v2313, %v2299
        %v2315 = vadd.f32 %v2314, %v2300
        %v2316 = vadd.f32 %v2315, %v2301
        %v2317 = vadd.f32 %v2316, %v2302
        %v2318 = vadd.f32 %v2317, %v2303
        %v2319 = vadd.f32 %v2318, %v2304
        %v2320 = vadd.f32 %v2319, %v2305
        %v2321 = vadd.f32 %v2320, %v2306
        %v2322 = vadd.f32 %v2321, %v2307
        %v2323 = vadd.f32 %v2322, %v2308
        %v2324 = vadd.f32 %v2323, %v2309
        %v2325 = vrot.slane %v2324, 4
        %v2326 = vadd.f32 %v2324, %v2325
        %v2327 = vrot.slane %v2326, 2
        %v2328 = vadd.f32 %v2326, %v2327
        %v2329 = vrot.slane %v2328, 1
        %v2330 = vadd.f32 %v2328, %v2329
        %v2331 = vrcp.pop %v2229
        %v2332 = vmul.f32 %v2330, %v2331
        %v2333 = vmul.f32 %v2061, %v2332
        %2334 = vst [vmem:[#allocation2 + $0x1] sm:$0x1] %v2333
        %v2335 = vld [vmem:[#allocation3] sm:$0xff]
        %v2336 = vld [vmem:[#allocation3 + $0x8] sm:$0xff]
        %v2337 = vld [vmem:[#allocation3 + $0x10] sm:$0xff]
        %v2338 = vld [vmem:[#allocation3 + $0x18] sm:$0xff]
        %v2339 = vld [vmem:[#allocation3 + $0x20] sm:$0xff]
        %v2340 = vld [vmem:[#allocation3 + $0x28] sm:$0xff]
        %v2341 = vld [vmem:[#allocation3 + $0x30] sm:$0xff]
        %v2342 = vld [vmem:[#allocation3 + $0x38] sm:$0xff]
        %v2343 = vld [vmem:[#allocation3 + $0x40] sm:$0xff]
        %v2344 = vld [vmem:[#allocation3 + $0x48] sm:$0xff]
        %v2345 = vld [vmem:[#allocation3 + $0x50] sm:$0xff]
        %v2346 = vld [vmem:[#allocation3 + $0x58] sm:$0xff]
        %v2347 = vld [vmem:[#allocation3 + $0x60] sm:$0xff]
        %v2348 = vld [vmem:[#allocation3 + $0x68] sm:$0xff]
        %v2349 = vld [vmem:[#allocation3 + $0x70] sm:$0xff]
        %v2350 = vld [vmem:[#allocation3 + $0x78] sm:$0xff]
        %v2351 = vld [vmem:[#allocation4] sm:$0xff]
        %v2352 = vld [vmem:[#allocation4 + $0x8] sm:$0xff]
        %v2353 = vld [vmem:[#allocation4 + $0x10] sm:$0xff]
        %v2354 = vld [vmem:[#allocation4 + $0x18] sm:$0xff]
        %v2355 = vld [vmem:[#allocation4 + $0x20] sm:$0xff]
        %v2356 = vld [vmem:[#allocation4 + $0x28] sm:$0xff]
        %v2357 = vld [vmem:[#allocation4 + $0x30] sm:$0xff]
        %v2358 = vld [vmem:[#allocation4 + $0x38] sm:$0xff]
        %v2359 = vld [vmem:[#allocation4 + $0x40] sm:$0xff]
        %v2360 = vld [vmem:[#allocation4 + $0x48] sm:$0xff]
        %v2361 = vld [vmem:[#allocation4 + $0x50] sm:$0xff]
        %v2362 = vld [vmem:[#allocation4 + $0x58] sm:$0xff]
        %v2363 = vld [vmem:[#allocation4 + $0x60] sm:$0xff]
        %v2364 = vld [vmem:[#allocation4 + $0x68] sm:$0xff]
        %v2365 = vld [vmem:[#allocation4 + $0x70] sm:$0xff]
        %v2366 = vld [vmem:[#allocation4 + $0x78] sm:$0xff]
        %2367 = vset.pattern.permute.xlu0 10
        %2368 = vperm.xlu0 %2367, %v1045
        %v2369 = vpop.permute.xlu0 %2368
        %v2371 = vmul.f32 %v550, %v2369
        %2372 = vset.pattern.permute.xlu0 10
        %2373 = vperm.xlu0 %2372, %v1082
        %v2374 = vpop.permute.xlu0 %2373
        %v2376 = vmul.f32 %v550, %v2374
        %v2377 = vsel %vm1147, %v2371, %v2376
        %2379 = vset.pattern.permute.xlu0 10
        %2380 = vperm.xlu0 %2379, %v2335
        %v2381 = vpop.permute.xlu0 %2380
        %2384 = vset.pattern.permute.xlu0 10
        %2385 = vperm.xlu0 %2384, %v2336
        %v2386 = vpop.permute.xlu0 %2385
        %2389 = vset.pattern.permute.xlu0 10
        %2390 = vperm.xlu0 %2389, %v2337
        %v2391 = vpop.permute.xlu0 %2390
        %2394 = vset.pattern.permute.xlu0 10
        %2395 = vperm.xlu0 %2394, %v2338
        %v2396 = vpop.permute.xlu0 %2395
        %2399 = vset.pattern.permute.xlu0 10
        %2400 = vperm.xlu0 %2399, %v2339
        %v2401 = vpop.permute.xlu0 %2400
        %2404 = vset.pattern.permute.xlu0 10
        %2405 = vperm.xlu0 %2404, %v2340
        %v2406 = vpop.permute.xlu0 %2405
        %2409 = vset.pattern.permute.xlu0 10
        %2410 = vperm.xlu0 %2409, %v2341
        %v2411 = vpop.permute.xlu0 %2410
        %2414 = vset.pattern.permute.xlu0 10
        %2415 = vperm.xlu0 %2414, %v2342
        %v2416 = vpop.permute.xlu0 %2415
        %2419 = vset.pattern.permute.xlu0 10
        %2420 = vperm.xlu0 %2419, %v2343
        %v2421 = vpop.permute.xlu0 %2420
        %2424 = vset.pattern.permute.xlu0 10
        %2425 = vperm.xlu0 %2424, %v2344
        %v2426 = vpop.permute.xlu0 %2425
        %2429 = vset.pattern.permute.xlu0 10
        %2430 = vperm.xlu0 %2429, %v2345
        %v2431 = vpop.permute.xlu0 %2430
        %2434 = vset.pattern.permute.xlu0 10
        %2435 = vperm.xlu0 %2434, %v2346
        %v2436 = vpop.permute.xlu0 %2435
        %2439 = vset.pattern.permute.xlu0 10
        %2440 = vperm.xlu0 %2439, %v2347
        %v2441 = vpop.permute.xlu0 %2440
        %2444 = vset.pattern.permute.xlu0 10
        %2445 = vperm.xlu0 %2444, %v2348
        %v2446 = vpop.permute.xlu0 %2445
        %2449 = vset.pattern.permute.xlu0 10
        %2450 = vperm.xlu0 %2449, %v2349
        %v2451 = vpop.permute.xlu0 %2450
        %2454 = vset.pattern.permute.xlu0 10
        %2455 = vperm.xlu0 %2454, %v2350
        %v2456 = vpop.permute.xlu0 %2455
        %v2458 = vlaneseq
        %v2459 = vshrl.u32 %v2458, 7
        %v2460 = vsub.s32 2, %v2459
        %v2461 = vrot.slane %v550, %v2460
        %v2462 = vmul.f32 %v2381, %v2461
        %v2463 = vmul.f32 %v2386, %v2461
        %v2464 = vmul.f32 %v2391, %v2461
        %v2465 = vmul.f32 %v2396, %v2461
        %v2466 = vmul.f32 %v2401, %v2461
        %v2467 = vmul.f32 %v2406, %v2461
        %v2468 = vmul.f32 %v2411, %v2461
        %v2469 = vmul.f32 %v2416, %v2461
        %v2470 = vmul.f32 %v2421, %v2461
        %v2471 = vmul.f32 %v2426, %v2461
        %v2472 = vmul.f32 %v2431, %v2461
        %v2473 = vmul.f32 %v2436, %v2461
        %v2474 = vmul.f32 %v2441, %v2461
        %v2475 = vmul.f32 %v2446, %v2461
        %v2476 = vmul.f32 %v2451, %v2461
        %v2477 = vmul.f32 %v2456, %v2461
        %v2478 = vlaneseq
        %v2479 = vshrl.u32 %v2478, 7
        %v2480 = vsub.s32 2, %v2479
        %v2481 = vrot.slane %v2377, %v2480
        %v2482 = vsub.f32 %v2462, %v2481
        %v2483 = vsub.f32 %v2463, %v2481
        %v2484 = vsub.f32 %v2464, %v2481
        %v2485 = vsub.f32 %v2465, %v2481
        %v2486 = vsub.f32 %v2466, %v2481
        %v2487 = vsub.f32 %v2467, %v2481
        %v2488 = vsub.f32 %v2468, %v2481
        %v2489 = vsub.f32 %v2469, %v2481
        %v2490 = vsub.f32 %v2470, %v2481
        %v2491 = vsub.f32 %v2471, %v2481
        %v2492 = vsub.f32 %v2472, %v2481
        %v2493 = vsub.f32 %v2473, %v2481
        %v2494 = vsub.f32 %v2474, %v2481
        %v2495 = vsub.f32 %v2475, %v2481
        %v2496 = vsub.f32 %v2476, %v2481
        %v2497 = vsub.f32 %v2477, %v2481
        %v2498 = vmul.f32 %v2482, 1.442695
        %v2499 = vpow.pop %v2498
        %v2500 = vmul.f32 %v2483, 1.442695
        %v2501 = vpow.pop %v2500
        %v2502 = vmul.f32 %v2484, 1.442695
        %v2503 = vpow.pop %v2502
        %v2504 = vmul.f32 %v2485, 1.442695
        %v2505 = vpow.pop %v2504
        %v2506 = vmul.f32 %v2486, 1.442695
        %v2507 = vpow.pop %v2506
        %v2508 = vmul.f32 %v2487, 1.442695
        %v2509 = vpow.pop %v2508
        %v2510 = vmul.f32 %v2488, 1.442695
        %v2511 = vpow.pop %v2510
        %v2512 = vmul.f32 %v2489, 1.442695
        %v2513 = vpow.pop %v2512
        %v2514 = vmul.f32 %v2490, 1.442695
        %v2515 = vpow.pop %v2514
        %v2516 = vmul.f32 %v2491, 1.442695
        %v2517 = vpow.pop %v2516
        %v2518 = vmul.f32 %v2492, 1.442695
        %v2519 = vpow.pop %v2518
        %v2520 = vmul.f32 %v2493, 1.442695
        %v2521 = vpow.pop %v2520
        %v2522 = vmul.f32 %v2494, 1.442695
        %v2523 = vpow.pop %v2522
        %v2524 = vmul.f32 %v2495, 1.442695
        %v2525 = vpow.pop %v2524
        %v2526 = vmul.f32 %v2496, 1.442695
        %v2527 = vpow.pop %v2526
        %v2528 = vmul.f32 %v2497, 1.442695
        %v2529 = vpow.pop %v2528
        %v2530 = vadd.f32 %v2499, %v2501
        %v2531 = vadd.f32 %v2530, %v2503
        %v2532 = vadd.f32 %v2531, %v2505
        %v2533 = vadd.f32 %v2532, %v2507
        %v2534 = vadd.f32 %v2533, %v2509
        %v2535 = vadd.f32 %v2534, %v2511
        %v2536 = vadd.f32 %v2535, %v2513
        %v2537 = vadd.f32 %v2536, %v2515
        %v2538 = vadd.f32 %v2537, %v2517
        %v2539 = vadd.f32 %v2538, %v2519
        %v2540 = vadd.f32 %v2539, %v2521
        %v2541 = vadd.f32 %v2540, %v2523
        %v2542 = vadd.f32 %v2541, %v2525
        %v2543 = vadd.f32 %v2542, %v2527
        %v2544 = vadd.f32 %v2543, %v2529
        %v2545 = vrot.slane %v2544, 4
        %v2546 = vadd.f32 %v2544, %v2545
        %v2547 = vrot.slane %v2546, 2
        %v2548 = vadd.f32 %v2546, %v2547
        %v2549 = vrot.slane %v2548, 1
        %v2550 = vadd.f32 %v2548, %v2549
        %2552 = vset.pattern.permute.xlu0 10
        %2553 = vperm.xlu0 %2552, %v2351
        %v2554 = vpop.permute.xlu0 %2553
        %2557 = vset.pattern.permute.xlu0 10
        %2558 = vperm.xlu0 %2557, %v2352
        %v2559 = vpop.permute.xlu0 %2558
        %2562 = vset.pattern.permute.xlu0 10
        %2563 = vperm.xlu0 %2562, %v2353
        %v2564 = vpop.permute.xlu0 %2563
        %2567 = vset.pattern.permute.xlu0 10
        %2568 = vperm.xlu0 %2567, %v2354
        %v2569 = vpop.permute.xlu0 %2568
        %2572 = vset.pattern.permute.xlu0 10
        %2573 = vperm.xlu0 %2572, %v2355
        %v2574 = vpop.permute.xlu0 %2573
        %2577 = vset.pattern.permute.xlu0 10
        %2578 = vperm.xlu0 %2577, %v2356
        %v2579 = vpop.permute.xlu0 %2578
        %2582 = vset.pattern.permute.xlu0 10
        %2583 = vperm.xlu0 %2582, %v2357
        %v2584 = vpop.permute.xlu0 %2583
        %2587 = vset.pattern.permute.xlu0 10
        %2588 = vperm.xlu0 %2587, %v2358
        %v2589 = vpop.permute.xlu0 %2588
        %2592 = vset.pattern.permute.xlu0 10
        %2593 = vperm.xlu0 %2592, %v2359
        %v2594 = vpop.permute.xlu0 %2593
        %2597 = vset.pattern.permute.xlu0 10
        %2598 = vperm.xlu0 %2597, %v2360
        %v2599 = vpop.permute.xlu0 %2598
        %2602 = vset.pattern.permute.xlu0 10
        %2603 = vperm.xlu0 %2602, %v2361
        %v2604 = vpop.permute.xlu0 %2603
        %2607 = vset.pattern.permute.xlu0 10
        %2608 = vperm.xlu0 %2607, %v2362
        %v2609 = vpop.permute.xlu0 %2608
        %2612 = vset.pattern.permute.xlu0 10
        %2613 = vperm.xlu0 %2612, %v2363
        %v2614 = vpop.permute.xlu0 %2613
        %2617 = vset.pattern.permute.xlu0 10
        %2618 = vperm.xlu0 %2617, %v2364
        %v2619 = vpop.permute.xlu0 %2618
        %2622 = vset.pattern.permute.xlu0 10
        %2623 = vperm.xlu0 %2622, %v2365
        %v2624 = vpop.permute.xlu0 %2623
        %2627 = vset.pattern.permute.xlu0 10
        %2628 = vperm.xlu0 %2627, %v2366
        %v2629 = vpop.permute.xlu0 %2628
        %v2631 = vmul.f32 %v2499, %v2554
        %v2632 = vmul.f32 %v2501, %v2559
        %v2633 = vmul.f32 %v2503, %v2564
        %v2634 = vmul.f32 %v2505, %v2569
        %v2635 = vmul.f32 %v2507, %v2574
        %v2636 = vmul.f32 %v2509, %v2579
        %v2637 = vmul.f32 %v2511, %v2584
        %v2638 = vmul.f32 %v2513, %v2589
        %v2639 = vmul.f32 %v2515, %v2594
        %v2640 = vmul.f32 %v2517, %v2599
        %v2641 = vmul.f32 %v2519, %v2604
        %v2642 = vmul.f32 %v2521, %v2609
        %v2643 = vmul.f32 %v2523, %v2614
        %v2644 = vmul.f32 %v2525, %v2619
        %v2645 = vmul.f32 %v2527, %v2624
        %v2646 = vmul.f32 %v2529, %v2629
        %v2647 = vadd.f32 %v2631, %v2632
        %v2648 = vadd.f32 %v2647, %v2633
        %v2649 = vadd.f32 %v2648, %v2634
        %v2650 = vadd.f32 %v2649, %v2635
        %v2651 = vadd.f32 %v2650, %v2636
        %v2652 = vadd.f32 %v2651, %v2637
        %v2653 = vadd.f32 %v2652, %v2638
        %v2654 = vadd.f32 %v2653, %v2639
        %v2655 = vadd.f32 %v2654, %v2640
        %v2656 = vadd.f32 %v2655, %v2641
        %v2657 = vadd.f32 %v2656, %v2642
        %v2658 = vadd.f32 %v2657, %v2643
        %v2659 = vadd.f32 %v2658, %v2644
        %v2660 = vadd.f32 %v2659, %v2645
        %v2661 = vadd.f32 %v2660, %v2646
        %v2662 = vrot.slane %v2661, 4
        %v2663 = vadd.f32 %v2661, %v2662
        %v2664 = vrot.slane %v2663, 2
        %v2665 = vadd.f32 %v2663, %v2664
        %v2666 = vrot.slane %v2665, 1
        %v2667 = vadd.f32 %v2665, %v2666
        %v2668 = vrcp.pop %v2550
        %v2669 = vmul.f32 %v2667, %v2668
        %2670 = vset.pattern.permute.xlu0 2
        %2671 = vperm.xlu0 %2670, %v1045
        %v2672 = vpop.permute.xlu0 %2671
        %v2674 = vmul.f32 %v555, %v2672
        %2675 = vset.pattern.permute.xlu0 2
        %2676 = vperm.xlu0 %2675, %v1082
        %v2677 = vpop.permute.xlu0 %2676
        %v2679 = vmul.f32 %v555, %v2677
        %v2680 = vsel %vm1453, %v2674, %v2679
        %2681 = vset.pattern.permute.xlu0 2
        %2682 = vperm.xlu0 %2681, %v2335
        %v2683 = vpop.permute.xlu0 %2682
        %2685 = vset.pattern.permute.xlu0 2
        %2686 = vperm.xlu0 %2685, %v2336
        %v2687 = vpop.permute.xlu0 %2686
        %2689 = vset.pattern.permute.xlu0 2
        %2690 = vperm.xlu0 %2689, %v2337
        %v2691 = vpop.permute.xlu0 %2690
        %2693 = vset.pattern.permute.xlu0 2
        %2694 = vperm.xlu0 %2693, %v2338
        %v2695 = vpop.permute.xlu0 %2694
        %2697 = vset.pattern.permute.xlu0 2
        %2698 = vperm.xlu0 %2697, %v2339
        %v2699 = vpop.permute.xlu0 %2698
        %2701 = vset.pattern.permute.xlu0 2
        %2702 = vperm.xlu0 %2701, %v2340
        %v2703 = vpop.permute.xlu0 %2702
        %2705 = vset.pattern.permute.xlu0 2
        %2706 = vperm.xlu0 %2705, %v2341
        %v2707 = vpop.permute.xlu0 %2706
        %2709 = vset.pattern.permute.xlu0 2
        %2710 = vperm.xlu0 %2709, %v2342
        %v2711 = vpop.permute.xlu0 %2710
        %2713 = vset.pattern.permute.xlu0 2
        %2714 = vperm.xlu0 %2713, %v2343
        %v2715 = vpop.permute.xlu0 %2714
        %2717 = vset.pattern.permute.xlu0 2
        %2718 = vperm.xlu0 %2717, %v2344
        %v2719 = vpop.permute.xlu0 %2718
        %2721 = vset.pattern.permute.xlu0 2
        %2722 = vperm.xlu0 %2721, %v2345
        %v2723 = vpop.permute.xlu0 %2722
        %2725 = vset.pattern.permute.xlu0 2
        %2726 = vperm.xlu0 %2725, %v2346
        %v2727 = vpop.permute.xlu0 %2726
        %2729 = vset.pattern.permute.xlu0 2
        %2730 = vperm.xlu0 %2729, %v2347
        %v2731 = vpop.permute.xlu0 %2730
        %2733 = vset.pattern.permute.xlu0 2
        %2734 = vperm.xlu0 %2733, %v2348
        %v2735 = vpop.permute.xlu0 %2734
        %2737 = vset.pattern.permute.xlu0 2
        %2738 = vperm.xlu0 %2737, %v2349
        %v2739 = vpop.permute.xlu0 %2738
        %2741 = vset.pattern.permute.xlu0 2
        %2742 = vperm.xlu0 %2741, %v2350
        %v2743 = vpop.permute.xlu0 %2742
        %v2745 = vlaneseq
        %v2746 = vshrl.u32 %v2745, 7
        %v2747 = vsub.s32 2, %v2746
        %v2748 = vrot.slane %v555, %v2747
        %v2749 = vmul.f32 %v2683, %v2748
        %v2750 = vmul.f32 %v2687, %v2748
        %v2751 = vmul.f32 %v2691, %v2748
        %v2752 = vmul.f32 %v2695, %v2748
        %v2753 = vmul.f32 %v2699, %v2748
        %v2754 = vmul.f32 %v2703, %v2748
        %v2755 = vmul.f32 %v2707, %v2748
        %v2756 = vmul.f32 %v2711, %v2748
        %v2757 = vmul.f32 %v2715, %v2748
        %v2758 = vmul.f32 %v2719, %v2748
        %v2759 = vmul.f32 %v2723, %v2748
        %v2760 = vmul.f32 %v2727, %v2748
        %v2761 = vmul.f32 %v2731, %v2748
        %v2762 = vmul.f32 %v2735, %v2748
        %v2763 = vmul.f32 %v2739, %v2748
        %v2764 = vmul.f32 %v2743, %v2748
        %v2765 = vlaneseq
        %v2766 = vshrl.u32 %v2765, 7
        %v2767 = vsub.s32 2, %v2766
        %v2768 = vrot.slane %v2680, %v2767
        %v2769 = vsub.f32 %v2749, %v2768
        %v2770 = vsub.f32 %v2750, %v2768
        %v2771 = vsub.f32 %v2751, %v2768
        %v2772 = vsub.f32 %v2752, %v2768
        %v2773 = vsub.f32 %v2753, %v2768
        %v2774 = vsub.f32 %v2754, %v2768
        %v2775 = vsub.f32 %v2755, %v2768
        %v2776 = vsub.f32 %v2756, %v2768
        %v2777 = vsub.f32 %v2757, %v2768
        %v2778 = vsub.f32 %v2758, %v2768
        %v2779 = vsub.f32 %v2759, %v2768
        %v2780 = vsub.f32 %v2760, %v2768
        %v2781 = vsub.f32 %v2761, %v2768
        %v2782 = vsub.f32 %v2762, %v2768
        %v2783 = vsub.f32 %v2763, %v2768
        %v2784 = vsub.f32 %v2764, %v2768
        %v2785 = vmul.f32 %v2769, 1.442695
        %v2786 = vpow.pop %v2785
        %v2787 = vmul.f32 %v2770, 1.442695
        %v2788 = vpow.pop %v2787
        %v2789 = vmul.f32 %v2771, 1.442695
        %v2790 = vpow.pop %v2789
        %v2791 = vmul.f32 %v2772, 1.442695
        %v2792 = vpow.pop %v2791
        %v2793 = vmul.f32 %v2773, 1.442695
        %v2794 = vpow.pop %v2793
        %v2795 = vmul.f32 %v2774, 1.442695
        %v2796 = vpow.pop %v2795
        %v2797 = vmul.f32 %v2775, 1.442695
        %v2798 = vpow.pop %v2797
        %v2799 = vmul.f32 %v2776, 1.442695
        %v2800 = vpow.pop %v2799
        %v2801 = vmul.f32 %v2777, 1.442695
        %v2802 = vpow.pop %v2801
        %v2803 = vmul.f32 %v2778, 1.442695
        %v2804 = vpow.pop %v2803
        %v2805 = vmul.f32 %v2779, 1.442695
        %v2806 = vpow.pop %v2805
        %v2807 = vmul.f32 %v2780, 1.442695
        %v2808 = vpow.pop %v2807
        %v2809 = vmul.f32 %v2781, 1.442695
        %v2810 = vpow.pop %v2809
        %v2811 = vmul.f32 %v2782, 1.442695
        %v2812 = vpow.pop %v2811
        %v2813 = vmul.f32 %v2783, 1.442695
        %v2814 = vpow.pop %v2813
        %v2815 = vmul.f32 %v2784, 1.442695
        %v2816 = vpow.pop %v2815
        %v2817 = vadd.f32 %v2786, %v2788
        %v2818 = vadd.f32 %v2817, %v2790
        %v2819 = vadd.f32 %v2818, %v2792
        %v2820 = vadd.f32 %v2819, %v2794
        %v2821 = vadd.f32 %v2820, %v2796
        %v2822 = vadd.f32 %v2821, %v2798
        %v2823 = vadd.f32 %v2822, %v2800
        %v2824 = vadd.f32 %v2823, %v2802
        %v2825 = vadd.f32 %v2824, %v2804
        %v2826 = vadd.f32 %v2825, %v2806
        %v2827 = vadd.f32 %v2826, %v2808
        %v2828 = vadd.f32 %v2827, %v2810
        %v2829 = vadd.f32 %v2828, %v2812
        %v2830 = vadd.f32 %v2829, %v2814
        %v2831 = vadd.f32 %v2830, %v2816
        %v2832 = vrot.slane %v2831, 4
        %v2833 = vadd.f32 %v2831, %v2832
        %v2834 = vrot.slane %v2833, 2
        %v2835 = vadd.f32 %v2833, %v2834
        %v2836 = vrot.slane %v2835, 1
        %v2837 = vadd.f32 %v2835, %v2836
        %2838 = vset.pattern.permute.xlu0 2
        %2839 = vperm.xlu0 %2838, %v2351
        %v2840 = vpop.permute.xlu0 %2839
        %2842 = vset.pattern.permute.xlu0 2
        %2843 = vperm.xlu0 %2842, %v2352
        %v2844 = vpop.permute.xlu0 %2843
        %2846 = vset.pattern.permute.xlu0 2
        %2847 = vperm.xlu0 %2846, %v2353
        %v2848 = vpop.permute.xlu0 %2847
        %2850 = vset.pattern.permute.xlu0 2
        %2851 = vperm.xlu0 %2850, %v2354
        %v2852 = vpop.permute.xlu0 %2851
        %2854 = vset.pattern.permute.xlu0 2
        %2855 = vperm.xlu0 %2854, %v2355
        %v2856 = vpop.permute.xlu0 %2855
        %2858 = vset.pattern.permute.xlu0 2
        %2859 = vperm.xlu0 %2858, %v2356
        %v2860 = vpop.permute.xlu0 %2859
        %2862 = vset.pattern.permute.xlu0 2
        %2863 = vperm.xlu0 %2862, %v2357
        %v2864 = vpop.permute.xlu0 %2863
        %2866 = vset.pattern.permute.xlu0 2
        %2867 = vperm.xlu0 %2866, %v2358
        %v2868 = vpop.permute.xlu0 %2867
        %2870 = vset.pattern.permute.xlu0 2
        %2871 = vperm.xlu0 %2870, %v2359
        %v2872 = vpop.permute.xlu0 %2871
        %2874 = vset.pattern.permute.xlu0 2
        %2875 = vperm.xlu0 %2874, %v2360
        %v2876 = vpop.permute.xlu0 %2875
        %2878 = vset.pattern.permute.xlu0 2
        %2879 = vperm.xlu0 %2878, %v2361
        %v2880 = vpop.permute.xlu0 %2879
        %2882 = vset.pattern.permute.xlu0 2
        %2883 = vperm.xlu0 %2882, %v2362
        %v2884 = vpop.permute.xlu0 %2883
        %2886 = vset.pattern.permute.xlu0 2
        %2887 = vperm.xlu0 %2886, %v2363
        %v2888 = vpop.permute.xlu0 %2887
        %2890 = vset.pattern.permute.xlu0 2
        %2891 = vperm.xlu0 %2890, %v2364
        %v2892 = vpop.permute.xlu0 %2891
        %2894 = vset.pattern.permute.xlu0 2
        %2895 = vperm.xlu0 %2894, %v2365
        %v2896 = vpop.permute.xlu0 %2895
        %2898 = vset.pattern.permute.xlu0 2
        %2899 = vperm.xlu0 %2898, %v2366
        %v2900 = vpop.permute.xlu0 %2899
        %v2902 = vmul.f32 %v2786, %v2840
        %v2903 = vmul.f32 %v2788, %v2844
        %v2904 = vmul.f32 %v2790, %v2848
        %v2905 = vmul.f32 %v2792, %v2852
        %v2906 = vmul.f32 %v2794, %v2856
        %v2907 = vmul.f32 %v2796, %v2860
        %v2908 = vmul.f32 %v2798, %v2864
        %v2909 = vmul.f32 %v2800, %v2868
        %v2910 = vmul.f32 %v2802, %v2872
        %v2911 = vmul.f32 %v2804, %v2876
        %v2912 = vmul.f32 %v2806, %v2880
        %v2913 = vmul.f32 %v2808, %v2884
        %v2914 = vmul.f32 %v2810, %v2888
        %v2915 = vmul.f32 %v2812, %v2892
        %v2916 = vmul.f32 %v2814, %v2896
        %v2917 = vmul.f32 %v2816, %v2900
        %v2918 = vadd.f32 %v2902, %v2903
        %v2919 = vadd.f32 %v2918, %v2904
        %v2920 = vadd.f32 %v2919, %v2905
        %v2921 = vadd.f32 %v2920, %v2906
        %v2922 = vadd.f32 %v2921, %v2907
        %v2923 = vadd.f32 %v2922, %v2908
        %v2924 = vadd.f32 %v2923, %v2909
        %v2925 = vadd.f32 %v2924, %v2910
        %v2926 = vadd.f32 %v2925, %v2911
        %v2927 = vadd.f32 %v2926, %v2912
        %v2928 = vadd.f32 %v2927, %v2913
        %v2929 = vadd.f32 %v2928, %v2914
        %v2930 = vadd.f32 %v2929, %v2915
        %v2931 = vadd.f32 %v2930, %v2916
        %v2932 = vadd.f32 %v2931, %v2917
        %v2933 = vrot.slane %v2932, 4
        %v2934 = vadd.f32 %v2932, %v2933
        %v2935 = vrot.slane %v2934, 2
        %v2936 = vadd.f32 %v2934, %v2935
        %v2937 = vrot.slane %v2936, 1
        %v2938 = vadd.f32 %v2936, %v2937
        %v2939 = vrcp.pop %v2837
        %v2940 = vmul.f32 %v2938, %v2939
        %v2941 = vmul.f32 %v2669, %v2940
        %2942 = vst [vmem:[#allocation2 + $0x2] sm:$0x1] %v2941
        %v2943 = vld [vmem:[#allocation3] sm:$0xff]
        %v2944 = vld [vmem:[#allocation3 + $0x8] sm:$0xff]
        %v2945 = vld [vmem:[#allocation3 + $0x10] sm:$0xff]
        %v2946 = vld [vmem:[#allocation3 + $0x18] sm:$0xff]
        %v2947 = vld [vmem:[#allocation3 + $0x20] sm:$0xff]
        %v2948 = vld [vmem:[#allocation3 + $0x28] sm:$0xff]
        %v2949 = vld [vmem:[#allocation3 + $0x30] sm:$0xff]
        %v2950 = vld [vmem:[#allocation3 + $0x38] sm:$0xff]
        %v2951 = vld [vmem:[#allocation3 + $0x40] sm:$0xff]
        %v2952 = vld [vmem:[#allocation3 + $0x48] sm:$0xff]
        %v2953 = vld [vmem:[#allocation3 + $0x50] sm:$0xff]
        %v2954 = vld [vmem:[#allocation3 + $0x58] sm:$0xff]
        %v2955 = vld [vmem:[#allocation3 + $0x60] sm:$0xff]
        %v2956 = vld [vmem:[#allocation3 + $0x68] sm:$0xff]
        %v2957 = vld [vmem:[#allocation3 + $0x70] sm:$0xff]
        %v2958 = vld [vmem:[#allocation3 + $0x78] sm:$0xff]
        %v2959 = vld [vmem:[#allocation4] sm:$0xff]
        %v2960 = vld [vmem:[#allocation4 + $0x8] sm:$0xff]
        %v2961 = vld [vmem:[#allocation4 + $0x10] sm:$0xff]
        %v2962 = vld [vmem:[#allocation4 + $0x18] sm:$0xff]
        %v2963 = vld [vmem:[#allocation4 + $0x20] sm:$0xff]
        %v2964 = vld [vmem:[#allocation4 + $0x28] sm:$0xff]
        %v2965 = vld [vmem:[#allocation4 + $0x30] sm:$0xff]
        %v2966 = vld [vmem:[#allocation4 + $0x38] sm:$0xff]
        %v2967 = vld [vmem:[#allocation4 + $0x40] sm:$0xff]
        %v2968 = vld [vmem:[#allocation4 + $0x48] sm:$0xff]
        %v2969 = vld [vmem:[#allocation4 + $0x50] sm:$0xff]
        %v2970 = vld [vmem:[#allocation4 + $0x58] sm:$0xff]
        %v2971 = vld [vmem:[#allocation4 + $0x60] sm:$0xff]
        %v2972 = vld [vmem:[#allocation4 + $0x68] sm:$0xff]
        %v2973 = vld [vmem:[#allocation4 + $0x70] sm:$0xff]
        %v2974 = vld [vmem:[#allocation4 + $0x78] sm:$0xff]
        %2975 = vset.pattern.permute.xlu0 11
        %2976 = vperm.xlu0 %2975, %v1045
        %v2977 = vpop.permute.xlu0 %2976
        %v2979 = vmul.f32 %v550, %v2977
        %2980 = vset.pattern.permute.xlu0 11
        %2981 = vperm.xlu0 %2980, %v1082
        %v2982 = vpop.permute.xlu0 %2981
        %v2984 = vmul.f32 %v550, %v2982
        %v2985 = vsel %vm1147, %v2979, %v2984
        %2987 = vset.pattern.permute.xlu0 11
        %2988 = vperm.xlu0 %2987, %v2943
        %v2989 = vpop.permute.xlu0 %2988
        %2992 = vset.pattern.permute.xlu0 11
        %2993 = vperm.xlu0 %2992, %v2944
        %v2994 = vpop.permute.xlu0 %2993
        %2997 = vset.pattern.permute.xlu0 11
        %2998 = vperm.xlu0 %2997, %v2945
        %v2999 = vpop.permute.xlu0 %2998
        %3002 = vset.pattern.permute.xlu0 11
        %3003 = vperm.xlu0 %3002, %v2946
        %v3004 = vpop.permute.xlu0 %3003
        %3007 = vset.pattern.permute.xlu0 11
        %3008 = vperm.xlu0 %3007, %v2947
        %v3009 = vpop.permute.xlu0 %3008
        %3012 = vset.pattern.permute.xlu0 11
        %3013 = vperm.xlu0 %3012, %v2948
        %v3014 = vpop.permute.xlu0 %3013
        %3017 = vset.pattern.permute.xlu0 11
        %3018 = vperm.xlu0 %3017, %v2949
        %v3019 = vpop.permute.xlu0 %3018
        %3022 = vset.pattern.permute.xlu0 11
        %3023 = vperm.xlu0 %3022, %v2950
        %v3024 = vpop.permute.xlu0 %3023
        %3027 = vset.pattern.permute.xlu0 11
        %3028 = vperm.xlu0 %3027, %v2951
        %v3029 = vpop.permute.xlu0 %3028
        %3032 = vset.pattern.permute.xlu0 11
        %3033 = vperm.xlu0 %3032, %v2952
        %v3034 = vpop.permute.xlu0 %3033
        %3037 = vset.pattern.permute.xlu0 11
        %3038 = vperm.xlu0 %3037, %v2953
        %v3039 = vpop.permute.xlu0 %3038
        %3042 = vset.pattern.permute.xlu0 11
        %3043 = vperm.xlu0 %3042, %v2954
        %v3044 = vpop.permute.xlu0 %3043
        %3047 = vset.pattern.permute.xlu0 11
        %3048 = vperm.xlu0 %3047, %v2955
        %v3049 = vpop.permute.xlu0 %3048
        %3052 = vset.pattern.permute.xlu0 11
        %3053 = vperm.xlu0 %3052, %v2956
        %v3054 = vpop.permute.xlu0 %3053
        %3057 = vset.pattern.permute.xlu0 11
        %3058 = vperm.xlu0 %3057, %v2957
        %v3059 = vpop.permute.xlu0 %3058
        %3062 = vset.pattern.permute.xlu0 11
        %3063 = vperm.xlu0 %3062, %v2958
        %v3064 = vpop.permute.xlu0 %3063
        %v3066 = vlaneseq
        %v3067 = vshrl.u32 %v3066, 7
        %v3068 = vsub.s32 3, %v3067
        %v3069 = vrot.slane %v550, %v3068
        %v3070 = vmul.f32 %v2989, %v3069
        %v3071 = vmul.f32 %v2994, %v3069
        %v3072 = vmul.f32 %v2999, %v3069
        %v3073 = vmul.f32 %v3004, %v3069
        %v3074 = vmul.f32 %v3009, %v3069
        %v3075 = vmul.f32 %v3014, %v3069
        %v3076 = vmul.f32 %v3019, %v3069
        %v3077 = vmul.f32 %v3024, %v3069
        %v3078 = vmul.f32 %v3029, %v3069
        %v3079 = vmul.f32 %v3034, %v3069
        %v3080 = vmul.f32 %v3039, %v3069
        %v3081 = vmul.f32 %v3044, %v3069
        %v3082 = vmul.f32 %v3049, %v3069
        %v3083 = vmul.f32 %v3054, %v3069
        %v3084 = vmul.f32 %v3059, %v3069
        %v3085 = vmul.f32 %v3064, %v3069
        %v3086 = vlaneseq
        %v3087 = vshrl.u32 %v3086, 7
        %v3088 = vsub.s32 3, %v3087
        %v3089 = vrot.slane %v2985, %v3088
        %v3090 = vsub.f32 %v3070, %v3089
        %v3091 = vsub.f32 %v3071, %v3089
        %v3092 = vsub.f32 %v3072, %v3089
        %v3093 = vsub.f32 %v3073, %v3089
        %v3094 = vsub.f32 %v3074, %v3089
        %v3095 = vsub.f32 %v3075, %v3089
        %v3096 = vsub.f32 %v3076, %v3089
        %v3097 = vsub.f32 %v3077, %v3089
        %v3098 = vsub.f32 %v3078, %v3089
        %v3099 = vsub.f32 %v3079, %v3089
        %v3100 = vsub.f32 %v3080, %v3089
        %v3101 = vsub.f32 %v3081, %v3089
        %v3102 = vsub.f32 %v3082, %v3089
        %v3103 = vsub.f32 %v3083, %v3089
        %v3104 = vsub.f32 %v3084, %v3089
        %v3105 = vsub.f32 %v3085, %v3089
        %v3106 = vmul.f32 %v3090, 1.442695
        %v3107 = vpow.pop %v3106
        %v3108 = vmul.f32 %v3091, 1.442695
        %v3109 = vpow.pop %v3108
        %v3110 = vmul.f32 %v3092, 1.442695
        %v3111 = vpow.pop %v3110
        %v3112 = vmul.f32 %v3093, 1.442695
        %v3113 = vpow.pop %v3112
        %v3114 = vmul.f32 %v3094, 1.442695
        %v3115 = vpow.pop %v3114
        %v3116 = vmul.f32 %v3095, 1.442695
        %v3117 = vpow.pop %v3116
        %v3118 = vmul.f32 %v3096, 1.442695
        %v3119 = vpow.pop %v3118
        %v3120 = vmul.f32 %v3097, 1.442695
        %v3121 = vpow.pop %v3120
        %v3122 = vmul.f32 %v3098, 1.442695
        %v3123 = vpow.pop %v3122
        %v3124 = vmul.f32 %v3099, 1.442695
        %v3125 = vpow.pop %v3124
        %v3126 = vmul.f32 %v3100, 1.442695
        %v3127 = vpow.pop %v3126
        %v3128 = vmul.f32 %v3101, 1.442695
        %v3129 = vpow.pop %v3128
        %v3130 = vmul.f32 %v3102, 1.442695
        %v3131 = vpow.pop %v3130
        %v3132 = vmul.f32 %v3103, 1.442695
        %v3133 = vpow.pop %v3132
        %v3134 = vmul.f32 %v3104, 1.442695
        %v3135 = vpow.pop %v3134
        %v3136 = vmul.f32 %v3105, 1.442695
        %v3137 = vpow.pop %v3136
        %v3138 = vadd.f32 %v3107, %v3109
        %v3139 = vadd.f32 %v3138, %v3111
        %v3140 = vadd.f32 %v3139, %v3113
        %v3141 = vadd.f32 %v3140, %v3115
        %v3142 = vadd.f32 %v3141, %v3117
        %v3143 = vadd.f32 %v3142, %v3119
        %v3144 = vadd.f32 %v3143, %v3121
        %v3145 = vadd.f32 %v3144, %v3123
        %v3146 = vadd.f32 %v3145, %v3125
        %v3147 = vadd.f32 %v3146, %v3127
        %v3148 = vadd.f32 %v3147, %v3129
        %v3149 = vadd.f32 %v3148, %v3131
        %v3150 = vadd.f32 %v3149, %v3133
        %v3151 = vadd.f32 %v3150, %v3135
        %v3152 = vadd.f32 %v3151, %v3137
        %v3153 = vrot.slane %v3152, 4
        %v3154 = vadd.f32 %v3152, %v3153
        %v3155 = vrot.slane %v3154, 2
        %v3156 = vadd.f32 %v3154, %v3155
        %v3157 = vrot.slane %v3156, 1
        %v3158 = vadd.f32 %v3156, %v3157
        %3160 = vset.pattern.permute.xlu0 11
        %3161 = vperm.xlu0 %3160, %v2959
        %v3162 = vpop.permute.xlu0 %3161
        %3165 = vset.pattern.permute.xlu0 11
        %3166 = vperm.xlu0 %3165, %v2960
        %v3167 = vpop.permute.xlu0 %3166
        %3170 = vset.pattern.permute.xlu0 11
        %3171 = vperm.xlu0 %3170, %v2961
        %v3172 = vpop.permute.xlu0 %3171
        %3175 = vset.pattern.permute.xlu0 11
        %3176 = vperm.xlu0 %3175, %v2962
        %v3177 = vpop.permute.xlu0 %3176
        %3180 = vset.pattern.permute.xlu0 11
        %3181 = vperm.xlu0 %3180, %v2963
        %v3182 = vpop.permute.xlu0 %3181
        %3185 = vset.pattern.permute.xlu0 11
        %3186 = vperm.xlu0 %3185, %v2964
        %v3187 = vpop.permute.xlu0 %3186
        %3190 = vset.pattern.permute.xlu0 11
        %3191 = vperm.xlu0 %3190, %v2965
        %v3192 = vpop.permute.xlu0 %3191
        %3195 = vset.pattern.permute.xlu0 11
        %3196 = vperm.xlu0 %3195, %v2966
        %v3197 = vpop.permute.xlu0 %3196
        %3200 = vset.pattern.permute.xlu0 11
        %3201 = vperm.xlu0 %3200, %v2967
        %v3202 = vpop.permute.xlu0 %3201
        %3205 = vset.pattern.permute.xlu0 11
        %3206 = vperm.xlu0 %3205, %v2968
        %v3207 = vpop.permute.xlu0 %3206
        %3210 = vset.pattern.permute.xlu0 11
        %3211 = vperm.xlu0 %3210, %v2969
        %v3212 = vpop.permute.xlu0 %3211
        %3215 = vset.pattern.permute.xlu0 11
        %3216 = vperm.xlu0 %3215, %v2970
        %v3217 = vpop.permute.xlu0 %3216
        %3220 = vset.pattern.permute.xlu0 11
        %3221 = vperm.xlu0 %3220, %v2971
        %v3222 = vpop.permute.xlu0 %3221
        %3225 = vset.pattern.permute.xlu0 11
        %3226 = vperm.xlu0 %3225, %v2972
        %v3227 = vpop.permute.xlu0 %3226
        %3230 = vset.pattern.permute.xlu0 11
        %3231 = vperm.xlu0 %3230, %v2973
        %v3232 = vpop.permute.xlu0 %3231
        %3235 = vset.pattern.permute.xlu0 11
        %3236 = vperm.xlu0 %3235, %v2974
        %v3237 = vpop.permute.xlu0 %3236
        %v3239 = vmul.f32 %v3107, %v3162
        %v3240 = vmul.f32 %v3109, %v3167
        %v3241 = vmul.f32 %v3111, %v3172
        %v3242 = vmul.f32 %v3113, %v3177
        %v3243 = vmul.f32 %v3115, %v3182
        %v3244 = vmul.f32 %v3117, %v3187
        %v3245 = vmul.f32 %v3119, %v3192
        %v3246 = vmul.f32 %v3121, %v3197
        %v3247 = vmul.f32 %v3123, %v3202
        %v3248 = vmul.f32 %v3125, %v3207
        %v3249 = vmul.f32 %v3127, %v3212
        %v3250 = vmul.f32 %v3129, %v3217
        %v3251 = vmul.f32 %v3131, %v3222
        %v3252 = vmul.f32 %v3133, %v3227
        %v3253 = vmul.f32 %v3135, %v3232
        %v3254 = vmul.f32 %v3137, %v3237
        %v3255 = vadd.f32 %v3239, %v3240
        %v3256 = vadd.f32 %v3255, %v3241
        %v3257 = vadd.f32 %v3256, %v3242
        %v3258 = vadd.f32 %v3257, %v3243
        %v3259 = vadd.f32 %v3258, %v3244
        %v3260 = vadd.f32 %v3259, %v3245
        %v3261 = vadd.f32 %v3260, %v3246
        %v3262 = vadd.f32 %v3261, %v3247
        %v3263 = vadd.f32 %v3262, %v3248
        %v3264 = vadd.f32 %v3263, %v3249
        %v3265 = vadd.f32 %v3264, %v3250
        %v3266 = vadd.f32 %v3265, %v3251
        %v3267 = vadd.f32 %v3266, %v3252
        %v3268 = vadd.f32 %v3267, %v3253
        %v3269 = vadd.f32 %v3268, %v3254
        %v3270 = vrot.slane %v3269, 4
        %v3271 = vadd.f32 %v3269, %v3270
        %v3272 = vrot.slane %v3271, 2
        %v3273 = vadd.f32 %v3271, %v3272
        %v3274 = vrot.slane %v3273, 1
        %v3275 = vadd.f32 %v3273, %v3274
        %v3276 = vrcp.pop %v3158
        %v3277 = vmul.f32 %v3275, %v3276
        %3278 = vset.pattern.permute.xlu0 3
        %3279 = vperm.xlu0 %3278, %v1045
        %v3280 = vpop.permute.xlu0 %3279
        %v3282 = vmul.f32 %v555, %v3280
        %3283 = vset.pattern.permute.xlu0 3
        %3284 = vperm.xlu0 %3283, %v1082
        %v3285 = vpop.permute.xlu0 %3284
        %v3287 = vmul.f32 %v555, %v3285
        %v3288 = vsel %vm1453, %v3282, %v3287
        %3289 = vset.pattern.permute.xlu0 3
        %3290 = vperm.xlu0 %3289, %v2943
        %v3291 = vpop.permute.xlu0 %3290
        %3293 = vset.pattern.permute.xlu0 3
        %3294 = vperm.xlu0 %3293, %v2944
        %v3295 = vpop.permute.xlu0 %3294
        %3297 = vset.pattern.permute.xlu0 3
        %3298 = vperm.xlu0 %3297, %v2945
        %v3299 = vpop.permute.xlu0 %3298
        %3301 = vset.pattern.permute.xlu0 3
        %3302 = vperm.xlu0 %3301, %v2946
        %v3303 = vpop.permute.xlu0 %3302
        %3305 = vset.pattern.permute.xlu0 3
        %3306 = vperm.xlu0 %3305, %v2947
        %v3307 = vpop.permute.xlu0 %3306
        %3309 = vset.pattern.permute.xlu0 3
        %3310 = vperm.xlu0 %3309, %v2948
        %v3311 = vpop.permute.xlu0 %3310
        %3313 = vset.pattern.permute.xlu0 3
        %3314 = vperm.xlu0 %3313, %v2949
        %v3315 = vpop.permute.xlu0 %3314
        %3317 = vset.pattern.permute.xlu0 3
        %3318 = vperm.xlu0 %3317, %v2950
        %v3319 = vpop.permute.xlu0 %3318
        %3321 = vset.pattern.permute.xlu0 3
        %3322 = vperm.xlu0 %3321, %v2951
        %v3323 = vpop.permute.xlu0 %3322
        %3325 = vset.pattern.permute.xlu0 3
        %3326 = vperm.xlu0 %3325, %v2952
        %v3327 = vpop.permute.xlu0 %3326
        %3329 = vset.pattern.permute.xlu0 3
        %3330 = vperm.xlu0 %3329, %v2953
        %v3331 = vpop.permute.xlu0 %3330
        %3333 = vset.pattern.permute.xlu0 3
        %3334 = vperm.xlu0 %3333, %v2954
        %v3335 = vpop.permute.xlu0 %3334
        %3337 = vset.pattern.permute.xlu0 3
        %3338 = vperm.xlu0 %3337, %v2955
        %v3339 = vpop.permute.xlu0 %3338
        %3341 = vset.pattern.permute.xlu0 3
        %3342 = vperm.xlu0 %3341, %v2956
        %v3343 = vpop.permute.xlu0 %3342
        %3345 = vset.pattern.permute.xlu0 3
        %3346 = vperm.xlu0 %3345, %v2957
        %v3347 = vpop.permute.xlu0 %3346
        %3349 = vset.pattern.permute.xlu0 3
        %3350 = vperm.xlu0 %3349, %v2958
        %v3351 = vpop.permute.xlu0 %3350
        %v3353 = vlaneseq
        %v3354 = vshrl.u32 %v3353, 7
        %v3355 = vsub.s32 3, %v3354
        %v3356 = vrot.slane %v555, %v3355
        %v3357 = vmul.f32 %v3291, %v3356
        %v3358 = vmul.f32 %v3295, %v3356
        %v3359 = vmul.f32 %v3299, %v3356
        %v3360 = vmul.f32 %v3303, %v3356
        %v3361 = vmul.f32 %v3307, %v3356
        %v3362 = vmul.f32 %v3311, %v3356
        %v3363 = vmul.f32 %v3315, %v3356
        %v3364 = vmul.f32 %v3319, %v3356
        %v3365 = vmul.f32 %v3323, %v3356
        %v3366 = vmul.f32 %v3327, %v3356
        %v3367 = vmul.f32 %v3331, %v3356
        %v3368 = vmul.f32 %v3335, %v3356
        %v3369 = vmul.f32 %v3339, %v3356
        %v3370 = vmul.f32 %v3343, %v3356
        %v3371 = vmul.f32 %v3347, %v3356
        %v3372 = vmul.f32 %v3351, %v3356
        %v3373 = vlaneseq
        %v3374 = vshrl.u32 %v3373, 7
        %v3375 = vsub.s32 3, %v3374
        %v3376 = vrot.slane %v3288, %v3375
        %v3377 = vsub.f32 %v3357, %v3376
        %v3378 = vsub.f32 %v3358, %v3376
        %v3379 = vsub.f32 %v3359, %v3376
        %v3380 = vsub.f32 %v3360, %v3376
        %v3381 = vsub.f32 %v3361, %v3376
        %v3382 = vsub.f32 %v3362, %v3376
        %v3383 = vsub.f32 %v3363, %v3376
        %v3384 = vsub.f32 %v3364, %v3376
        %v3385 = vsub.f32 %v3365, %v3376
        %v3386 = vsub.f32 %v3366, %v3376
        %v3387 = vsub.f32 %v3367, %v3376
        %v3388 = vsub.f32 %v3368, %v3376
        %v3389 = vsub.f32 %v3369, %v3376
        %v3390 = vsub.f32 %v3370, %v3376
        %v3391 = vsub.f32 %v3371, %v3376
        %v3392 = vsub.f32 %v3372, %v3376
        %v3393 = vmul.f32 %v3377, 1.442695
        %v3394 = vpow.pop %v3393
        %v3395 = vmul.f32 %v3378, 1.442695
        %v3396 = vpow.pop %v3395
        %v3397 = vmul.f32 %v3379, 1.442695
        %v3398 = vpow.pop %v3397
        %v3399 = vmul.f32 %v3380, 1.442695
        %v3400 = vpow.pop %v3399
        %v3401 = vmul.f32 %v3381, 1.442695
        %v3402 = vpow.pop %v3401
        %v3403 = vmul.f32 %v3382, 1.442695
        %v3404 = vpow.pop %v3403
        %v3405 = vmul.f32 %v3383, 1.442695
        %v3406 = vpow.pop %v3405
        %v3407 = vmul.f32 %v3384, 1.442695
        %v3408 = vpow.pop %v3407
        %v3409 = vmul.f32 %v3385, 1.442695
        %v3410 = vpow.pop %v3409
        %v3411 = vmul.f32 %v3386, 1.442695
        %v3412 = vpow.pop %v3411
        %v3413 = vmul.f32 %v3387, 1.442695
        %v3414 = vpow.pop %v3413
        %v3415 = vmul.f32 %v3388, 1.442695
        %v3416 = vpow.pop %v3415
        %v3417 = vmul.f32 %v3389, 1.442695
        %v3418 = vpow.pop %v3417
        %v3419 = vmul.f32 %v3390, 1.442695
        %v3420 = vpow.pop %v3419
        %v3421 = vmul.f32 %v3391, 1.442695
        %v3422 = vpow.pop %v3421
        %v3423 = vmul.f32 %v3392, 1.442695
        %v3424 = vpow.pop %v3423
        %v3425 = vadd.f32 %v3394, %v3396
        %v3426 = vadd.f32 %v3425, %v3398
        %v3427 = vadd.f32 %v3426, %v3400
        %v3428 = vadd.f32 %v3427, %v3402
        %v3429 = vadd.f32 %v3428, %v3404
        %v3430 = vadd.f32 %v3429, %v3406
        %v3431 = vadd.f32 %v3430, %v3408
        %v3432 = vadd.f32 %v3431, %v3410
        %v3433 = vadd.f32 %v3432, %v3412
        %v3434 = vadd.f32 %v3433, %v3414
        %v3435 = vadd.f32 %v3434, %v3416
        %v3436 = vadd.f32 %v3435, %v3418
        %v3437 = vadd.f32 %v3436, %v3420
        %v3438 = vadd.f32 %v3437, %v3422
        %v3439 = vadd.f32 %v3438, %v3424
        %v3440 = vrot.slane %v3439, 4
        %v3441 = vadd.f32 %v3439, %v3440
        %v3442 = vrot.slane %v3441, 2
        %v3443 = vadd.f32 %v3441, %v3442
        %v3444 = vrot.slane %v3443, 1
        %v3445 = vadd.f32 %v3443, %v3444
        %3446 = vset.pattern.permute.xlu0 3
        %3447 = vperm.xlu0 %3446, %v2959
        %v3448 = vpop.permute.xlu0 %3447
        %3450 = vset.pattern.permute.xlu0 3
        %3451 = vperm.xlu0 %3450, %v2960
        %v3452 = vpop.permute.xlu0 %3451
        %3454 = vset.pattern.permute.xlu0 3
        %3455 = vperm.xlu0 %3454, %v2961
        %v3456 = vpop.permute.xlu0 %3455
        %3458 = vset.pattern.permute.xlu0 3
        %3459 = vperm.xlu0 %3458, %v2962
        %v3460 = vpop.permute.xlu0 %3459
        %3462 = vset.pattern.permute.xlu0 3
        %3463 = vperm.xlu0 %3462, %v2963
        %v3464 = vpop.permute.xlu0 %3463
        %3466 = vset.pattern.permute.xlu0 3
        %3467 = vperm.xlu0 %3466, %v2964
        %v3468 = vpop.permute.xlu0 %3467
        %3470 = vset.pattern.permute.xlu0 3
        %3471 = vperm.xlu0 %3470, %v2965
        %v3472 = vpop.permute.xlu0 %3471
        %3474 = vset.pattern.permute.xlu0 3
        %3475 = vperm.xlu0 %3474, %v2966
        %v3476 = vpop.permute.xlu0 %3475
        %3478 = vset.pattern.permute.xlu0 3
        %3479 = vperm.xlu0 %3478, %v2967
        %v3480 = vpop.permute.xlu0 %3479
        %3482 = vset.pattern.permute.xlu0 3
        %3483 = vperm.xlu0 %3482, %v2968
        %v3484 = vpop.permute.xlu0 %3483
        %3486 = vset.pattern.permute.xlu0 3
        %3487 = vperm.xlu0 %3486, %v2969
        %v3488 = vpop.permute.xlu0 %3487
        %3490 = vset.pattern.permute.xlu0 3
        %3491 = vperm.xlu0 %3490, %v2970
        %v3492 = vpop.permute.xlu0 %3491
        %3494 = vset.pattern.permute.xlu0 3
        %3495 = vperm.xlu0 %3494, %v2971
        %v3496 = vpop.permute.xlu0 %3495
        %3498 = vset.pattern.permute.xlu0 3
        %3499 = vperm.xlu0 %3498, %v2972
        %v3500 = vpop.permute.xlu0 %3499
        %3502 = vset.pattern.permute.xlu0 3
        %3503 = vperm.xlu0 %3502, %v2973
        %v3504 = vpop.permute.xlu0 %3503
        %3506 = vset.pattern.permute.xlu0 3
        %3507 = vperm.xlu0 %3506, %v2974
        %v3508 = vpop.permute.xlu0 %3507
        %v3510 = vmul.f32 %v3394, %v3448
        %v3511 = vmul.f32 %v3396, %v3452
        %v3512 = vmul.f32 %v3398, %v3456
        %v3513 = vmul.f32 %v3400, %v3460
        %v3514 = vmul.f32 %v3402, %v3464
        %v3515 = vmul.f32 %v3404, %v3468
        %v3516 = vmul.f32 %v3406, %v3472
        %v3517 = vmul.f32 %v3408, %v3476
        %v3518 = vmul.f32 %v3410, %v3480
        %v3519 = vmul.f32 %v3412, %v3484
        %v3520 = vmul.f32 %v3414, %v3488
        %v3521 = vmul.f32 %v3416, %v3492
        %v3522 = vmul.f32 %v3418, %v3496
        %v3523 = vmul.f32 %v3420, %v3500
        %v3524 = vmul.f32 %v3422, %v3504
        %v3525 = vmul.f32 %v3424, %v3508
        %v3526 = vadd.f32 %v3510, %v3511
        %v3527 = vadd.f32 %v3526, %v3512
        %v3528 = vadd.f32 %v3527, %v3513
        %v3529 = vadd.f32 %v3528, %v3514
        %v3530 = vadd.f32 %v3529, %v3515
        %v3531 = vadd.f32 %v3530, %v3516
        %v3532 = vadd.f32 %v3531, %v3517
        %v3533 = vadd.f32 %v3532, %v3518
        %v3534 = vadd.f32 %v3533, %v3519
        %v3535 = vadd.f32 %v3534, %v3520
        %v3536 = vadd.f32 %v3535, %v3521
        %v3537 = vadd.f32 %v3536, %v3522
        %v3538 = vadd.f32 %v3537, %v3523
        %v3539 = vadd.f32 %v3538, %v3524
        %v3540 = vadd.f32 %v3539, %v3525
        %v3541 = vrot.slane %v3540, 4
        %v3542 = vadd.f32 %v3540, %v3541
        %v3543 = vrot.slane %v3542, 2
        %v3544 = vadd.f32 %v3542, %v3543
        %v3545 = vrot.slane %v3544, 1
        %v3546 = vadd.f32 %v3544, %v3545
        %v3547 = vrcp.pop %v3445
        %v3548 = vmul.f32 %v3546, %v3547
        %v3549 = vmul.f32 %v3277, %v3548
        %3550 = vst [vmem:[#allocation2 + $0x3] sm:$0x1] %v3549
        %v3551 = vld [vmem:[#allocation3] sm:$0xff]
        %v3552 = vld [vmem:[#allocation3 + $0x8] sm:$0xff]
        %v3553 = vld [vmem:[#allocation3 + $0x10] sm:$0xff]
        %v3554 = vld [vmem:[#allocation3 + $0x18] sm:$0xff]
        %v3555 = vld [vmem:[#allocation3 + $0x20] sm:$0xff]
        %v3556 = vld [vmem:[#allocation3 + $0x28] sm:$0xff]
        %v3557 = vld [vmem:[#allocation3 + $0x30] sm:$0xff]
        %v3558 = vld [vmem:[#allocation3 + $0x38] sm:$0xff]
        %v3559 = vld [vmem:[#allocation3 + $0x40] sm:$0xff]
        %v3560 = vld [vmem:[#allocation3 + $0x48] sm:$0xff]
        %v3561 = vld [vmem:[#allocation3 + $0x50] sm:$0xff]
        %v3562 = vld [vmem:[#allocation3 + $0x58] sm:$0xff]
        %v3563 = vld [vmem:[#allocation3 + $0x60] sm:$0xff]
        %v3564 = vld [vmem:[#allocation3 + $0x68] sm:$0xff]
        %v3565 = vld [vmem:[#allocation3 + $0x70] sm:$0xff]
        %v3566 = vld [vmem:[#allocation3 + $0x78] sm:$0xff]
        %v3567 = vld [vmem:[#allocation4] sm:$0xff]
        %v3568 = vld [vmem:[#allocation4 + $0x8] sm:$0xff]
        %v3569 = vld [vmem:[#allocation4 + $0x10] sm:$0xff]
        %v3570 = vld [vmem:[#allocation4 + $0x18] sm:$0xff]
        %v3571 = vld [vmem:[#allocation4 + $0x20] sm:$0xff]
        %v3572 = vld [vmem:[#allocation4 + $0x28] sm:$0xff]
        %v3573 = vld [vmem:[#allocation4 + $0x30] sm:$0xff]
        %v3574 = vld [vmem:[#allocation4 + $0x38] sm:$0xff]
        %v3575 = vld [vmem:[#allocation4 + $0x40] sm:$0xff]
        %v3576 = vld [vmem:[#allocation4 + $0x48] sm:$0xff]
        %v3577 = vld [vmem:[#allocation4 + $0x50] sm:$0xff]
        %v3578 = vld [vmem:[#allocation4 + $0x58] sm:$0xff]
        %v3579 = vld [vmem:[#allocation4 + $0x60] sm:$0xff]
        %v3580 = vld [vmem:[#allocation4 + $0x68] sm:$0xff]
        %v3581 = vld [vmem:[#allocation4 + $0x70] sm:$0xff]
        %v3582 = vld [vmem:[#allocation4 + $0x78] sm:$0xff]
        %3583 = vset.pattern.permute.xlu0 12
        %3584 = vperm.xlu0 %3583, %v1045
        %v3585 = vpop.permute.xlu0 %3584
        %v3587 = vmul.f32 %v550, %v3585
        %3588 = vset.pattern.permute.xlu0 12
        %3589 = vperm.xlu0 %3588, %v1082
        %v3590 = vpop.permute.xlu0 %3589
        %v3592 = vmul.f32 %v550, %v3590
        %v3593 = vsel %vm1147, %v3587, %v3592
        %3595 = vset.pattern.permute.xlu0 12
        %3596 = vperm.xlu0 %3595, %v3551
        %v3597 = vpop.permute.xlu0 %3596
        %3600 = vset.pattern.permute.xlu0 12
        %3601 = vperm.xlu0 %3600, %v3552
        %v3602 = vpop.permute.xlu0 %3601
        %3605 = vset.pattern.permute.xlu0 12
        %3606 = vperm.xlu0 %3605, %v3553
        %v3607 = vpop.permute.xlu0 %3606
        %3610 = vset.pattern.permute.xlu0 12
        %3611 = vperm.xlu0 %3610, %v3554
        %v3612 = vpop.permute.xlu0 %3611
        %3615 = vset.pattern.permute.xlu0 12
        %3616 = vperm.xlu0 %3615, %v3555
        %v3617 = vpop.permute.xlu0 %3616
        %3620 = vset.pattern.permute.xlu0 12
        %3621 = vperm.xlu0 %3620, %v3556
        %v3622 = vpop.permute.xlu0 %3621
        %3625 = vset.pattern.permute.xlu0 12
        %3626 = vperm.xlu0 %3625, %v3557
        %v3627 = vpop.permute.xlu0 %3626
        %3630 = vset.pattern.permute.xlu0 12
        %3631 = vperm.xlu0 %3630, %v3558
        %v3632 = vpop.permute.xlu0 %3631
        %3635 = vset.pattern.permute.xlu0 12
        %3636 = vperm.xlu0 %3635, %v3559
        %v3637 = vpop.permute.xlu0 %3636
        %3640 = vset.pattern.permute.xlu0 12
        %3641 = vperm.xlu0 %3640, %v3560
        %v3642 = vpop.permute.xlu0 %3641
        %3645 = vset.pattern.permute.xlu0 12
        %3646 = vperm.xlu0 %3645, %v3561
        %v3647 = vpop.permute.xlu0 %3646
        %3650 = vset.pattern.permute.xlu0 12
        %3651 = vperm.xlu0 %3650, %v3562
        %v3652 = vpop.permute.xlu0 %3651
        %3655 = vset.pattern.permute.xlu0 12
        %3656 = vperm.xlu0 %3655, %v3563
        %v3657 = vpop.permute.xlu0 %3656
        %3660 = vset.pattern.permute.xlu0 12
        %3661 = vperm.xlu0 %3660, %v3564
        %v3662 = vpop.permute.xlu0 %3661
        %3665 = vset.pattern.permute.xlu0 12
        %3666 = vperm.xlu0 %3665, %v3565
        %v3667 = vpop.permute.xlu0 %3666
        %3670 = vset.pattern.permute.xlu0 12
        %3671 = vperm.xlu0 %3670, %v3566
        %v3672 = vpop.permute.xlu0 %3671
        %v3674 = vlaneseq
        %v3675 = vshrl.u32 %v3674, 7
        %v3676 = vsub.s32 4, %v3675
        %v3677 = vrot.slane %v550, %v3676
        %v3678 = vmul.f32 %v3597, %v3677
        %v3679 = vmul.f32 %v3602, %v3677
        %v3680 = vmul.f32 %v3607, %v3677
        %v3681 = vmul.f32 %v3612, %v3677
        %v3682 = vmul.f32 %v3617, %v3677
        %v3683 = vmul.f32 %v3622, %v3677
        %v3684 = vmul.f32 %v3627, %v3677
        %v3685 = vmul.f32 %v3632, %v3677
        %v3686 = vmul.f32 %v3637, %v3677
        %v3687 = vmul.f32 %v3642, %v3677
        %v3688 = vmul.f32 %v3647, %v3677
        %v3689 = vmul.f32 %v3652, %v3677
        %v3690 = vmul.f32 %v3657, %v3677
        %v3691 = vmul.f32 %v3662, %v3677
        %v3692 = vmul.f32 %v3667, %v3677
        %v3693 = vmul.f32 %v3672, %v3677
        %v3694 = vlaneseq
        %v3695 = vshrl.u32 %v3694, 7
        %v3696 = vsub.s32 4, %v3695
        %v3697 = vrot.slane %v3593, %v3696
        %v3698 = vsub.f32 %v3678, %v3697
        %v3699 = vsub.f32 %v3679, %v3697
        %v3700 = vsub.f32 %v3680, %v3697
        %v3701 = vsub.f32 %v3681, %v3697
        %v3702 = vsub.f32 %v3682, %v3697
        %v3703 = vsub.f32 %v3683, %v3697
        %v3704 = vsub.f32 %v3684, %v3697
        %v3705 = vsub.f32 %v3685, %v3697
        %v3706 = vsub.f32 %v3686, %v3697
        %v3707 = vsub.f32 %v3687, %v3697
        %v3708 = vsub.f32 %v3688, %v3697
        %v3709 = vsub.f32 %v3689, %v3697
        %v3710 = vsub.f32 %v3690, %v3697
        %v3711 = vsub.f32 %v3691, %v3697
        %v3712 = vsub.f32 %v3692, %v3697
        %v3713 = vsub.f32 %v3693, %v3697
        %v3714 = vmul.f32 %v3698, 1.442695
        %v3715 = vpow.pop %v3714
        %v3716 = vmul.f32 %v3699, 1.442695
        %v3717 = vpow.pop %v3716
        %v3718 = vmul.f32 %v3700, 1.442695
        %v3719 = vpow.pop %v3718
        %v3720 = vmul.f32 %v3701, 1.442695
        %v3721 = vpow.pop %v3720
        %v3722 = vmul.f32 %v3702, 1.442695
        %v3723 = vpow.pop %v3722
        %v3724 = vmul.f32 %v3703, 1.442695
        %v3725 = vpow.pop %v3724
        %v3726 = vmul.f32 %v3704, 1.442695
        %v3727 = vpow.pop %v3726
        %v3728 = vmul.f32 %v3705, 1.442695
        %v3729 = vpow.pop %v3728
        %v3730 = vmul.f32 %v3706, 1.442695
        %v3731 = vpow.pop %v3730
        %v3732 = vmul.f32 %v3707, 1.442695
        %v3733 = vpow.pop %v3732
        %v3734 = vmul.f32 %v3708, 1.442695
        %v3735 = vpow.pop %v3734
        %v3736 = vmul.f32 %v3709, 1.442695
        %v3737 = vpow.pop %v3736
        %v3738 = vmul.f32 %v3710, 1.442695
        %v3739 = vpow.pop %v3738
        %v3740 = vmul.f32 %v3711, 1.442695
        %v3741 = vpow.pop %v3740
        %v3742 = vmul.f32 %v3712, 1.442695
        %v3743 = vpow.pop %v3742
        %v3744 = vmul.f32 %v3713, 1.442695
        %v3745 = vpow.pop %v3744
        %v3746 = vadd.f32 %v3715, %v3717
        %v3747 = vadd.f32 %v3746, %v3719
        %v3748 = vadd.f32 %v3747, %v3721
        %v3749 = vadd.f32 %v3748, %v3723
        %v3750 = vadd.f32 %v3749, %v3725
        %v3751 = vadd.f32 %v3750, %v3727
        %v3752 = vadd.f32 %v3751, %v3729
        %v3753 = vadd.f32 %v3752, %v3731
        %v3754 = vadd.f32 %v3753, %v3733
        %v3755 = vadd.f32 %v3754, %v3735
        %v3756 = vadd.f32 %v3755, %v3737
        %v3757 = vadd.f32 %v3756, %v3739
        %v3758 = vadd.f32 %v3757, %v3741
        %v3759 = vadd.f32 %v3758, %v3743
        %v3760 = vadd.f32 %v3759, %v3745
        %v3761 = vrot.slane %v3760, 4
        %v3762 = vadd.f32 %v3760, %v3761
        %v3763 = vrot.slane %v3762, 2
        %v3764 = vadd.f32 %v3762, %v3763
        %v3765 = vrot.slane %v3764, 1
        %v3766 = vadd.f32 %v3764, %v3765
        %3768 = vset.pattern.permute.xlu0 12
        %3769 = vperm.xlu0 %3768, %v3567
        %v3770 = vpop.permute.xlu0 %3769
        %3773 = vset.pattern.permute.xlu0 12
        %3774 = vperm.xlu0 %3773, %v3568
        %v3775 = vpop.permute.xlu0 %3774
        %3778 = vset.pattern.permute.xlu0 12
        %3779 = vperm.xlu0 %3778, %v3569
        %v3780 = vpop.permute.xlu0 %3779
        %3783 = vset.pattern.permute.xlu0 12
        %3784 = vperm.xlu0 %3783, %v3570
        %v3785 = vpop.permute.xlu0 %3784
        %3788 = vset.pattern.permute.xlu0 12
        %3789 = vperm.xlu0 %3788, %v3571
        %v3790 = vpop.permute.xlu0 %3789
        %3793 = vset.pattern.permute.xlu0 12
        %3794 = vperm.xlu0 %3793, %v3572
        %v3795 = vpop.permute.xlu0 %3794
        %3798 = vset.pattern.permute.xlu0 12
        %3799 = vperm.xlu0 %3798, %v3573
        %v3800 = vpop.permute.xlu0 %3799
        %3803 = vset.pattern.permute.xlu0 12
        %3804 = vperm.xlu0 %3803, %v3574
        %v3805 = vpop.permute.xlu0 %3804
        %3808 = vset.pattern.permute.xlu0 12
        %3809 = vperm.xlu0 %3808, %v3575
        %v3810 = vpop.permute.xlu0 %3809
        %3813 = vset.pattern.permute.xlu0 12
        %3814 = vperm.xlu0 %3813, %v3576
        %v3815 = vpop.permute.xlu0 %3814
        %3818 = vset.pattern.permute.xlu0 12
        %3819 = vperm.xlu0 %3818, %v3577
        %v3820 = vpop.permute.xlu0 %3819
        %3823 = vset.pattern.permute.xlu0 12
        %3824 = vperm.xlu0 %3823, %v3578
        %v3825 = vpop.permute.xlu0 %3824
        %3828 = vset.pattern.permute.xlu0 12
        %3829 = vperm.xlu0 %3828, %v3579
        %v3830 = vpop.permute.xlu0 %3829
        %3833 = vset.pattern.permute.xlu0 12
        %3834 = vperm.xlu0 %3833, %v3580
        %v3835 = vpop.permute.xlu0 %3834
        %3838 = vset.pattern.permute.xlu0 12
        %3839 = vperm.xlu0 %3838, %v3581
        %v3840 = vpop.permute.xlu0 %3839
        %3843 = vset.pattern.permute.xlu0 12
        %3844 = vperm.xlu0 %3843, %v3582
        %v3845 = vpop.permute.xlu0 %3844
        %v3847 = vmul.f32 %v3715, %v3770
        %v3848 = vmul.f32 %v3717, %v3775
        %v3849 = vmul.f32 %v3719, %v3780
        %v3850 = vmul.f32 %v3721, %v3785
        %v3851 = vmul.f32 %v3723, %v3790
        %v3852 = vmul.f32 %v3725, %v3795
        %v3853 = vmul.f32 %v3727, %v3800
        %v3854 = vmul.f32 %v3729, %v3805
        %v3855 = vmul.f32 %v3731, %v3810
        %v3856 = vmul.f32 %v3733, %v3815
        %v3857 = vmul.f32 %v3735, %v3820
        %v3858 = vmul.f32 %v3737, %v3825
        %v3859 = vmul.f32 %v3739, %v3830
        %v3860 = vmul.f32 %v3741, %v3835
        %v3861 = vmul.f32 %v3743, %v3840
        %v3862 = vmul.f32 %v3745, %v3845
        %v3863 = vadd.f32 %v3847, %v3848
        %v3864 = vadd.f32 %v3863, %v3849
        %v3865 = vadd.f32 %v3864, %v3850
        %v3866 = vadd.f32 %v3865, %v3851
        %v3867 = vadd.f32 %v3866, %v3852
        %v3868 = vadd.f32 %v3867, %v3853
        %v3869 = vadd.f32 %v3868, %v3854
        %v3870 = vadd.f32 %v3869, %v3855
        %v3871 = vadd.f32 %v3870, %v3856
        %v3872 = vadd.f32 %v3871, %v3857
        %v3873 = vadd.f32 %v3872, %v3858
        %v3874 = vadd.f32 %v3873, %v3859
        %v3875 = vadd.f32 %v3874, %v3860
        %v3876 = vadd.f32 %v3875, %v3861
        %v3877 = vadd.f32 %v3876, %v3862
        %v3878 = vrot.slane %v3877, 4
        %v3879 = vadd.f32 %v3877, %v3878
        %v3880 = vrot.slane %v3879, 2
        %v3881 = vadd.f32 %v3879, %v3880
        %v3882 = vrot.slane %v3881, 1
        %v3883 = vadd.f32 %v3881, %v3882
        %v3884 = vrcp.pop %v3766
        %v3885 = vmul.f32 %v3883, %v3884
        %3886 = vset.pattern.permute.xlu0 4
        %3887 = vperm.xlu0 %3886, %v1045
        %v3888 = vpop.permute.xlu0 %3887
        %v3890 = vmul.f32 %v555, %v3888
        %3891 = vset.pattern.permute.xlu0 4
        %3892 = vperm.xlu0 %3891, %v1082
        %v3893 = vpop.permute.xlu0 %3892
        %v3895 = vmul.f32 %v555, %v3893
        %v3896 = vsel %vm1453, %v3890, %v3895
        %3897 = vset.pattern.permute.xlu0 4
        %3898 = vperm.xlu0 %3897, %v3551
        %v3899 = vpop.permute.xlu0 %3898
        %3901 = vset.pattern.permute.xlu0 4
        %3902 = vperm.xlu0 %3901, %v3552
        %v3903 = vpop.permute.xlu0 %3902
        %3905 = vset.pattern.permute.xlu0 4
        %3906 = vperm.xlu0 %3905, %v3553
        %v3907 = vpop.permute.xlu0 %3906
        %3909 = vset.pattern.permute.xlu0 4
        %3910 = vperm.xlu0 %3909, %v3554
        %v3911 = vpop.permute.xlu0 %3910
        %3913 = vset.pattern.permute.xlu0 4
        %3914 = vperm.xlu0 %3913, %v3555
        %v3915 = vpop.permute.xlu0 %3914
        %3917 = vset.pattern.permute.xlu0 4
        %3918 = vperm.xlu0 %3917, %v3556
        %v3919 = vpop.permute.xlu0 %3918
        %3921 = vset.pattern.permute.xlu0 4
        %3922 = vperm.xlu0 %3921, %v3557
        %v3923 = vpop.permute.xlu0 %3922
        %3925 = vset.pattern.permute.xlu0 4
        %3926 = vperm.xlu0 %3925, %v3558
        %v3927 = vpop.permute.xlu0 %3926
        %3929 = vset.pattern.permute.xlu0 4
        %3930 = vperm.xlu0 %3929, %v3559
        %v3931 = vpop.permute.xlu0 %3930
        %3933 = vset.pattern.permute.xlu0 4
        %3934 = vperm.xlu0 %3933, %v3560
        %v3935 = vpop.permute.xlu0 %3934
        %3937 = vset.pattern.permute.xlu0 4
        %3938 = vperm.xlu0 %3937, %v3561
        %v3939 = vpop.permute.xlu0 %3938
        %3941 = vset.pattern.permute.xlu0 4
        %3942 = vperm.xlu0 %3941, %v3562
        %v3943 = vpop.permute.xlu0 %3942
        %3945 = vset.pattern.permute.xlu0 4
        %3946 = vperm.xlu0 %3945, %v3563
        %v3947 = vpop.permute.xlu0 %3946
        %3949 = vset.pattern.permute.xlu0 4
        %3950 = vperm.xlu0 %3949, %v3564
        %v3951 = vpop.permute.xlu0 %3950
        %3953 = vset.pattern.permute.xlu0 4
        %3954 = vperm.xlu0 %3953, %v3565
        %v3955 = vpop.permute.xlu0 %3954
        %3957 = vset.pattern.permute.xlu0 4
        %3958 = vperm.xlu0 %3957, %v3566
        %v3959 = vpop.permute.xlu0 %3958
        %v3961 = vlaneseq
        %v3962 = vshrl.u32 %v3961, 7
        %v3963 = vsub.s32 4, %v3962
        %v3964 = vrot.slane %v555, %v3963
        %v3965 = vmul.f32 %v3899, %v3964
        %v3966 = vmul.f32 %v3903, %v3964
        %v3967 = vmul.f32 %v3907, %v3964
        %v3968 = vmul.f32 %v3911, %v3964
        %v3969 = vmul.f32 %v3915, %v3964
        %v3970 = vmul.f32 %v3919, %v3964
        %v3971 = vmul.f32 %v3923, %v3964
        %v3972 = vmul.f32 %v3927, %v3964
        %v3973 = vmul.f32 %v3931, %v3964
        %v3974 = vmul.f32 %v3935, %v3964
        %v3975 = vmul.f32 %v3939, %v3964
        %v3976 = vmul.f32 %v3943, %v3964
        %v3977 = vmul.f32 %v3947, %v3964
        %v3978 = vmul.f32 %v3951, %v3964
        %v3979 = vmul.f32 %v3955, %v3964
        %v3980 = vmul.f32 %v3959, %v3964
        %v3981 = vlaneseq
        %v3982 = vshrl.u32 %v3981, 7
        %v3983 = vsub.s32 4, %v3982
        %v3984 = vrot.slane %v3896, %v3983
        %v3985 = vsub.f32 %v3965, %v3984
        %v3986 = vsub.f32 %v3966, %v3984
        %v3987 = vsub.f32 %v3967, %v3984
        %v3988 = vsub.f32 %v3968, %v3984
        %v3989 = vsub.f32 %v3969, %v3984
        %v3990 = vsub.f32 %v3970, %v3984
        %v3991 = vsub.f32 %v3971, %v3984
        %v3992 = vsub.f32 %v3972, %v3984
        %v3993 = vsub.f32 %v3973, %v3984
        %v3994 = vsub.f32 %v3974, %v3984
        %v3995 = vsub.f32 %v3975, %v3984
        %v3996 = vsub.f32 %v3976, %v3984
        %v3997 = vsub.f32 %v3977, %v3984
        %v3998 = vsub.f32 %v3978, %v3984
        %v3999 = vsub.f32 %v3979, %v3984
        %v4000 = vsub.f32 %v3980, %v3984
        %v4001 = vmul.f32 %v3985, 1.442695
        %v4002 = vpow.pop %v4001
        %v4003 = vmul.f32 %v3986, 1.442695
        %v4004 = vpow.pop %v4003
        %v4005 = vmul.f32 %v3987, 1.442695
        %v4006 = vpow.pop %v4005
        %v4007 = vmul.f32 %v3988, 1.442695
        %v4008 = vpow.pop %v4007
        %v4009 = vmul.f32 %v3989, 1.442695
        %v4010 = vpow.pop %v4009
        %v4011 = vmul.f32 %v3990, 1.442695
        %v4012 = vpow.pop %v4011
        %v4013 = vmul.f32 %v3991, 1.442695
        %v4014 = vpow.pop %v4013
        %v4015 = vmul.f32 %v3992, 1.442695
        %v4016 = vpow.pop %v4015
        %v4017 = vmul.f32 %v3993, 1.442695
        %v4018 = vpow.pop %v4017
        %v4019 = vmul.f32 %v3994, 1.442695
        %v4020 = vpow.pop %v4019
        %v4021 = vmul.f32 %v3995, 1.442695
        %v4022 = vpow.pop %v4021
        %v4023 = vmul.f32 %v3996, 1.442695
        %v4024 = vpow.pop %v4023
        %v4025 = vmul.f32 %v3997, 1.442695
        %v4026 = vpow.pop %v4025
        %v4027 = vmul.f32 %v3998, 1.442695
        %v4028 = vpow.pop %v4027
        %v4029 = vmul.f32 %v3999, 1.442695
        %v4030 = vpow.pop %v4029
        %v4031 = vmul.f32 %v4000, 1.442695
        %v4032 = vpow.pop %v4031
        %v4033 = vadd.f32 %v4002, %v4004
        %v4034 = vadd.f32 %v4033, %v4006
        %v4035 = vadd.f32 %v4034, %v4008
        %v4036 = vadd.f32 %v4035, %v4010
        %v4037 = vadd.f32 %v4036, %v4012
        %v4038 = vadd.f32 %v4037, %v4014
        %v4039 = vadd.f32 %v4038, %v4016
        %v4040 = vadd.f32 %v4039, %v4018
        %v4041 = vadd.f32 %v4040, %v4020
        %v4042 = vadd.f32 %v4041, %v4022
        %v4043 = vadd.f32 %v4042, %v4024
        %v4044 = vadd.f32 %v4043, %v4026
        %v4045 = vadd.f32 %v4044, %v4028
        %v4046 = vadd.f32 %v4045, %v4030
        %v4047 = vadd.f32 %v4046, %v4032
        %v4048 = vrot.slane %v4047, 4
        %v4049 = vadd.f32 %v4047, %v4048
        %v4050 = vrot.slane %v4049, 2
        %v4051 = vadd.f32 %v4049, %v4050
        %v4052 = vrot.slane %v4051, 1
        %v4053 = vadd.f32 %v4051, %v4052
        %4054 = vset.pattern.permute.xlu0 4
        %4055 = vperm.xlu0 %4054, %v3567
        %v4056 = vpop.permute.xlu0 %4055
        %4058 = vset.pattern.permute.xlu0 4
        %4059 = vperm.xlu0 %4058, %v3568
        %v4060 = vpop.permute.xlu0 %4059
        %4062 = vset.pattern.permute.xlu0 4
        %4063 = vperm.xlu0 %4062, %v3569
        %v4064 = vpop.permute.xlu0 %4063
        %4066 = vset.pattern.permute.xlu0 4
        %4067 = vperm.xlu0 %4066, %v3570
        %v4068 = vpop.permute.xlu0 %4067
        %4070 = vset.pattern.permute.xlu0 4
        %4071 = vperm.xlu0 %4070, %v3571
        %v4072 = vpop.permute.xlu0 %4071
        %4074 = vset.pattern.permute.xlu0 4
        %4075 = vperm.xlu0 %4074, %v3572
        %v4076 = vpop.permute.xlu0 %4075
        %4078 = vset.pattern.permute.xlu0 4
        %4079 = vperm.xlu0 %4078, %v3573
        %v4080 = vpop.permute.xlu0 %4079
        %4082 = vset.pattern.permute.xlu0 4
        %4083 = vperm.xlu0 %4082, %v3574
        %v4084 = vpop.permute.xlu0 %4083
        %4086 = vset.pattern.permute.xlu0 4
        %4087 = vperm.xlu0 %4086, %v3575
        %v4088 = vpop.permute.xlu0 %4087
        %4090 = vset.pattern.permute.xlu0 4
        %4091 = vperm.xlu0 %4090, %v3576
        %v4092 = vpop.permute.xlu0 %4091
        %4094 = vset.pattern.permute.xlu0 4
        %4095 = vperm.xlu0 %4094, %v3577
        %v4096 = vpop.permute.xlu0 %4095
        %4098 = vset.pattern.permute.xlu0 4
        %4099 = vperm.xlu0 %4098, %v3578
        %v4100 = vpop.permute.xlu0 %4099
        %4102 = vset.pattern.permute.xlu0 4
        %4103 = vperm.xlu0 %4102, %v3579
        %v4104 = vpop.permute.xlu0 %4103
        %4106 = vset.pattern.permute.xlu0 4
        %4107 = vperm.xlu0 %4106, %v3580
        %v4108 = vpop.permute.xlu0 %4107
        %4110 = vset.pattern.permute.xlu0 4
        %4111 = vperm.xlu0 %4110, %v3581
        %v4112 = vpop.permute.xlu0 %4111
        %4114 = vset.pattern.permute.xlu0 4
        %4115 = vperm.xlu0 %4114, %v3582
        %v4116 = vpop.permute.xlu0 %4115
        %v4118 = vmul.f32 %v4002, %v4056
        %v4119 = vmul.f32 %v4004, %v4060
        %v4120 = vmul.f32 %v4006, %v4064
        %v4121 = vmul.f32 %v4008, %v4068
        %v4122 = vmul.f32 %v4010, %v4072
        %v4123 = vmul.f32 %v4012, %v4076
        %v4124 = vmul.f32 %v4014, %v4080
        %v4125 = vmul.f32 %v4016, %v4084
        %v4126 = vmul.f32 %v4018, %v4088
        %v4127 = vmul.f32 %v4020, %v4092
        %v4128 = vmul.f32 %v4022, %v4096
        %v4129 = vmul.f32 %v4024, %v4100
        %v4130 = vmul.f32 %v4026, %v4104
        %v4131 = vmul.f32 %v4028, %v4108
        %v4132 = vmul.f32 %v4030, %v4112
        %v4133 = vmul.f32 %v4032, %v4116
        %v4134 = vadd.f32 %v4118, %v4119
        %v4135 = vadd.f32 %v4134, %v4120
        %v4136 = vadd.f32 %v4135, %v4121
        %v4137 = vadd.f32 %v4136, %v4122
        %v4138 = vadd.f32 %v4137, %v4123
        %v4139 = vadd.f32 %v4138, %v4124
        %v4140 = vadd.f32 %v4139, %v4125
        %v4141 = vadd.f32 %v4140, %v4126
        %v4142 = vadd.f32 %v4141, %v4127
        %v4143 = vadd.f32 %v4142, %v4128
        %v4144 = vadd.f32 %v4143, %v4129
        %v4145 = vadd.f32 %v4144, %v4130
        %v4146 = vadd.f32 %v4145, %v4131
        %v4147 = vadd.f32 %v4146, %v4132
        %v4148 = vadd.f32 %v4147, %v4133
        %v4149 = vrot.slane %v4148, 4
        %v4150 = vadd.f32 %v4148, %v4149
        %v4151 = vrot.slane %v4150, 2
        %v4152 = vadd.f32 %v4150, %v4151
        %v4153 = vrot.slane %v4152, 1
        %v4154 = vadd.f32 %v4152, %v4153
        %v4155 = vrcp.pop %v4053
        %v4156 = vmul.f32 %v4154, %v4155
        %v4157 = vmul.f32 %v3885, %v4156
        %4158 = vst [vmem:[#allocation2 + $0x4] sm:$0x1] %v4157
        %v4159 = vld [vmem:[#allocation3] sm:$0xff]
        %v4160 = vld [vmem:[#allocation3 + $0x8] sm:$0xff]
        %v4161 = vld [vmem:[#allocation3 + $0x10] sm:$0xff]
        %v4162 = vld [vmem:[#allocation3 + $0x18] sm:$0xff]
        %v4163 = vld [vmem:[#allocation3 + $0x20] sm:$0xff]
        %v4164 = vld [vmem:[#allocation3 + $0x28] sm:$0xff]
        %v4165 = vld [vmem:[#allocation3 + $0x30] sm:$0xff]
        %v4166 = vld [vmem:[#allocation3 + $0x38] sm:$0xff]
        %v4167 = vld [vmem:[#allocation3 + $0x40] sm:$0xff]
        %v4168 = vld [vmem:[#allocation3 + $0x48] sm:$0xff]
        %v4169 = vld [vmem:[#allocation3 + $0x50] sm:$0xff]
        %v4170 = vld [vmem:[#allocation3 + $0x58] sm:$0xff]
        %v4171 = vld [vmem:[#allocation3 + $0x60] sm:$0xff]
        %v4172 = vld [vmem:[#allocation3 + $0x68] sm:$0xff]
        %v4173 = vld [vmem:[#allocation3 + $0x70] sm:$0xff]
        %v4174 = vld [vmem:[#allocation3 + $0x78] sm:$0xff]
        %v4175 = vld [vmem:[#allocation4] sm:$0xff]
        %v4176 = vld [vmem:[#allocation4 + $0x8] sm:$0xff]
        %v4177 = vld [vmem:[#allocation4 + $0x10] sm:$0xff]
        %v4178 = vld [vmem:[#allocation4 + $0x18] sm:$0xff]
        %v4179 = vld [vmem:[#allocation4 + $0x20] sm:$0xff]
        %v4180 = vld [vmem:[#allocation4 + $0x28] sm:$0xff]
        %v4181 = vld [vmem:[#allocation4 + $0x30] sm:$0xff]
        %v4182 = vld [vmem:[#allocation4 + $0x38] sm:$0xff]
        %v4183 = vld [vmem:[#allocation4 + $0x40] sm:$0xff]
        %v4184 = vld [vmem:[#allocation4 + $0x48] sm:$0xff]
        %v4185 = vld [vmem:[#allocation4 + $0x50] sm:$0xff]
        %v4186 = vld [vmem:[#allocation4 + $0x58] sm:$0xff]
        %v4187 = vld [vmem:[#allocation4 + $0x60] sm:$0xff]
        %v4188 = vld [vmem:[#allocation4 + $0x68] sm:$0xff]
        %v4189 = vld [vmem:[#allocation4 + $0x70] sm:$0xff]
        %v4190 = vld [vmem:[#allocation4 + $0x78] sm:$0xff]
        %4191 = vset.pattern.permute.xlu0 13
        %4192 = vperm.xlu0 %4191, %v1045
        %v4193 = vpop.permute.xlu0 %4192
        %v4195 = vmul.f32 %v550, %v4193
        %4196 = vset.pattern.permute.xlu0 13
        %4197 = vperm.xlu0 %4196, %v1082
        %v4198 = vpop.permute.xlu0 %4197
        %v4200 = vmul.f32 %v550, %v4198
        %v4201 = vsel %vm1147, %v4195, %v4200
        %4203 = vset.pattern.permute.xlu0 13
        %4204 = vperm.xlu0 %4203, %v4159
        %v4205 = vpop.permute.xlu0 %4204
        %4208 = vset.pattern.permute.xlu0 13
        %4209 = vperm.xlu0 %4208, %v4160
        %v4210 = vpop.permute.xlu0 %4209
        %4213 = vset.pattern.permute.xlu0 13
        %4214 = vperm.xlu0 %4213, %v4161
        %v4215 = vpop.permute.xlu0 %4214
        %4218 = vset.pattern.permute.xlu0 13
        %4219 = vperm.xlu0 %4218, %v4162
        %v4220 = vpop.permute.xlu0 %4219
        %4223 = vset.pattern.permute.xlu0 13
        %4224 = vperm.xlu0 %4223, %v4163
        %v4225 = vpop.permute.xlu0 %4224
        %4228 = vset.pattern.permute.xlu0 13
        %4229 = vperm.xlu0 %4228, %v4164
        %v4230 = vpop.permute.xlu0 %4229
        %4233 = vset.pattern.permute.xlu0 13
        %4234 = vperm.xlu0 %4233, %v4165
        %v4235 = vpop.permute.xlu0 %4234
        %4238 = vset.pattern.permute.xlu0 13
        %4239 = vperm.xlu0 %4238, %v4166
        %v4240 = vpop.permute.xlu0 %4239
        %4243 = vset.pattern.permute.xlu0 13
        %4244 = vperm.xlu0 %4243, %v4167
        %v4245 = vpop.permute.xlu0 %4244
        %4248 = vset.pattern.permute.xlu0 13
        %4249 = vperm.xlu0 %4248, %v4168
        %v4250 = vpop.permute.xlu0 %4249
        %4253 = vset.pattern.permute.xlu0 13
        %4254 = vperm.xlu0 %4253, %v4169
        %v4255 = vpop.permute.xlu0 %4254
        %4258 = vset.pattern.permute.xlu0 13
        %4259 = vperm.xlu0 %4258, %v4170
        %v4260 = vpop.permute.xlu0 %4259
        %4263 = vset.pattern.permute.xlu0 13
        %4264 = vperm.xlu0 %4263, %v4171
        %v4265 = vpop.permute.xlu0 %4264
        %4268 = vset.pattern.permute.xlu0 13
        %4269 = vperm.xlu0 %4268, %v4172
        %v4270 = vpop.permute.xlu0 %4269
        %4273 = vset.pattern.permute.xlu0 13
        %4274 = vperm.xlu0 %4273, %v4173
        %v4275 = vpop.permute.xlu0 %4274
        %4278 = vset.pattern.permute.xlu0 13
        %4279 = vperm.xlu0 %4278, %v4174
        %v4280 = vpop.permute.xlu0 %4279
        %v4282 = vlaneseq
        %v4283 = vshrl.u32 %v4282, 7
        %v4284 = vsub.s32 5, %v4283
        %v4285 = vrot.slane %v550, %v4284
        %v4286 = vmul.f32 %v4205, %v4285
        %v4287 = vmul.f32 %v4210, %v4285
        %v4288 = vmul.f32 %v4215, %v4285
        %v4289 = vmul.f32 %v4220, %v4285
        %v4290 = vmul.f32 %v4225, %v4285
        %v4291 = vmul.f32 %v4230, %v4285
        %v4292 = vmul.f32 %v4235, %v4285
        %v4293 = vmul.f32 %v4240, %v4285
        %v4294 = vmul.f32 %v4245, %v4285
        %v4295 = vmul.f32 %v4250, %v4285
        %v4296 = vmul.f32 %v4255, %v4285
        %v4297 = vmul.f32 %v4260, %v4285
        %v4298 = vmul.f32 %v4265, %v4285
        %v4299 = vmul.f32 %v4270, %v4285
        %v4300 = vmul.f32 %v4275, %v4285
        %v4301 = vmul.f32 %v4280, %v4285
        %v4302 = vlaneseq
        %v4303 = vshrl.u32 %v4302, 7
        %v4304 = vsub.s32 5, %v4303
        %v4305 = vrot.slane %v4201, %v4304
        %v4306 = vsub.f32 %v4286, %v4305
        %v4307 = vsub.f32 %v4287, %v4305
        %v4308 = vsub.f32 %v4288, %v4305
        %v4309 = vsub.f32 %v4289, %v4305
        %v4310 = vsub.f32 %v4290, %v4305
        %v4311 = vsub.f32 %v4291, %v4305
        %v4312 = vsub.f32 %v4292, %v4305
        %v4313 = vsub.f32 %v4293, %v4305
        %v4314 = vsub.f32 %v4294, %v4305
        %v4315 = vsub.f32 %v4295, %v4305
        %v4316 = vsub.f32 %v4296, %v4305
        %v4317 = vsub.f32 %v4297, %v4305
        %v4318 = vsub.f32 %v4298, %v4305
        %v4319 = vsub.f32 %v4299, %v4305
        %v4320 = vsub.f32 %v4300, %v4305
        %v4321 = vsub.f32 %v4301, %v4305
        %v4322 = vmul.f32 %v4306, 1.442695
        %v4323 = vpow.pop %v4322
        %v4324 = vmul.f32 %v4307, 1.442695
        %v4325 = vpow.pop %v4324
        %v4326 = vmul.f32 %v4308, 1.442695
        %v4327 = vpow.pop %v4326
        %v4328 = vmul.f32 %v4309, 1.442695
        %v4329 = vpow.pop %v4328
        %v4330 = vmul.f32 %v4310, 1.442695
        %v4331 = vpow.pop %v4330
        %v4332 = vmul.f32 %v4311, 1.442695
        %v4333 = vpow.pop %v4332
        %v4334 = vmul.f32 %v4312, 1.442695
        %v4335 = vpow.pop %v4334
        %v4336 = vmul.f32 %v4313, 1.442695
        %v4337 = vpow.pop %v4336
        %v4338 = vmul.f32 %v4314, 1.442695
        %v4339 = vpow.pop %v4338
        %v4340 = vmul.f32 %v4315, 1.442695
        %v4341 = vpow.pop %v4340
        %v4342 = vmul.f32 %v4316, 1.442695
        %v4343 = vpow.pop %v4342
        %v4344 = vmul.f32 %v4317, 1.442695
        %v4345 = vpow.pop %v4344
        %v4346 = vmul.f32 %v4318, 1.442695
        %v4347 = vpow.pop %v4346
        %v4348 = vmul.f32 %v4319, 1.442695
        %v4349 = vpow.pop %v4348
        %v4350 = vmul.f32 %v4320, 1.442695
        %v4351 = vpow.pop %v4350
        %v4352 = vmul.f32 %v4321, 1.442695
        %v4353 = vpow.pop %v4352
        %v4354 = vadd.f32 %v4323, %v4325
        %v4355 = vadd.f32 %v4354, %v4327
        %v4356 = vadd.f32 %v4355, %v4329
        %v4357 = vadd.f32 %v4356, %v4331
        %v4358 = vadd.f32 %v4357, %v4333
        %v4359 = vadd.f32 %v4358, %v4335
        %v4360 = vadd.f32 %v4359, %v4337
        %v4361 = vadd.f32 %v4360, %v4339
        %v4362 = vadd.f32 %v4361, %v4341
        %v4363 = vadd.f32 %v4362, %v4343
        %v4364 = vadd.f32 %v4363, %v4345
        %v4365 = vadd.f32 %v4364, %v4347
        %v4366 = vadd.f32 %v4365, %v4349
        %v4367 = vadd.f32 %v4366, %v4351
        %v4368 = vadd.f32 %v4367, %v4353
        %v4369 = vrot.slane %v4368, 4
        %v4370 = vadd.f32 %v4368, %v4369
        %v4371 = vrot.slane %v4370, 2
        %v4372 = vadd.f32 %v4370, %v4371
        %v4373 = vrot.slane %v4372, 1
        %v4374 = vadd.f32 %v4372, %v4373
        %4376 = vset.pattern.permute.xlu0 13
        %4377 = vperm.xlu0 %4376, %v4175
        %v4378 = vpop.permute.xlu0 %4377
        %4381 = vset.pattern.permute.xlu0 13
        %4382 = vperm.xlu0 %4381, %v4176
        %v4383 = vpop.permute.xlu0 %4382
        %4386 = vset.pattern.permute.xlu0 13
        %4387 = vperm.xlu0 %4386, %v4177
        %v4388 = vpop.permute.xlu0 %4387
        %4391 = vset.pattern.permute.xlu0 13
        %4392 = vperm.xlu0 %4391, %v4178
        %v4393 = vpop.permute.xlu0 %4392
        %4396 = vset.pattern.permute.xlu0 13
        %4397 = vperm.xlu0 %4396, %v4179
        %v4398 = vpop.permute.xlu0 %4397
        %4401 = vset.pattern.permute.xlu0 13
        %4402 = vperm.xlu0 %4401, %v4180
        %v4403 = vpop.permute.xlu0 %4402
        %4406 = vset.pattern.permute.xlu0 13
        %4407 = vperm.xlu0 %4406, %v4181
        %v4408 = vpop.permute.xlu0 %4407
        %4411 = vset.pattern.permute.xlu0 13
        %4412 = vperm.xlu0 %4411, %v4182
        %v4413 = vpop.permute.xlu0 %4412
        %4416 = vset.pattern.permute.xlu0 13
        %4417 = vperm.xlu0 %4416, %v4183
        %v4418 = vpop.permute.xlu0 %4417
        %4421 = vset.pattern.permute.xlu0 13
        %4422 = vperm.xlu0 %4421, %v4184
        %v4423 = vpop.permute.xlu0 %4422
        %4426 = vset.pattern.permute.xlu0 13
        %4427 = vperm.xlu0 %4426, %v4185
        %v4428 = vpop.permute.xlu0 %4427
        %4431 = vset.pattern.permute.xlu0 13
        %4432 = vperm.xlu0 %4431, %v4186
        %v4433 = vpop.permute.xlu0 %4432
        %4436 = vset.pattern.permute.xlu0 13
        %4437 = vperm.xlu0 %4436, %v4187
        %v4438 = vpop.permute.xlu0 %4437
        %4441 = vset.pattern.permute.xlu0 13
        %4442 = vperm.xlu0 %4441, %v4188
        %v4443 = vpop.permute.xlu0 %4442
        %4446 = vset.pattern.permute.xlu0 13
        %4447 = vperm.xlu0 %4446, %v4189
        %v4448 = vpop.permute.xlu0 %4447
        %4451 = vset.pattern.permute.xlu0 13
        %4452 = vperm.xlu0 %4451, %v4190
        %v4453 = vpop.permute.xlu0 %4452
        %v4455 = vmul.f32 %v4323, %v4378
        %v4456 = vmul.f32 %v4325, %v4383
        %v4457 = vmul.f32 %v4327, %v4388
        %v4458 = vmul.f32 %v4329, %v4393
        %v4459 = vmul.f32 %v4331, %v4398
        %v4460 = vmul.f32 %v4333, %v4403
        %v4461 = vmul.f32 %v4335, %v4408
        %v4462 = vmul.f32 %v4337, %v4413
        %v4463 = vmul.f32 %v4339, %v4418
        %v4464 = vmul.f32 %v4341, %v4423
        %v4465 = vmul.f32 %v4343, %v4428
        %v4466 = vmul.f32 %v4345, %v4433
        %v4467 = vmul.f32 %v4347, %v4438
        %v4468 = vmul.f32 %v4349, %v4443
        %v4469 = vmul.f32 %v4351, %v4448
        %v4470 = vmul.f32 %v4353, %v4453
        %v4471 = vadd.f32 %v4455, %v4456
        %v4472 = vadd.f32 %v4471, %v4457
        %v4473 = vadd.f32 %v4472, %v4458
        %v4474 = vadd.f32 %v4473, %v4459
        %v4475 = vadd.f32 %v4474, %v4460
        %v4476 = vadd.f32 %v4475, %v4461
        %v4477 = vadd.f32 %v4476, %v4462
        %v4478 = vadd.f32 %v4477, %v4463
        %v4479 = vadd.f32 %v4478, %v4464
        %v4480 = vadd.f32 %v4479, %v4465
        %v4481 = vadd.f32 %v4480, %v4466
        %v4482 = vadd.f32 %v4481, %v4467
        %v4483 = vadd.f32 %v4482, %v4468
        %v4484 = vadd.f32 %v4483, %v4469
        %v4485 = vadd.f32 %v4484, %v4470
        %v4486 = vrot.slane %v4485, 4
        %v4487 = vadd.f32 %v4485, %v4486
        %v4488 = vrot.slane %v4487, 2
        %v4489 = vadd.f32 %v4487, %v4488
        %v4490 = vrot.slane %v4489, 1
        %v4491 = vadd.f32 %v4489, %v4490
        %v4492 = vrcp.pop %v4374
        %v4493 = vmul.f32 %v4491, %v4492
        %4494 = vset.pattern.permute.xlu0 5
        %4495 = vperm.xlu0 %4494, %v1045
        %v4496 = vpop.permute.xlu0 %4495
        %v4498 = vmul.f32 %v555, %v4496
        %4499 = vset.pattern.permute.xlu0 5
        %4500 = vperm.xlu0 %4499, %v1082
        %v4501 = vpop.permute.xlu0 %4500
        %v4503 = vmul.f32 %v555, %v4501
        %v4504 = vsel %vm1453, %v4498, %v4503
        %4505 = vset.pattern.permute.xlu0 5
        %4506 = vperm.xlu0 %4505, %v4159
        %v4507 = vpop.permute.xlu0 %4506
        %4509 = vset.pattern.permute.xlu0 5
        %4510 = vperm.xlu0 %4509, %v4160
        %v4511 = vpop.permute.xlu0 %4510
        %4513 = vset.pattern.permute.xlu0 5
        %4514 = vperm.xlu0 %4513, %v4161
        %v4515 = vpop.permute.xlu0 %4514
        %4517 = vset.pattern.permute.xlu0 5
        %4518 = vperm.xlu0 %4517, %v4162
        %v4519 = vpop.permute.xlu0 %4518
        %4521 = vset.pattern.permute.xlu0 5
        %4522 = vperm.xlu0 %4521, %v4163
        %v4523 = vpop.permute.xlu0 %4522
        %4525 = vset.pattern.permute.xlu0 5
        %4526 = vperm.xlu0 %4525, %v4164
        %v4527 = vpop.permute.xlu0 %4526
        %4529 = vset.pattern.permute.xlu0 5
        %4530 = vperm.xlu0 %4529, %v4165
        %v4531 = vpop.permute.xlu0 %4530
        %4533 = vset.pattern.permute.xlu0 5
        %4534 = vperm.xlu0 %4533, %v4166
        %v4535 = vpop.permute.xlu0 %4534
        %4537 = vset.pattern.permute.xlu0 5
        %4538 = vperm.xlu0 %4537, %v4167
        %v4539 = vpop.permute.xlu0 %4538
        %4541 = vset.pattern.permute.xlu0 5
        %4542 = vperm.xlu0 %4541, %v4168
        %v4543 = vpop.permute.xlu0 %4542
        %4545 = vset.pattern.permute.xlu0 5
        %4546 = vperm.xlu0 %4545, %v4169
        %v4547 = vpop.permute.xlu0 %4546
        %4549 = vset.pattern.permute.xlu0 5
        %4550 = vperm.xlu0 %4549, %v4170
        %v4551 = vpop.permute.xlu0 %4550
        %4553 = vset.pattern.permute.xlu0 5
        %4554 = vperm.xlu0 %4553, %v4171
        %v4555 = vpop.permute.xlu0 %4554
        %4557 = vset.pattern.permute.xlu0 5
        %4558 = vperm.xlu0 %4557, %v4172
        %v4559 = vpop.permute.xlu0 %4558
        %4561 = vset.pattern.permute.xlu0 5
        %4562 = vperm.xlu0 %4561, %v4173
        %v4563 = vpop.permute.xlu0 %4562
        %4565 = vset.pattern.permute.xlu0 5
        %4566 = vperm.xlu0 %4565, %v4174
        %v4567 = vpop.permute.xlu0 %4566
        %v4569 = vlaneseq
        %v4570 = vshrl.u32 %v4569, 7
        %v4571 = vsub.s32 5, %v4570
        %v4572 = vrot.slane %v555, %v4571
        %v4573 = vmul.f32 %v4507, %v4572
        %v4574 = vmul.f32 %v4511, %v4572
        %v4575 = vmul.f32 %v4515, %v4572
        %v4576 = vmul.f32 %v4519, %v4572
        %v4577 = vmul.f32 %v4523, %v4572
        %v4578 = vmul.f32 %v4527, %v4572
        %v4579 = vmul.f32 %v4531, %v4572
        %v4580 = vmul.f32 %v4535, %v4572
        %v4581 = vmul.f32 %v4539, %v4572
        %v4582 = vmul.f32 %v4543, %v4572
        %v4583 = vmul.f32 %v4547, %v4572
        %v4584 = vmul.f32 %v4551, %v4572
        %v4585 = vmul.f32 %v4555, %v4572
        %v4586 = vmul.f32 %v4559, %v4572
        %v4587 = vmul.f32 %v4563, %v4572
        %v4588 = vmul.f32 %v4567, %v4572
        %v4589 = vlaneseq
        %v4590 = vshrl.u32 %v4589, 7
        %v4591 = vsub.s32 5, %v4590
        %v4592 = vrot.slane %v4504, %v4591
        %v4593 = vsub.f32 %v4573, %v4592
        %v4594 = vsub.f32 %v4574, %v4592
        %v4595 = vsub.f32 %v4575, %v4592
        %v4596 = vsub.f32 %v4576, %v4592
        %v4597 = vsub.f32 %v4577, %v4592
        %v4598 = vsub.f32 %v4578, %v4592
        %v4599 = vsub.f32 %v4579, %v4592
        %v4600 = vsub.f32 %v4580, %v4592
        %v4601 = vsub.f32 %v4581, %v4592
        %v4602 = vsub.f32 %v4582, %v4592
        %v4603 = vsub.f32 %v4583, %v4592
        %v4604 = vsub.f32 %v4584, %v4592
        %v4605 = vsub.f32 %v4585, %v4592
        %v4606 = vsub.f32 %v4586, %v4592
        %v4607 = vsub.f32 %v4587, %v4592
        %v4608 = vsub.f32 %v4588, %v4592
        %v4609 = vmul.f32 %v4593, 1.442695
        %v4610 = vpow.pop %v4609
        %v4611 = vmul.f32 %v4594, 1.442695
        %v4612 = vpow.pop %v4611
        %v4613 = vmul.f32 %v4595, 1.442695
        %v4614 = vpow.pop %v4613
        %v4615 = vmul.f32 %v4596, 1.442695
        %v4616 = vpow.pop %v4615
        %v4617 = vmul.f32 %v4597, 1.442695
        %v4618 = vpow.pop %v4617
        %v4619 = vmul.f32 %v4598, 1.442695
        %v4620 = vpow.pop %v4619
        %v4621 = vmul.f32 %v4599, 1.442695
        %v4622 = vpow.pop %v4621
        %v4623 = vmul.f32 %v4600, 1.442695
        %v4624 = vpow.pop %v4623
        %v4625 = vmul.f32 %v4601, 1.442695
        %v4626 = vpow.pop %v4625
        %v4627 = vmul.f32 %v4602, 1.442695
        %v4628 = vpow.pop %v4627
        %v4629 = vmul.f32 %v4603, 1.442695
        %v4630 = vpow.pop %v4629
        %v4631 = vmul.f32 %v4604, 1.442695
        %v4632 = vpow.pop %v4631
        %v4633 = vmul.f32 %v4605, 1.442695
        %v4634 = vpow.pop %v4633
        %v4635 = vmul.f32 %v4606, 1.442695
        %v4636 = vpow.pop %v4635
        %v4637 = vmul.f32 %v4607, 1.442695
        %v4638 = vpow.pop %v4637
        %v4639 = vmul.f32 %v4608, 1.442695
        %v4640 = vpow.pop %v4639
        %v4641 = vadd.f32 %v4610, %v4612
        %v4642 = vadd.f32 %v4641, %v4614
        %v4643 = vadd.f32 %v4642, %v4616
        %v4644 = vadd.f32 %v4643, %v4618
        %v4645 = vadd.f32 %v4644, %v4620
        %v4646 = vadd.f32 %v4645, %v4622
        %v4647 = vadd.f32 %v4646, %v4624
        %v4648 = vadd.f32 %v4647, %v4626
        %v4649 = vadd.f32 %v4648, %v4628
        %v4650 = vadd.f32 %v4649, %v4630
        %v4651 = vadd.f32 %v4650, %v4632
        %v4652 = vadd.f32 %v4651, %v4634
        %v4653 = vadd.f32 %v4652, %v4636
        %v4654 = vadd.f32 %v4653, %v4638
        %v4655 = vadd.f32 %v4654, %v4640
        %v4656 = vrot.slane %v4655, 4
        %v4657 = vadd.f32 %v4655, %v4656
        %v4658 = vrot.slane %v4657, 2
        %v4659 = vadd.f32 %v4657, %v4658
        %v4660 = vrot.slane %v4659, 1
        %v4661 = vadd.f32 %v4659, %v4660
        %4662 = vset.pattern.permute.xlu0 5
        %4663 = vperm.xlu0 %4662, %v4175
        %v4664 = vpop.permute.xlu0 %4663
        %4666 = vset.pattern.permute.xlu0 5
        %4667 = vperm.xlu0 %4666, %v4176
        %v4668 = vpop.permute.xlu0 %4667
        %4670 = vset.pattern.permute.xlu0 5
        %4671 = vperm.xlu0 %4670, %v4177
        %v4672 = vpop.permute.xlu0 %4671
        %4674 = vset.pattern.permute.xlu0 5
        %4675 = vperm.xlu0 %4674, %v4178
        %v4676 = vpop.permute.xlu0 %4675
        %4678 = vset.pattern.permute.xlu0 5
        %4679 = vperm.xlu0 %4678, %v4179
        %v4680 = vpop.permute.xlu0 %4679
        %4682 = vset.pattern.permute.xlu0 5
        %4683 = vperm.xlu0 %4682, %v4180
        %v4684 = vpop.permute.xlu0 %4683
        %4686 = vset.pattern.permute.xlu0 5
        %4687 = vperm.xlu0 %4686, %v4181
        %v4688 = vpop.permute.xlu0 %4687
        %4690 = vset.pattern.permute.xlu0 5
        %4691 = vperm.xlu0 %4690, %v4182
        %v4692 = vpop.permute.xlu0 %4691
        %4694 = vset.pattern.permute.xlu0 5
        %4695 = vperm.xlu0 %4694, %v4183
        %v4696 = vpop.permute.xlu0 %4695
        %4698 = vset.pattern.permute.xlu0 5
        %4699 = vperm.xlu0 %4698, %v4184
        %v4700 = vpop.permute.xlu0 %4699
        %4702 = vset.pattern.permute.xlu0 5
        %4703 = vperm.xlu0 %4702, %v4185
        %v4704 = vpop.permute.xlu0 %4703
        %4706 = vset.pattern.permute.xlu0 5
        %4707 = vperm.xlu0 %4706, %v4186
        %v4708 = vpop.permute.xlu0 %4707
        %4710 = vset.pattern.permute.xlu0 5
        %4711 = vperm.xlu0 %4710, %v4187
        %v4712 = vpop.permute.xlu0 %4711
        %4714 = vset.pattern.permute.xlu0 5
        %4715 = vperm.xlu0 %4714, %v4188
        %v4716 = vpop.permute.xlu0 %4715
        %4718 = vset.pattern.permute.xlu0 5
        %4719 = vperm.xlu0 %4718, %v4189
        %v4720 = vpop.permute.xlu0 %4719
        %4722 = vset.pattern.permute.xlu0 5
        %4723 = vperm.xlu0 %4722, %v4190
        %v4724 = vpop.permute.xlu0 %4723
        %v4726 = vmul.f32 %v4610, %v4664
        %v4727 = vmul.f32 %v4612, %v4668
        %v4728 = vmul.f32 %v4614, %v4672
        %v4729 = vmul.f32 %v4616, %v4676
        %v4730 = vmul.f32 %v4618, %v4680
        %v4731 = vmul.f32 %v4620, %v4684
        %v4732 = vmul.f32 %v4622, %v4688
        %v4733 = vmul.f32 %v4624, %v4692
        %v4734 = vmul.f32 %v4626, %v4696
        %v4735 = vmul.f32 %v4628, %v4700
        %v4736 = vmul.f32 %v4630, %v4704
        %v4737 = vmul.f32 %v4632, %v4708
        %v4738 = vmul.f32 %v4634, %v4712
        %v4739 = vmul.f32 %v4636, %v4716
        %v4740 = vmul.f32 %v4638, %v4720
        %v4741 = vmul.f32 %v4640, %v4724
        %v4742 = vadd.f32 %v4726, %v4727
        %v4743 = vadd.f32 %v4742, %v4728
        %v4744 = vadd.f32 %v4743, %v4729
        %v4745 = vadd.f32 %v4744, %v4730
        %v4746 = vadd.f32 %v4745, %v4731
        %v4747 = vadd.f32 %v4746, %v4732
        %v4748 = vadd.f32 %v4747, %v4733
        %v4749 = vadd.f32 %v4748, %v4734
        %v4750 = vadd.f32 %v4749, %v4735
        %v4751 = vadd.f32 %v4750, %v4736
        %v4752 = vadd.f32 %v4751, %v4737
        %v4753 = vadd.f32 %v4752, %v4738
        %v4754 = vadd.f32 %v4753, %v4739
        %v4755 = vadd.f32 %v4754, %v4740
        %v4756 = vadd.f32 %v4755, %v4741
        %v4757 = vrot.slane %v4756, 4
        %v4758 = vadd.f32 %v4756, %v4757
        %v4759 = vrot.slane %v4758, 2
        %v4760 = vadd.f32 %v4758, %v4759
        %v4761 = vrot.slane %v4760, 1
        %v4762 = vadd.f32 %v4760, %v4761
        %v4763 = vrcp.pop %v4661
        %v4764 = vmul.f32 %v4762, %v4763
        %v4765 = vmul.f32 %v4493, %v4764
        %4766 = vst [vmem:[#allocation2 + $0x5] sm:$0x1] %v4765
        %v4767 = vld [vmem:[#allocation3] sm:$0xff]
        %v4768 = vld [vmem:[#allocation3 + $0x8] sm:$0xff]
        %v4769 = vld [vmem:[#allocation3 + $0x10] sm:$0xff]
        %v4770 = vld [vmem:[#allocation3 + $0x18] sm:$0xff]
        %v4771 = vld [vmem:[#allocation3 + $0x20] sm:$0xff]
        %v4772 = vld [vmem:[#allocation3 + $0x28] sm:$0xff]
        %v4773 = vld [vmem:[#allocation3 + $0x30] sm:$0xff]
        %v4774 = vld [vmem:[#allocation3 + $0x38] sm:$0xff]
        %v4775 = vld [vmem:[#allocation3 + $0x40] sm:$0xff]
        %v4776 = vld [vmem:[#allocation3 + $0x48] sm:$0xff]
        %v4777 = vld [vmem:[#allocation3 + $0x50] sm:$0xff]
        %v4778 = vld [vmem:[#allocation3 + $0x58] sm:$0xff]
        %v4779 = vld [vmem:[#allocation3 + $0x60] sm:$0xff]
        %v4780 = vld [vmem:[#allocation3 + $0x68] sm:$0xff]
        %v4781 = vld [vmem:[#allocation3 + $0x70] sm:$0xff]
        %v4782 = vld [vmem:[#allocation3 + $0x78] sm:$0xff]
        %v4783 = vld [vmem:[#allocation4] sm:$0xff]
        %v4784 = vld [vmem:[#allocation4 + $0x8] sm:$0xff]
        %v4785 = vld [vmem:[#allocation4 + $0x10] sm:$0xff]
        %v4786 = vld [vmem:[#allocation4 + $0x18] sm:$0xff]
        %v4787 = vld [vmem:[#allocation4 + $0x20] sm:$0xff]
        %v4788 = vld [vmem:[#allocation4 + $0x28] sm:$0xff]
        %v4789 = vld [vmem:[#allocation4 + $0x30] sm:$0xff]
        %v4790 = vld [vmem:[#allocation4 + $0x38] sm:$0xff]
        %v4791 = vld [vmem:[#allocation4 + $0x40] sm:$0xff]
        %v4792 = vld [vmem:[#allocation4 + $0x48] sm:$0xff]
        %v4793 = vld [vmem:[#allocation4 + $0x50] sm:$0xff]
        %v4794 = vld [vmem:[#allocation4 + $0x58] sm:$0xff]
        %v4795 = vld [vmem:[#allocation4 + $0x60] sm:$0xff]
        %v4796 = vld [vmem:[#allocation4 + $0x68] sm:$0xff]
        %v4797 = vld [vmem:[#allocation4 + $0x70] sm:$0xff]
        %v4798 = vld [vmem:[#allocation4 + $0x78] sm:$0xff]
        %4799 = vset.pattern.permute.xlu0 14
        %4800 = vperm.xlu0 %4799, %v1045
        %v4801 = vpop.permute.xlu0 %4800
        %v4803 = vmul.f32 %v550, %v4801
        %4804 = vset.pattern.permute.xlu0 14
        %4805 = vperm.xlu0 %4804, %v1082
        %v4806 = vpop.permute.xlu0 %4805
        %v4808 = vmul.f32 %v550, %v4806
        %v4809 = vsel %vm1147, %v4803, %v4808
        %4811 = vset.pattern.permute.xlu0 14
        %4812 = vperm.xlu0 %4811, %v4767
        %v4813 = vpop.permute.xlu0 %4812
        %4816 = vset.pattern.permute.xlu0 14
        %4817 = vperm.xlu0 %4816, %v4768
        %v4818 = vpop.permute.xlu0 %4817
        %4821 = vset.pattern.permute.xlu0 14
        %4822 = vperm.xlu0 %4821, %v4769
        %v4823 = vpop.permute.xlu0 %4822
        %4826 = vset.pattern.permute.xlu0 14
        %4827 = vperm.xlu0 %4826, %v4770
        %v4828 = vpop.permute.xlu0 %4827
        %4831 = vset.pattern.permute.xlu0 14
        %4832 = vperm.xlu0 %4831, %v4771
        %v4833 = vpop.permute.xlu0 %4832
        %4836 = vset.pattern.permute.xlu0 14
        %4837 = vperm.xlu0 %4836, %v4772
        %v4838 = vpop.permute.xlu0 %4837
        %4841 = vset.pattern.permute.xlu0 14
        %4842 = vperm.xlu0 %4841, %v4773
        %v4843 = vpop.permute.xlu0 %4842
        %4846 = vset.pattern.permute.xlu0 14
        %4847 = vperm.xlu0 %4846, %v4774
        %v4848 = vpop.permute.xlu0 %4847
        %4851 = vset.pattern.permute.xlu0 14
        %4852 = vperm.xlu0 %4851, %v4775
        %v4853 = vpop.permute.xlu0 %4852
        %4856 = vset.pattern.permute.xlu0 14
        %4857 = vperm.xlu0 %4856, %v4776
        %v4858 = vpop.permute.xlu0 %4857
        %4861 = vset.pattern.permute.xlu0 14
        %4862 = vperm.xlu0 %4861, %v4777
        %v4863 = vpop.permute.xlu0 %4862
        %4866 = vset.pattern.permute.xlu0 14
        %4867 = vperm.xlu0 %4866, %v4778
        %v4868 = vpop.permute.xlu0 %4867
        %4871 = vset.pattern.permute.xlu0 14
        %4872 = vperm.xlu0 %4871, %v4779
        %v4873 = vpop.permute.xlu0 %4872
        %4876 = vset.pattern.permute.xlu0 14
        %4877 = vperm.xlu0 %4876, %v4780
        %v4878 = vpop.permute.xlu0 %4877
        %4881 = vset.pattern.permute.xlu0 14
        %4882 = vperm.xlu0 %4881, %v4781
        %v4883 = vpop.permute.xlu0 %4882
        %4886 = vset.pattern.permute.xlu0 14
        %4887 = vperm.xlu0 %4886, %v4782
        %v4888 = vpop.permute.xlu0 %4887
        %v4890 = vlaneseq
        %v4891 = vshrl.u32 %v4890, 7
        %v4892 = vsub.s32 6, %v4891
        %v4893 = vrot.slane %v550, %v4892
        %v4894 = vmul.f32 %v4813, %v4893
        %v4895 = vmul.f32 %v4818, %v4893
        %v4896 = vmul.f32 %v4823, %v4893
        %v4897 = vmul.f32 %v4828, %v4893
        %v4898 = vmul.f32 %v4833, %v4893
        %v4899 = vmul.f32 %v4838, %v4893
        %v4900 = vmul.f32 %v4843, %v4893
        %v4901 = vmul.f32 %v4848, %v4893
        %v4902 = vmul.f32 %v4853, %v4893
        %v4903 = vmul.f32 %v4858, %v4893
        %v4904 = vmul.f32 %v4863, %v4893
        %v4905 = vmul.f32 %v4868, %v4893
        %v4906 = vmul.f32 %v4873, %v4893
        %v4907 = vmul.f32 %v4878, %v4893
        %v4908 = vmul.f32 %v4883, %v4893
        %v4909 = vmul.f32 %v4888, %v4893
        %v4910 = vlaneseq
        %v4911 = vshrl.u32 %v4910, 7
        %v4912 = vsub.s32 6, %v4911
        %v4913 = vrot.slane %v4809, %v4912
        %v4914 = vsub.f32 %v4894, %v4913
        %v4915 = vsub.f32 %v4895, %v4913
        %v4916 = vsub.f32 %v4896, %v4913
        %v4917 = vsub.f32 %v4897, %v4913
        %v4918 = vsub.f32 %v4898, %v4913
        %v4919 = vsub.f32 %v4899, %v4913
        %v4920 = vsub.f32 %v4900, %v4913
        %v4921 = vsub.f32 %v4901, %v4913
        %v4922 = vsub.f32 %v4902, %v4913
        %v4923 = vsub.f32 %v4903, %v4913
        %v4924 = vsub.f32 %v4904, %v4913
        %v4925 = vsub.f32 %v4905, %v4913
        %v4926 = vsub.f32 %v4906, %v4913
        %v4927 = vsub.f32 %v4907, %v4913
        %v4928 = vsub.f32 %v4908, %v4913
        %v4929 = vsub.f32 %v4909, %v4913
        %v4930 = vmul.f32 %v4914, 1.442695
        %v4931 = vpow.pop %v4930
        %v4932 = vmul.f32 %v4915, 1.442695
        %v4933 = vpow.pop %v4932
        %v4934 = vmul.f32 %v4916, 1.442695
        %v4935 = vpow.pop %v4934
        %v4936 = vmul.f32 %v4917, 1.442695
        %v4937 = vpow.pop %v4936
        %v4938 = vmul.f32 %v4918, 1.442695
        %v4939 = vpow.pop %v4938
        %v4940 = vmul.f32 %v4919, 1.442695
        %v4941 = vpow.pop %v4940
        %v4942 = vmul.f32 %v4920, 1.442695
        %v4943 = vpow.pop %v4942
        %v4944 = vmul.f32 %v4921, 1.442695
        %v4945 = vpow.pop %v4944
        %v4946 = vmul.f32 %v4922, 1.442695
        %v4947 = vpow.pop %v4946
        %v4948 = vmul.f32 %v4923, 1.442695
        %v4949 = vpow.pop %v4948
        %v4950 = vmul.f32 %v4924, 1.442695
        %v4951 = vpow.pop %v4950
        %v4952 = vmul.f32 %v4925, 1.442695
        %v4953 = vpow.pop %v4952
        %v4954 = vmul.f32 %v4926, 1.442695
        %v4955 = vpow.pop %v4954
        %v4956 = vmul.f32 %v4927, 1.442695
        %v4957 = vpow.pop %v4956
        %v4958 = vmul.f32 %v4928, 1.442695
        %v4959 = vpow.pop %v4958
        %v4960 = vmul.f32 %v4929, 1.442695
        %v4961 = vpow.pop %v4960
        %v4962 = vadd.f32 %v4931, %v4933
        %v4963 = vadd.f32 %v4962, %v4935
        %v4964 = vadd.f32 %v4963, %v4937
        %v4965 = vadd.f32 %v4964, %v4939
        %v4966 = vadd.f32 %v4965, %v4941
        %v4967 = vadd.f32 %v4966, %v4943
        %v4968 = vadd.f32 %v4967, %v4945
        %v4969 = vadd.f32 %v4968, %v4947
        %v4970 = vadd.f32 %v4969, %v4949
        %v4971 = vadd.f32 %v4970, %v4951
        %v4972 = vadd.f32 %v4971, %v4953
        %v4973 = vadd.f32 %v4972, %v4955
        %v4974 = vadd.f32 %v4973, %v4957
        %v4975 = vadd.f32 %v4974, %v4959
        %v4976 = vadd.f32 %v4975, %v4961
        %v4977 = vrot.slane %v4976, 4
        %v4978 = vadd.f32 %v4976, %v4977
        %v4979 = vrot.slane %v4978, 2
        %v4980 = vadd.f32 %v4978, %v4979
        %v4981 = vrot.slane %v4980, 1
        %v4982 = vadd.f32 %v4980, %v4981
        %4984 = vset.pattern.permute.xlu0 14
        %4985 = vperm.xlu0 %4984, %v4783
        %v4986 = vpop.permute.xlu0 %4985
        %4989 = vset.pattern.permute.xlu0 14
        %4990 = vperm.xlu0 %4989, %v4784
        %v4991 = vpop.permute.xlu0 %4990
        %4994 = vset.pattern.permute.xlu0 14
        %4995 = vperm.xlu0 %4994, %v4785
        %v4996 = vpop.permute.xlu0 %4995
        %4999 = vset.pattern.permute.xlu0 14
        %5000 = vperm.xlu0 %4999, %v4786
        %v5001 = vpop.permute.xlu0 %5000
        %5004 = vset.pattern.permute.xlu0 14
        %5005 = vperm.xlu0 %5004, %v4787
        %v5006 = vpop.permute.xlu0 %5005
        %5009 = vset.pattern.permute.xlu0 14
        %5010 = vperm.xlu0 %5009, %v4788
        %v5011 = vpop.permute.xlu0 %5010
        %5014 = vset.pattern.permute.xlu0 14
        %5015 = vperm.xlu0 %5014, %v4789
        %v5016 = vpop.permute.xlu0 %5015
        %5019 = vset.pattern.permute.xlu0 14
        %5020 = vperm.xlu0 %5019, %v4790
        %v5021 = vpop.permute.xlu0 %5020
        %5024 = vset.pattern.permute.xlu0 14
        %5025 = vperm.xlu0 %5024, %v4791
        %v5026 = vpop.permute.xlu0 %5025
        %5029 = vset.pattern.permute.xlu0 14
        %5030 = vperm.xlu0 %5029, %v4792
        %v5031 = vpop.permute.xlu0 %5030
        %5034 = vset.pattern.permute.xlu0 14
        %5035 = vperm.xlu0 %5034, %v4793
        %v5036 = vpop.permute.xlu0 %5035
        %5039 = vset.pattern.permute.xlu0 14
        %5040 = vperm.xlu0 %5039, %v4794
        %v5041 = vpop.permute.xlu0 %5040
        %5044 = vset.pattern.permute.xlu0 14
        %5045 = vperm.xlu0 %5044, %v4795
        %v5046 = vpop.permute.xlu0 %5045
        %5049 = vset.pattern.permute.xlu0 14
        %5050 = vperm.xlu0 %5049, %v4796
        %v5051 = vpop.permute.xlu0 %5050
        %5054 = vset.pattern.permute.xlu0 14
        %5055 = vperm.xlu0 %5054, %v4797
        %v5056 = vpop.permute.xlu0 %5055
        %5059 = vset.pattern.permute.xlu0 14
        %5060 = vperm.xlu0 %5059, %v4798
        %v5061 = vpop.permute.xlu0 %5060
        %v5063 = vmul.f32 %v4931, %v4986
        %v5064 = vmul.f32 %v4933, %v4991
        %v5065 = vmul.f32 %v4935, %v4996
        %v5066 = vmul.f32 %v4937, %v5001
        %v5067 = vmul.f32 %v4939, %v5006
        %v5068 = vmul.f32 %v4941, %v5011
        %v5069 = vmul.f32 %v4943, %v5016
        %v5070 = vmul.f32 %v4945, %v5021
        %v5071 = vmul.f32 %v4947, %v5026
        %v5072 = vmul.f32 %v4949, %v5031
        %v5073 = vmul.f32 %v4951, %v5036
        %v5074 = vmul.f32 %v4953, %v5041
        %v5075 = vmul.f32 %v4955, %v5046
        %v5076 = vmul.f32 %v4957, %v5051
        %v5077 = vmul.f32 %v4959, %v5056
        %v5078 = vmul.f32 %v4961, %v5061
        %v5079 = vadd.f32 %v5063, %v5064
        %v5080 = vadd.f32 %v5079, %v5065
        %v5081 = vadd.f32 %v5080, %v5066
        %v5082 = vadd.f32 %v5081, %v5067
        %v5083 = vadd.f32 %v5082, %v5068
        %v5084 = vadd.f32 %v5083, %v5069
        %v5085 = vadd.f32 %v5084, %v5070
        %v5086 = vadd.f32 %v5085, %v5071
        %v5087 = vadd.f32 %v5086, %v5072
        %v5088 = vadd.f32 %v5087, %v5073
        %v5089 = vadd.f32 %v5088, %v5074
        %v5090 = vadd.f32 %v5089, %v5075
        %v5091 = vadd.f32 %v5090, %v5076
        %v5092 = vadd.f32 %v5091, %v5077
        %v5093 = vadd.f32 %v5092, %v5078
        %v5094 = vrot.slane %v5093, 4
        %v5095 = vadd.f32 %v5093, %v5094
        %v5096 = vrot.slane %v5095, 2
        %v5097 = vadd.f32 %v5095, %v5096
        %v5098 = vrot.slane %v5097, 1
        %v5099 = vadd.f32 %v5097, %v5098
        %v5100 = vrcp.pop %v4982
        %v5101 = vmul.f32 %v5099, %v5100
        %5102 = vset.pattern.permute.xlu0 6
        %5103 = vperm.xlu0 %5102, %v1045
        %v5104 = vpop.permute.xlu0 %5103
        %v5106 = vmul.f32 %v555, %v5104
        %5107 = vset.pattern.permute.xlu0 6
        %5108 = vperm.xlu0 %5107, %v1082
        %v5109 = vpop.permute.xlu0 %5108
        %v5111 = vmul.f32 %v555, %v5109
        %v5112 = vsel %vm1453, %v5106, %v5111
        %5113 = vset.pattern.permute.xlu0 6
        %5114 = vperm.xlu0 %5113, %v4767
        %v5115 = vpop.permute.xlu0 %5114
        %5117 = vset.pattern.permute.xlu0 6
        %5118 = vperm.xlu0 %5117, %v4768
        %v5119 = vpop.permute.xlu0 %5118
        %5121 = vset.pattern.permute.xlu0 6
        %5122 = vperm.xlu0 %5121, %v4769
        %v5123 = vpop.permute.xlu0 %5122
        %5125 = vset.pattern.permute.xlu0 6
        %5126 = vperm.xlu0 %5125, %v4770
        %v5127 = vpop.permute.xlu0 %5126
        %5129 = vset.pattern.permute.xlu0 6
        %5130 = vperm.xlu0 %5129, %v4771
        %v5131 = vpop.permute.xlu0 %5130
        %5133 = vset.pattern.permute.xlu0 6
        %5134 = vperm.xlu0 %5133, %v4772
        %v5135 = vpop.permute.xlu0 %5134
        %5137 = vset.pattern.permute.xlu0 6
        %5138 = vperm.xlu0 %5137, %v4773
        %v5139 = vpop.permute.xlu0 %5138
        %5141 = vset.pattern.permute.xlu0 6
        %5142 = vperm.xlu0 %5141, %v4774
        %v5143 = vpop.permute.xlu0 %5142
        %5145 = vset.pattern.permute.xlu0 6
        %5146 = vperm.xlu0 %5145, %v4775
        %v5147 = vpop.permute.xlu0 %5146
        %5149 = vset.pattern.permute.xlu0 6
        %5150 = vperm.xlu0 %5149, %v4776
        %v5151 = vpop.permute.xlu0 %5150
        %5153 = vset.pattern.permute.xlu0 6
        %5154 = vperm.xlu0 %5153, %v4777
        %v5155 = vpop.permute.xlu0 %5154
        %5157 = vset.pattern.permute.xlu0 6
        %5158 = vperm.xlu0 %5157, %v4778
        %v5159 = vpop.permute.xlu0 %5158
        %5161 = vset.pattern.permute.xlu0 6
        %5162 = vperm.xlu0 %5161, %v4779
        %v5163 = vpop.permute.xlu0 %5162
        %5165 = vset.pattern.permute.xlu0 6
        %5166 = vperm.xlu0 %5165, %v4780
        %v5167 = vpop.permute.xlu0 %5166
        %5169 = vset.pattern.permute.xlu0 6
        %5170 = vperm.xlu0 %5169, %v4781
        %v5171 = vpop.permute.xlu0 %5170
        %5173 = vset.pattern.permute.xlu0 6
        %5174 = vperm.xlu0 %5173, %v4782
        %v5175 = vpop.permute.xlu0 %5174
        %v5177 = vlaneseq
        %v5178 = vshrl.u32 %v5177, 7
        %v5179 = vsub.s32 6, %v5178
        %v5180 = vrot.slane %v555, %v5179
        %v5181 = vmul.f32 %v5115, %v5180
        %v5182 = vmul.f32 %v5119, %v5180
        %v5183 = vmul.f32 %v5123, %v5180
        %v5184 = vmul.f32 %v5127, %v5180
        %v5185 = vmul.f32 %v5131, %v5180
        %v5186 = vmul.f32 %v5135, %v5180
        %v5187 = vmul.f32 %v5139, %v5180
        %v5188 = vmul.f32 %v5143, %v5180
        %v5189 = vmul.f32 %v5147, %v5180
        %v5190 = vmul.f32 %v5151, %v5180
        %v5191 = vmul.f32 %v5155, %v5180
        %v5192 = vmul.f32 %v5159, %v5180
        %v5193 = vmul.f32 %v5163, %v5180
        %v5194 = vmul.f32 %v5167, %v5180
        %v5195 = vmul.f32 %v5171, %v5180
        %v5196 = vmul.f32 %v5175, %v5180
        %v5197 = vlaneseq
        %v5198 = vshrl.u32 %v5197, 7
        %v5199 = vsub.s32 6, %v5198
        %v5200 = vrot.slane %v5112, %v5199
        %v5201 = vsub.f32 %v5181, %v5200
        %v5202 = vsub.f32 %v5182, %v5200
        %v5203 = vsub.f32 %v5183, %v5200
        %v5204 = vsub.f32 %v5184, %v5200
        %v5205 = vsub.f32 %v5185, %v5200
        %v5206 = vsub.f32 %v5186, %v5200
        %v5207 = vsub.f32 %v5187, %v5200
        %v5208 = vsub.f32 %v5188, %v5200
        %v5209 = vsub.f32 %v5189, %v5200
        %v5210 = vsub.f32 %v5190, %v5200
        %v5211 = vsub.f32 %v5191, %v5200
        %v5212 = vsub.f32 %v5192, %v5200
        %v5213 = vsub.f32 %v5193, %v5200
        %v5214 = vsub.f32 %v5194, %v5200
        %v5215 = vsub.f32 %v5195, %v5200
        %v5216 = vsub.f32 %v5196, %v5200
        %v5217 = vmul.f32 %v5201, 1.442695
        %v5218 = vpow.pop %v5217
        %v5219 = vmul.f32 %v5202, 1.442695
        %v5220 = vpow.pop %v5219
        %v5221 = vmul.f32 %v5203, 1.442695
        %v5222 = vpow.pop %v5221
        %v5223 = vmul.f32 %v5204, 1.442695
        %v5224 = vpow.pop %v5223
        %v5225 = vmul.f32 %v5205, 1.442695
        %v5226 = vpow.pop %v5225
        %v5227 = vmul.f32 %v5206, 1.442695
        %v5228 = vpow.pop %v5227
        %v5229 = vmul.f32 %v5207, 1.442695
        %v5230 = vpow.pop %v5229
        %v5231 = vmul.f32 %v5208, 1.442695
        %v5232 = vpow.pop %v5231
        %v5233 = vmul.f32 %v5209, 1.442695
        %v5234 = vpow.pop %v5233
        %v5235 = vmul.f32 %v5210, 1.442695
        %v5236 = vpow.pop %v5235
        %v5237 = vmul.f32 %v5211, 1.442695
        %v5238 = vpow.pop %v5237
        %v5239 = vmul.f32 %v5212, 1.442695
        %v5240 = vpow.pop %v5239
        %v5241 = vmul.f32 %v5213, 1.442695
        %v5242 = vpow.pop %v5241
        %v5243 = vmul.f32 %v5214, 1.442695
        %v5244 = vpow.pop %v5243
        %v5245 = vmul.f32 %v5215, 1.442695
        %v5246 = vpow.pop %v5245
        %v5247 = vmul.f32 %v5216, 1.442695
        %v5248 = vpow.pop %v5247
        %v5249 = vadd.f32 %v5218, %v5220
        %v5250 = vadd.f32 %v5249, %v5222
        %v5251 = vadd.f32 %v5250, %v5224
        %v5252 = vadd.f32 %v5251, %v5226
        %v5253 = vadd.f32 %v5252, %v5228
        %v5254 = vadd.f32 %v5253, %v5230
        %v5255 = vadd.f32 %v5254, %v5232
        %v5256 = vadd.f32 %v5255, %v5234
        %v5257 = vadd.f32 %v5256, %v5236
        %v5258 = vadd.f32 %v5257, %v5238
        %v5259 = vadd.f32 %v5258, %v5240
        %v5260 = vadd.f32 %v5259, %v5242
        %v5261 = vadd.f32 %v5260, %v5244
        %v5262 = vadd.f32 %v5261, %v5246
        %v5263 = vadd.f32 %v5262, %v5248
        %v5264 = vrot.slane %v5263, 4
        %v5265 = vadd.f32 %v5263, %v5264
        %v5266 = vrot.slane %v5265, 2
        %v5267 = vadd.f32 %v5265, %v5266
        %v5268 = vrot.slane %v5267, 1
        %v5269 = vadd.f32 %v5267, %v5268
        %5270 = vset.pattern.permute.xlu0 6
        %5271 = vperm.xlu0 %5270, %v4783
        %v5272 = vpop.permute.xlu0 %5271
        %5274 = vset.pattern.permute.xlu0 6
        %5275 = vperm.xlu0 %5274, %v4784
        %v5276 = vpop.permute.xlu0 %5275
        %5278 = vset.pattern.permute.xlu0 6
        %5279 = vperm.xlu0 %5278, %v4785
        %v5280 = vpop.permute.xlu0 %5279
        %5282 = vset.pattern.permute.xlu0 6
        %5283 = vperm.xlu0 %5282, %v4786
        %v5284 = vpop.permute.xlu0 %5283
        %5286 = vset.pattern.permute.xlu0 6
        %5287 = vperm.xlu0 %5286, %v4787
        %v5288 = vpop.permute.xlu0 %5287
        %5290 = vset.pattern.permute.xlu0 6
        %5291 = vperm.xlu0 %5290, %v4788
        %v5292 = vpop.permute.xlu0 %5291
        %5294 = vset.pattern.permute.xlu0 6
        %5295 = vperm.xlu0 %5294, %v4789
        %v5296 = vpop.permute.xlu0 %5295
        %5298 = vset.pattern.permute.xlu0 6
        %5299 = vperm.xlu0 %5298, %v4790
        %v5300 = vpop.permute.xlu0 %5299
        %5302 = vset.pattern.permute.xlu0 6
        %5303 = vperm.xlu0 %5302, %v4791
        %v5304 = vpop.permute.xlu0 %5303
        %5306 = vset.pattern.permute.xlu0 6
        %5307 = vperm.xlu0 %5306, %v4792
        %v5308 = vpop.permute.xlu0 %5307
        %5310 = vset.pattern.permute.xlu0 6
        %5311 = vperm.xlu0 %5310, %v4793
        %v5312 = vpop.permute.xlu0 %5311
        %5314 = vset.pattern.permute.xlu0 6
        %5315 = vperm.xlu0 %5314, %v4794
        %v5316 = vpop.permute.xlu0 %5315
        %5318 = vset.pattern.permute.xlu0 6
        %5319 = vperm.xlu0 %5318, %v4795
        %v5320 = vpop.permute.xlu0 %5319
        %5322 = vset.pattern.permute.xlu0 6
        %5323 = vperm.xlu0 %5322, %v4796
        %v5324 = vpop.permute.xlu0 %5323
        %5326 = vset.pattern.permute.xlu0 6
        %5327 = vperm.xlu0 %5326, %v4797
        %v5328 = vpop.permute.xlu0 %5327
        %5330 = vset.pattern.permute.xlu0 6
        %5331 = vperm.xlu0 %5330, %v4798
        %v5332 = vpop.permute.xlu0 %5331
        %v5334 = vmul.f32 %v5218, %v5272
        %v5335 = vmul.f32 %v5220, %v5276
        %v5336 = vmul.f32 %v5222, %v5280
        %v5337 = vmul.f32 %v5224, %v5284
        %v5338 = vmul.f32 %v5226, %v5288
        %v5339 = vmul.f32 %v5228, %v5292
        %v5340 = vmul.f32 %v5230, %v5296
        %v5341 = vmul.f32 %v5232, %v5300
        %v5342 = vmul.f32 %v5234, %v5304
        %v5343 = vmul.f32 %v5236, %v5308
        %v5344 = vmul.f32 %v5238, %v5312
        %v5345 = vmul.f32 %v5240, %v5316
        %v5346 = vmul.f32 %v5242, %v5320
        %v5347 = vmul.f32 %v5244, %v5324
        %v5348 = vmul.f32 %v5246, %v5328
        %v5349 = vmul.f32 %v5248, %v5332
        %v5350 = vadd.f32 %v5334, %v5335
        %v5351 = vadd.f32 %v5350, %v5336
        %v5352 = vadd.f32 %v5351, %v5337
        %v5353 = vadd.f32 %v5352, %v5338
        %v5354 = vadd.f32 %v5353, %v5339
        %v5355 = vadd.f32 %v5354, %v5340
        %v5356 = vadd.f32 %v5355, %v5341
        %v5357 = vadd.f32 %v5356, %v5342
        %v5358 = vadd.f32 %v5357, %v5343
        %v5359 = vadd.f32 %v5358, %v5344
        %v5360 = vadd.f32 %v5359, %v5345
        %v5361 = vadd.f32 %v5360, %v5346
        %v5362 = vadd.f32 %v5361, %v5347
        %v5363 = vadd.f32 %v5362, %v5348
        %v5364 = vadd.f32 %v5363, %v5349
        %v5365 = vrot.slane %v5364, 4
        %v5366 = vadd.f32 %v5364, %v5365
        %v5367 = vrot.slane %v5366, 2
        %v5368 = vadd.f32 %v5366, %v5367
        %v5369 = vrot.slane %v5368, 1
        %v5370 = vadd.f32 %v5368, %v5369
        %v5371 = vrcp.pop %v5269
        %v5372 = vmul.f32 %v5370, %v5371
        %v5373 = vmul.f32 %v5101, %v5372
        %5374 = vst [vmem:[#allocation2 + $0x6] sm:$0x1] %v5373
        %v5375 = vld [vmem:[#allocation3] sm:$0xff]
        %v5376 = vld [vmem:[#allocation3 + $0x8] sm:$0xff]
        %v5377 = vld [vmem:[#allocation3 + $0x10] sm:$0xff]
        %v5378 = vld [vmem:[#allocation3 + $0x18] sm:$0xff]
        %v5379 = vld [vmem:[#allocation3 + $0x20] sm:$0xff]
        %v5380 = vld [vmem:[#allocation3 + $0x28] sm:$0xff]
        %v5381 = vld [vmem:[#allocation3 + $0x30] sm:$0xff]
        %v5382 = vld [vmem:[#allocation3 + $0x38] sm:$0xff]
        %v5383 = vld [vmem:[#allocation3 + $0x40] sm:$0xff]
        %v5384 = vld [vmem:[#allocation3 + $0x48] sm:$0xff]
        %v5385 = vld [vmem:[#allocation3 + $0x50] sm:$0xff]
        %v5386 = vld [vmem:[#allocation3 + $0x58] sm:$0xff]
        %v5387 = vld [vmem:[#allocation3 + $0x60] sm:$0xff]
        %v5388 = vld [vmem:[#allocation3 + $0x68] sm:$0xff]
        %v5389 = vld [vmem:[#allocation3 + $0x70] sm:$0xff]
        %v5390 = vld [vmem:[#allocation3 + $0x78] sm:$0xff]
        %v5391 = vld [vmem:[#allocation4] sm:$0xff]
        %v5392 = vld [vmem:[#allocation4 + $0x8] sm:$0xff]
        %v5393 = vld [vmem:[#allocation4 + $0x10] sm:$0xff]
        %v5394 = vld [vmem:[#allocation4 + $0x18] sm:$0xff]
        %v5395 = vld [vmem:[#allocation4 + $0x20] sm:$0xff]
        %v5396 = vld [vmem:[#allocation4 + $0x28] sm:$0xff]
        %v5397 = vld [vmem:[#allocation4 + $0x30] sm:$0xff]
        %v5398 = vld [vmem:[#allocation4 + $0x38] sm:$0xff]
        %v5399 = vld [vmem:[#allocation4 + $0x40] sm:$0xff]
        %v5400 = vld [vmem:[#allocation4 + $0x48] sm:$0xff]
        %v5401 = vld [vmem:[#allocation4 + $0x50] sm:$0xff]
        %v5402 = vld [vmem:[#allocation4 + $0x58] sm:$0xff]
        %v5403 = vld [vmem:[#allocation4 + $0x60] sm:$0xff]
        %v5404 = vld [vmem:[#allocation4 + $0x68] sm:$0xff]
        %v5405 = vld [vmem:[#allocation4 + $0x70] sm:$0xff]
        %v5406 = vld [vmem:[#allocation4 + $0x78] sm:$0xff]
        %5407 = vset.pattern.permute.xlu0 15
        %5408 = vperm.xlu0 %5407, %v1045
        %v5409 = vpop.permute.xlu0 %5408
        %v5411 = vmul.f32 %v550, %v5409
        %5412 = vset.pattern.permute.xlu0 15
        %5413 = vperm.xlu0 %5412, %v1082
        %v5414 = vpop.permute.xlu0 %5413
        %v5416 = vmul.f32 %v550, %v5414
        %v5417 = vsel %vm1147, %v5411, %v5416
        %5419 = vset.pattern.permute.xlu0 15
        %5420 = vperm.xlu0 %5419, %v5375
        %v5421 = vpop.permute.xlu0 %5420
        %5424 = vset.pattern.permute.xlu0 15
        %5425 = vperm.xlu0 %5424, %v5376
        %v5426 = vpop.permute.xlu0 %5425
        %5429 = vset.pattern.permute.xlu0 15
        %5430 = vperm.xlu0 %5429, %v5377
        %v5431 = vpop.permute.xlu0 %5430
        %5434 = vset.pattern.permute.xlu0 15
        %5435 = vperm.xlu0 %5434, %v5378
        %v5436 = vpop.permute.xlu0 %5435
        %5439 = vset.pattern.permute.xlu0 15
        %5440 = vperm.xlu0 %5439, %v5379
        %v5441 = vpop.permute.xlu0 %5440
        %5444 = vset.pattern.permute.xlu0 15
        %5445 = vperm.xlu0 %5444, %v5380
        %v5446 = vpop.permute.xlu0 %5445
        %5449 = vset.pattern.permute.xlu0 15
        %5450 = vperm.xlu0 %5449, %v5381
        %v5451 = vpop.permute.xlu0 %5450
        %5454 = vset.pattern.permute.xlu0 15
        %5455 = vperm.xlu0 %5454, %v5382
        %v5456 = vpop.permute.xlu0 %5455
        %5459 = vset.pattern.permute.xlu0 15
        %5460 = vperm.xlu0 %5459, %v5383
        %v5461 = vpop.permute.xlu0 %5460
        %5464 = vset.pattern.permute.xlu0 15
        %5465 = vperm.xlu0 %5464, %v5384
        %v5466 = vpop.permute.xlu0 %5465
        %5469 = vset.pattern.permute.xlu0 15
        %5470 = vperm.xlu0 %5469, %v5385
        %v5471 = vpop.permute.xlu0 %5470
        %5474 = vset.pattern.permute.xlu0 15
        %5475 = vperm.xlu0 %5474, %v5386
        %v5476 = vpop.permute.xlu0 %5475
        %5479 = vset.pattern.permute.xlu0 15
        %5480 = vperm.xlu0 %5479, %v5387
        %v5481 = vpop.permute.xlu0 %5480
        %5484 = vset.pattern.permute.xlu0 15
        %5485 = vperm.xlu0 %5484, %v5388
        %v5486 = vpop.permute.xlu0 %5485
        %5489 = vset.pattern.permute.xlu0 15
        %5490 = vperm.xlu0 %5489, %v5389
        %v5491 = vpop.permute.xlu0 %5490
        %5494 = vset.pattern.permute.xlu0 15
        %5495 = vperm.xlu0 %5494, %v5390
        %v5496 = vpop.permute.xlu0 %5495
        %v5498 = vlaneseq
        %v5499 = vshrl.u32 %v5498, 7
        %v5500 = vsub.s32 7, %v5499
        %v5501 = vrot.slane %v550, %v5500
        %v5502 = vmul.f32 %v5421, %v5501
        %v5503 = vmul.f32 %v5426, %v5501
        %v5504 = vmul.f32 %v5431, %v5501
        %v5505 = vmul.f32 %v5436, %v5501
        %v5506 = vmul.f32 %v5441, %v5501
        %v5507 = vmul.f32 %v5446, %v5501
        %v5508 = vmul.f32 %v5451, %v5501
        %v5509 = vmul.f32 %v5456, %v5501
        %v5510 = vmul.f32 %v5461, %v5501
        %v5511 = vmul.f32 %v5466, %v5501
        %v5512 = vmul.f32 %v5471, %v5501
        %v5513 = vmul.f32 %v5476, %v5501
        %v5514 = vmul.f32 %v5481, %v5501
        %v5515 = vmul.f32 %v5486, %v5501
        %v5516 = vmul.f32 %v5491, %v5501
        %v5517 = vmul.f32 %v5496, %v5501
        %v5518 = vlaneseq
        %v5519 = vshrl.u32 %v5518, 7
        %v5520 = vsub.s32 7, %v5519
        %v5521 = vrot.slane %v5417, %v5520
        %v5522 = vsub.f32 %v5502, %v5521
        %v5523 = vsub.f32 %v5503, %v5521
        %v5524 = vsub.f32 %v5504, %v5521
        %v5525 = vsub.f32 %v5505, %v5521
        %v5526 = vsub.f32 %v5506, %v5521
        %v5527 = vsub.f32 %v5507, %v5521
        %v5528 = vsub.f32 %v5508, %v5521
        %v5529 = vsub.f32 %v5509, %v5521
        %v5530 = vsub.f32 %v5510, %v5521
        %v5531 = vsub.f32 %v5511, %v5521
        %v5532 = vsub.f32 %v5512, %v5521
        %v5533 = vsub.f32 %v5513, %v5521
        %v5534 = vsub.f32 %v5514, %v5521
        %v5535 = vsub.f32 %v5515, %v5521
        %v5536 = vsub.f32 %v5516, %v5521
        %v5537 = vsub.f32 %v5517, %v5521
        %v5538 = vmul.f32 %v5522, 1.442695
        %v5539 = vpow.pop %v5538
        %v5540 = vmul.f32 %v5523, 1.442695
        %v5541 = vpow.pop %v5540
        %v5542 = vmul.f32 %v5524, 1.442695
        %v5543 = vpow.pop %v5542
        %v5544 = vmul.f32 %v5525, 1.442695
        %v5545 = vpow.pop %v5544
        %v5546 = vmul.f32 %v5526, 1.442695
        %v5547 = vpow.pop %v5546
        %v5548 = vmul.f32 %v5527, 1.442695
        %v5549 = vpow.pop %v5548
        %v5550 = vmul.f32 %v5528, 1.442695
        %v5551 = vpow.pop %v5550
        %v5552 = vmul.f32 %v5529, 1.442695
        %v5553 = vpow.pop %v5552
        %v5554 = vmul.f32 %v5530, 1.442695
        %v5555 = vpow.pop %v5554
        %v5556 = vmul.f32 %v5531, 1.442695
        %v5557 = vpow.pop %v5556
        %v5558 = vmul.f32 %v5532, 1.442695
        %v5559 = vpow.pop %v5558
        %v5560 = vmul.f32 %v5533, 1.442695
        %v5561 = vpow.pop %v5560
        %v5562 = vmul.f32 %v5534, 1.442695
        %v5563 = vpow.pop %v5562
        %v5564 = vmul.f32 %v5535, 1.442695
        %v5565 = vpow.pop %v5564
        %v5566 = vmul.f32 %v5536, 1.442695
        %v5567 = vpow.pop %v5566
        %v5568 = vmul.f32 %v5537, 1.442695
        %v5569 = vpow.pop %v5568
        %v5570 = vadd.f32 %v5539, %v5541
        %v5571 = vadd.f32 %v5570, %v5543
        %v5572 = vadd.f32 %v5571, %v5545
        %v5573 = vadd.f32 %v5572, %v5547
        %v5574 = vadd.f32 %v5573, %v5549
        %v5575 = vadd.f32 %v5574, %v5551
        %v5576 = vadd.f32 %v5575, %v5553
        %v5577 = vadd.f32 %v5576, %v5555
        %v5578 = vadd.f32 %v5577, %v5557
        %v5579 = vadd.f32 %v5578, %v5559
        %v5580 = vadd.f32 %v5579, %v5561
        %v5581 = vadd.f32 %v5580, %v5563
        %v5582 = vadd.f32 %v5581, %v5565
        %v5583 = vadd.f32 %v5582, %v5567
        %v5584 = vadd.f32 %v5583, %v5569
        %v5585 = vrot.slane %v5584, 4
        %v5586 = vadd.f32 %v5584, %v5585
        %v5587 = vrot.slane %v5586, 2
        %v5588 = vadd.f32 %v5586, %v5587
        %v5589 = vrot.slane %v5588, 1
        %v5590 = vadd.f32 %v5588, %v5589
        %5592 = vset.pattern.permute.xlu0 15
        %5593 = vperm.xlu0 %5592, %v5391
        %v5594 = vpop.permute.xlu0 %5593
        %5597 = vset.pattern.permute.xlu0 15
        %5598 = vperm.xlu0 %5597, %v5392
        %v5599 = vpop.permute.xlu0 %5598
        %5602 = vset.pattern.permute.xlu0 15
        %5603 = vperm.xlu0 %5602, %v5393
        %v5604 = vpop.permute.xlu0 %5603
        %5607 = vset.pattern.permute.xlu0 15
        %5608 = vperm.xlu0 %5607, %v5394
        %v5609 = vpop.permute.xlu0 %5608
        %5612 = vset.pattern.permute.xlu0 15
        %5613 = vperm.xlu0 %5612, %v5395
        %v5614 = vpop.permute.xlu0 %5613
        %5617 = vset.pattern.permute.xlu0 15
        %5618 = vperm.xlu0 %5617, %v5396
        %v5619 = vpop.permute.xlu0 %5618
        %5622 = vset.pattern.permute.xlu0 15
        %5623 = vperm.xlu0 %5622, %v5397
        %v5624 = vpop.permute.xlu0 %5623
        %5627 = vset.pattern.permute.xlu0 15
        %5628 = vperm.xlu0 %5627, %v5398
        %v5629 = vpop.permute.xlu0 %5628
        %5632 = vset.pattern.permute.xlu0 15
        %5633 = vperm.xlu0 %5632, %v5399
        %v5634 = vpop.permute.xlu0 %5633
        %5637 = vset.pattern.permute.xlu0 15
        %5638 = vperm.xlu0 %5637, %v5400
        %v5639 = vpop.permute.xlu0 %5638
        %5642 = vset.pattern.permute.xlu0 15
        %5643 = vperm.xlu0 %5642, %v5401
        %v5644 = vpop.permute.xlu0 %5643
        %5647 = vset.pattern.permute.xlu0 15
        %5648 = vperm.xlu0 %5647, %v5402
        %v5649 = vpop.permute.xlu0 %5648
        %5652 = vset.pattern.permute.xlu0 15
        %5653 = vperm.xlu0 %5652, %v5403
        %v5654 = vpop.permute.xlu0 %5653
        %5657 = vset.pattern.permute.xlu0 15
        %5658 = vperm.xlu0 %5657, %v5404
        %v5659 = vpop.permute.xlu0 %5658
        %5662 = vset.pattern.permute.xlu0 15
        %5663 = vperm.xlu0 %5662, %v5405
        %v5664 = vpop.permute.xlu0 %5663
        %5667 = vset.pattern.permute.xlu0 15
        %5668 = vperm.xlu0 %5667, %v5406
        %v5669 = vpop.permute.xlu0 %5668
        %v5671 = vmul.f32 %v5539, %v5594
        %v5672 = vmul.f32 %v5541, %v5599
        %v5673 = vmul.f32 %v5543, %v5604
        %v5674 = vmul.f32 %v5545, %v5609
        %v5675 = vmul.f32 %v5547, %v5614
        %v5676 = vmul.f32 %v5549, %v5619
        %v5677 = vmul.f32 %v5551, %v5624
        %v5678 = vmul.f32 %v5553, %v5629
        %v5679 = vmul.f32 %v5555, %v5634
        %v5680 = vmul.f32 %v5557, %v5639
        %v5681 = vmul.f32 %v5559, %v5644
        %v5682 = vmul.f32 %v5561, %v5649
        %v5683 = vmul.f32 %v5563, %v5654
        %v5684 = vmul.f32 %v5565, %v5659
        %v5685 = vmul.f32 %v5567, %v5664
        %v5686 = vmul.f32 %v5569, %v5669
        %v5687 = vadd.f32 %v5671, %v5672
        %v5688 = vadd.f32 %v5687, %v5673
        %v5689 = vadd.f32 %v5688, %v5674
        %v5690 = vadd.f32 %v5689, %v5675
        %v5691 = vadd.f32 %v5690, %v5676
        %v5692 = vadd.f32 %v5691, %v5677
        %v5693 = vadd.f32 %v5692, %v5678
        %v5694 = vadd.f32 %v5693, %v5679
        %v5695 = vadd.f32 %v5694, %v5680
        %v5696 = vadd.f32 %v5695, %v5681
        %v5697 = vadd.f32 %v5696, %v5682
        %v5698 = vadd.f32 %v5697, %v5683
        %v5699 = vadd.f32 %v5698, %v5684
        %v5700 = vadd.f32 %v5699, %v5685
        %v5701 = vadd.f32 %v5700, %v5686
        %v5702 = vrot.slane %v5701, 4
        %v5703 = vadd.f32 %v5701, %v5702
        %v5704 = vrot.slane %v5703, 2
        %v5705 = vadd.f32 %v5703, %v5704
        %v5706 = vrot.slane %v5705, 1
        %v5707 = vadd.f32 %v5705, %v5706
        %v5708 = vrcp.pop %v5590
        %v5709 = vmul.f32 %v5707, %v5708
        %5710 = vset.pattern.permute.xlu0 7
        %5711 = vperm.xlu0 %5710, %v1045
        %v5712 = vpop.permute.xlu0 %5711
        %v5714 = vmul.f32 %v555, %v5712
        %5715 = vset.pattern.permute.xlu0 7
        %5716 = vperm.xlu0 %5715, %v1082
        %v5717 = vpop.permute.xlu0 %5716
        %v5719 = vmul.f32 %v555, %v5717
        %v5720 = vsel %vm1453, %v5714, %v5719
        %5721 = vset.pattern.permute.xlu0 7
        %5722 = vperm.xlu0 %5721, %v5375
        %v5723 = vpop.permute.xlu0 %5722
        %5725 = vset.pattern.permute.xlu0 7
        %5726 = vperm.xlu0 %5725, %v5376
        %v5727 = vpop.permute.xlu0 %5726
        %5729 = vset.pattern.permute.xlu0 7
        %5730 = vperm.xlu0 %5729, %v5377
        %v5731 = vpop.permute.xlu0 %5730
        %5733 = vset.pattern.permute.xlu0 7
        %5734 = vperm.xlu0 %5733, %v5378
        %v5735 = vpop.permute.xlu0 %5734
        %5737 = vset.pattern.permute.xlu0 7
        %5738 = vperm.xlu0 %5737, %v5379
        %v5739 = vpop.permute.xlu0 %5738
        %5741 = vset.pattern.permute.xlu0 7
        %5742 = vperm.xlu0 %5741, %v5380
        %v5743 = vpop.permute.xlu0 %5742
        %5745 = vset.pattern.permute.xlu0 7
        %5746 = vperm.xlu0 %5745, %v5381
        %v5747 = vpop.permute.xlu0 %5746
        %5749 = vset.pattern.permute.xlu0 7
        %5750 = vperm.xlu0 %5749, %v5382
        %v5751 = vpop.permute.xlu0 %5750
        %5753 = vset.pattern.permute.xlu0 7
        %5754 = vperm.xlu0 %5753, %v5383
        %v5755 = vpop.permute.xlu0 %5754
        %5757 = vset.pattern.permute.xlu0 7
        %5758 = vperm.xlu0 %5757, %v5384
        %v5759 = vpop.permute.xlu0 %5758
        %5761 = vset.pattern.permute.xlu0 7
        %5762 = vperm.xlu0 %5761, %v5385
        %v5763 = vpop.permute.xlu0 %5762
        %5765 = vset.pattern.permute.xlu0 7
        %5766 = vperm.xlu0 %5765, %v5386
        %v5767 = vpop.permute.xlu0 %5766
        %5769 = vset.pattern.permute.xlu0 7
        %5770 = vperm.xlu0 %5769, %v5387
        %v5771 = vpop.permute.xlu0 %5770
        %5773 = vset.pattern.permute.xlu0 7
        %5774 = vperm.xlu0 %5773, %v5388
        %v5775 = vpop.permute.xlu0 %5774
        %5777 = vset.pattern.permute.xlu0 7
        %5778 = vperm.xlu0 %5777, %v5389
        %v5779 = vpop.permute.xlu0 %5778
        %5781 = vset.pattern.permute.xlu0 7
        %5782 = vperm.xlu0 %5781, %v5390
        %v5783 = vpop.permute.xlu0 %5782
        %v5785 = vlaneseq
        %v5786 = vshrl.u32 %v5785, 7
        %v5787 = vsub.s32 7, %v5786
        %v5788 = vrot.slane %v555, %v5787
        %v5789 = vmul.f32 %v5723, %v5788
        %v5790 = vmul.f32 %v5727, %v5788
        %v5791 = vmul.f32 %v5731, %v5788
        %v5792 = vmul.f32 %v5735, %v5788
        %v5793 = vmul.f32 %v5739, %v5788
        %v5794 = vmul.f32 %v5743, %v5788
        %v5795 = vmul.f32 %v5747, %v5788
        %v5796 = vmul.f32 %v5751, %v5788
        %v5797 = vmul.f32 %v5755, %v5788
        %v5798 = vmul.f32 %v5759, %v5788
        %v5799 = vmul.f32 %v5763, %v5788
        %v5800 = vmul.f32 %v5767, %v5788
        %v5801 = vmul.f32 %v5771, %v5788
        %v5802 = vmul.f32 %v5775, %v5788
        %v5803 = vmul.f32 %v5779, %v5788
        %v5804 = vmul.f32 %v5783, %v5788
        %v5805 = vlaneseq
        %v5806 = vshrl.u32 %v5805, 7
        %v5807 = vsub.s32 7, %v5806
        %v5808 = vrot.slane %v5720, %v5807
        %v5809 = vsub.f32 %v5789, %v5808
        %v5810 = vsub.f32 %v5790, %v5808
        %v5811 = vsub.f32 %v5791, %v5808
        %v5812 = vsub.f32 %v5792, %v5808
        %v5813 = vsub.f32 %v5793, %v5808
        %v5814 = vsub.f32 %v5794, %v5808
        %v5815 = vsub.f32 %v5795, %v5808
        %v5816 = vsub.f32 %v5796, %v5808
        %v5817 = vsub.f32 %v5797, %v5808
        %v5818 = vsub.f32 %v5798, %v5808
        %v5819 = vsub.f32 %v5799, %v5808
        %v5820 = vsub.f32 %v5800, %v5808
        %v5821 = vsub.f32 %v5801, %v5808
        %v5822 = vsub.f32 %v5802, %v5808
        %v5823 = vsub.f32 %v5803, %v5808
        %v5824 = vsub.f32 %v5804, %v5808
        %v5825 = vmul.f32 %v5809, 1.442695
        %v5826 = vpow.pop %v5825
        %v5827 = vmul.f32 %v5810, 1.442695
        %v5828 = vpow.pop %v5827
        %v5829 = vmul.f32 %v5811, 1.442695
        %v5830 = vpow.pop %v5829
        %v5831 = vmul.f32 %v5812, 1.442695
        %v5832 = vpow.pop %v5831
        %v5833 = vmul.f32 %v5813, 1.442695
        %v5834 = vpow.pop %v5833
        %v5835 = vmul.f32 %v5814, 1.442695
        %v5836 = vpow.pop %v5835
        %v5837 = vmul.f32 %v5815, 1.442695
        %v5838 = vpow.pop %v5837
        %v5839 = vmul.f32 %v5816, 1.442695
        %v5840 = vpow.pop %v5839
        %v5841 = vmul.f32 %v5817, 1.442695
        %v5842 = vpow.pop %v5841
        %v5843 = vmul.f32 %v5818, 1.442695
        %v5844 = vpow.pop %v5843
        %v5845 = vmul.f32 %v5819, 1.442695
        %v5846 = vpow.pop %v5845
        %v5847 = vmul.f32 %v5820, 1.442695
        %v5848 = vpow.pop %v5847
        %v5849 = vmul.f32 %v5821, 1.442695
        %v5850 = vpow.pop %v5849
        %v5851 = vmul.f32 %v5822, 1.442695
        %v5852 = vpow.pop %v5851
        %v5853 = vmul.f32 %v5823, 1.442695
        %v5854 = vpow.pop %v5853
        %v5855 = vmul.f32 %v5824, 1.442695
        %v5856 = vpow.pop %v5855
        %v5857 = vadd.f32 %v5826, %v5828
        %v5858 = vadd.f32 %v5857, %v5830
        %v5859 = vadd.f32 %v5858, %v5832
        %v5860 = vadd.f32 %v5859, %v5834
        %v5861 = vadd.f32 %v5860, %v5836
        %v5862 = vadd.f32 %v5861, %v5838
        %v5863 = vadd.f32 %v5862, %v5840
        %v5864 = vadd.f32 %v5863, %v5842
        %v5865 = vadd.f32 %v5864, %v5844
        %v5866 = vadd.f32 %v5865, %v5846
        %v5867 = vadd.f32 %v5866, %v5848
        %v5868 = vadd.f32 %v5867, %v5850
        %v5869 = vadd.f32 %v5868, %v5852
        %v5870 = vadd.f32 %v5869, %v5854
        %v5871 = vadd.f32 %v5870, %v5856
        %v5872 = vrot.slane %v5871, 4
        %v5873 = vadd.f32 %v5871, %v5872
        %v5874 = vrot.slane %v5873, 2
        %v5875 = vadd.f32 %v5873, %v5874
        %v5876 = vrot.slane %v5875, 1
        %v5877 = vadd.f32 %v5875, %v5876
        %5878 = vset.pattern.permute.xlu0 7
        %5879 = vperm.xlu0 %5878, %v5391
        %v5880 = vpop.permute.xlu0 %5879
        %5882 = vset.pattern.permute.xlu0 7
        %5883 = vperm.xlu0 %5882, %v5392
        %v5884 = vpop.permute.xlu0 %5883
        %5886 = vset.pattern.permute.xlu0 7
        %5887 = vperm.xlu0 %5886, %v5393
        %v5888 = vpop.permute.xlu0 %5887
        %5890 = vset.pattern.permute.xlu0 7
        %5891 = vperm.xlu0 %5890, %v5394
        %v5892 = vpop.permute.xlu0 %5891
        %5894 = vset.pattern.permute.xlu0 7
        %5895 = vperm.xlu0 %5894, %v5395
        %v5896 = vpop.permute.xlu0 %5895
        %5898 = vset.pattern.permute.xlu0 7
        %5899 = vperm.xlu0 %5898, %v5396
        %v5900 = vpop.permute.xlu0 %5899
        %5902 = vset.pattern.permute.xlu0 7
        %5903 = vperm.xlu0 %5902, %v5397
        %v5904 = vpop.permute.xlu0 %5903
        %5906 = vset.pattern.permute.xlu0 7
        %5907 = vperm.xlu0 %5906, %v5398
        %v5908 = vpop.permute.xlu0 %5907
        %5910 = vset.pattern.permute.xlu0 7
        %5911 = vperm.xlu0 %5910, %v5399
        %v5912 = vpop.permute.xlu0 %5911
        %5914 = vset.pattern.permute.xlu0 7
        %5915 = vperm.xlu0 %5914, %v5400
        %v5916 = vpop.permute.xlu0 %5915
        %5918 = vset.pattern.permute.xlu0 7
        %5919 = vperm.xlu0 %5918, %v5401
        %v5920 = vpop.permute.xlu0 %5919
        %5922 = vset.pattern.permute.xlu0 7
        %5923 = vperm.xlu0 %5922, %v5402
        %v5924 = vpop.permute.xlu0 %5923
        %5926 = vset.pattern.permute.xlu0 7
        %5927 = vperm.xlu0 %5926, %v5403
        %v5928 = vpop.permute.xlu0 %5927
        %5930 = vset.pattern.permute.xlu0 7
        %5931 = vperm.xlu0 %5930, %v5404
        %v5932 = vpop.permute.xlu0 %5931
        %5934 = vset.pattern.permute.xlu0 7
        %5935 = vperm.xlu0 %5934, %v5405
        %v5936 = vpop.permute.xlu0 %5935
        %5938 = vset.pattern.permute.xlu0 7
        %5939 = vperm.xlu0 %5938, %v5406
        %v5940 = vpop.permute.xlu0 %5939
        %v5942 = vmul.f32 %v5826, %v5880
        %v5943 = vmul.f32 %v5828, %v5884
        %v5944 = vmul.f32 %v5830, %v5888
        %v5945 = vmul.f32 %v5832, %v5892
        %v5946 = vmul.f32 %v5834, %v5896
        %v5947 = vmul.f32 %v5836, %v5900
        %v5948 = vmul.f32 %v5838, %v5904
        %v5949 = vmul.f32 %v5840, %v5908
        %v5950 = vmul.f32 %v5842, %v5912
        %v5951 = vmul.f32 %v5844, %v5916
        %v5952 = vmul.f32 %v5846, %v5920
        %v5953 = vmul.f32 %v5848, %v5924
        %v5954 = vmul.f32 %v5850, %v5928
        %v5955 = vmul.f32 %v5852, %v5932
        %v5956 = vmul.f32 %v5854, %v5936
        %v5957 = vmul.f32 %v5856, %v5940
        %v5958 = vadd.f32 %v5942, %v5943
        %v5959 = vadd.f32 %v5958, %v5944
        %v5960 = vadd.f32 %v5959, %v5945
        %v5961 = vadd.f32 %v5960, %v5946
        %v5962 = vadd.f32 %v5961, %v5947
        %v5963 = vadd.f32 %v5962, %v5948
        %v5964 = vadd.f32 %v5963, %v5949
        %v5965 = vadd.f32 %v5964, %v5950
        %v5966 = vadd.f32 %v5965, %v5951
        %v5967 = vadd.f32 %v5966, %v5952
        %v5968 = vadd.f32 %v5967, %v5953
        %v5969 = vadd.f32 %v5968, %v5954
        %v5970 = vadd.f32 %v5969, %v5955
        %v5971 = vadd.f32 %v5970, %v5956
        %v5972 = vadd.f32 %v5971, %v5957
        %v5973 = vrot.slane %v5972, 4
        %v5974 = vadd.f32 %v5972, %v5973
        %v5975 = vrot.slane %v5974, 2
        %v5976 = vadd.f32 %v5974, %v5975
        %v5977 = vrot.slane %v5976, 1
        %v5978 = vadd.f32 %v5976, %v5977
        %v5979 = vrcp.pop %v5877
        %v5980 = vmul.f32 %v5978, %v5979
        %v5981 = vmul.f32 %v5709, %v5980
        %5982 = vst [vmem:[#allocation2 + $0x7] sm:$0x1] %v5981
        %v5983 = vld [vmem:[#allocation2] sm:$0xff]
        %v5984 = vmul.f32 %v5983, 0.0078125
        %5985 = vadd.xlane.f32.xlu0 %v5984
        %v5986 = vpop.xlane.xlu0 %5985
        %v5987 = vrcp.pop 128.0
        %v5988 = vmul.f32 %v5986, %v5987
        %v5989 = vsub.f32 %v5984, %v5988
        %v5990 = vmul.f32 %v5989, %v5989
        %5991 = vadd.xlane.f32.xlu0 %v5990
        %v5992 = vpop.xlane.xlu0 %5991
        %v5993 = vmul.f32 %v5992, %v5987
        %v5994 = vadd.f32 %v5993, 1e-05
        %v5995 = vrsqrt.pop %v5994
        %v5996 = vmul.f32 %v5989, %v5995
        %v5997 = vld [vmem:[%s8] sm:$0x1]
        %v5999 = vlaneseq
        %v6000 = vshrl.u32 %v5999, 7
        %v6001 = vsub.s32 0, %v6000
        %v6002 = vrot.slane %v5997, %v6001
        %v6004 = vmul.f32 %v5996, %v6002
        %v6005 = vld [vmem:[%s9] sm:$0x1]
        %v6007 = vlaneseq
        %v6008 = vshrl.u32 %v6007, 7
        %v6009 = vsub.s32 0, %v6008
        %v6010 = vrot.slane %v6005, %v6009
        %v6012 = vadd.f32 %v6004, %v6010
        %6013 = vst [vmem:[%s367] sm:$0xff] %v6012
        %s6014 = sand.u32 %s252, 1
        %s6015 = scalar_lea.sflag [#allocation6], %s6014
        %s6016 = sand.u32 %s252, 1
        %s6017 = smul.addr %s6016, 8
        %s6018 = scalar_lea.vmem [#allocation5], %s6017
        // Predicated region
        $region61: #{tpu_custom_call.1} parent=59 // pred_check
          %p6019 = pneg %p262
        $region62: #{tpu_custom_call.1} parent=59 // pred_check_branch
          %6021 = sbr.rel (%p6019) target = $region64
        $region63: #{tpu_custom_call.1} parent=59 // pred_region
          %s6023 = ssub.s32 128, 128
          %6024 = vsyncadd %s6015, %s6023
          %s6025 = smul.addr %s24, 128
          %s6026 = scalar_lea.hbm %s10, %s6025
          %s6028 = sshll.u32 %s6018, 4
          %s6029 = int_to_ptr.vmem [resolvable:$true] %s6028
          %6031 = dma.vmem_to_hbm [thread:$0]  %s6029, 128, %s6026, %s6015
        $region64: #{tpu_custom_call.1} parent=59 // pred_fallthru
          _
      $region60: #{tpu_custom_call.1} parent=5 // pred_fallthru
        _
      %p6032 = scmp.le.s32.totalorder 2, %s19
      // Predicated region
      $region65: #{tpu_custom_call.1} parent=5 // pred_check
        %p6033 = pneg %p6032
      $region66: #{tpu_custom_call.1} parent=5 // pred_check_branch
        %6035 = sbr.rel (%p6033) target = $region68
      $region67: #{tpu_custom_call.1} parent=5 // pred_region
        %s6036 = ssub.s32 %s19, 2
        // Predicated region
        $region69: #{tpu_custom_call.1} parent=67 // pred_check
          %p6037 = pneg %p268
        $region70: #{tpu_custom_call.1} parent=67 // pred_check_branch
          %6039 = sbr.rel (%p6037) target = $region72
        $region71: #{tpu_custom_call.1} parent=67 // pred_region
          %s6040 = sand.u32 %s253, 1
          %s6041 = scalar_lea.sflag [#allocation6], %s6040
          %s6042 = sand.u32 %s253, 1
          %s6043 = smul.addr %s6042, 8
          %s6044 = scalar_lea.vmem [#allocation5], %s6043
          %6045 = dma.done %s6041, 128
        $region72: #{tpu_custom_call.1} parent=67 // pred_fallthru
          _
      $region68: #{tpu_custom_call.1} parent=5 // pred_fallthru
        _
    $region6: #{tpu_custom_call.1} parent=1 // loop_footer
      %s23 = sadd.s32 1, %s19
    $region7: #{tpu_custom_call.1} parent=1 // loop_footer_branch
      %18 = sbr.rel target = $region3
    $region8: #{tpu_custom_call.1} parent=1 // loop_exit
      _
    %6046 = vsyncpa [#allocation6], 1
    %s6047 = scalar_lea.sflag [#allocation6], 1
    %6048 = vsyncpa %s6047, 1

</llo_original>
